<compile_context>
chip_gen: v7x
topology: tpu7x:2x2x1
jax: 0.10.0
libtpu: 0.0.40
codegen_flags: <defaults>
</compile_context>

<pallas_src>
import jax
import jax.numpy as jnp
from jax import lax
from jax.experimental import pallas as pl
from jax.experimental.pallas import tpu as pltpu

C = 16            # channels (FreBlock9 hardcodes channels=16)
CT = 32           # tmp_channels of the collapsible linear block
K = 3             # kernel_size
NEG_SLOPE = 0.1   # LeakyReLU slope inside FreBlock9


def _frb_kernel(x_ref, shift2_ref, wband_ref, brb_ref,
                fwc_ref, fws_ref, bre_ref, bim_ref,
                fhc_ref, fhs_ref,
                wr1_ref, br1_ref, wr2_ref, br2_ref,
                wi1_ref, bi1_ref, wi2_ref, bi2_ref,
                iwc_ref, iws_ref, bpost_ref,
                out_ref):
    f32 = jnp.float32
    x = x_ref[0]                                   # (H, W*C), lane-dense image slab
    H = x.shape[0]

    def mm(a, b):
        return jnp.dot(a, b, preferred_element_type=f32)

    # ---- ResidualCollapsibleLinearBlock: relu(x + collapsed_conv3x3(x)) -------------
    # Halo rows h-1 / h+1 from one precomputed (2H,H) shift matmul (no in-kernel iota,
    # no padded scratch).  Single MXU matmul for the whole banded 3x3 conv.
    sh = mm(shift2_ref[...], x)                    # (2H, W*C): rows h-1 then rows h+1
    stacked = jnp.concatenate([sh[:H], x, sh[H:]], axis=1)      # (H, 3*W*C)
    r = jnp.maximum(x + mm(stacked, wband_ref[...]) + brb_ref[...], 0.0)

    # ---- FreBlock9 ------------------------------------------------------------------
    # rfft over W: fpre 1x1 conv already folded into fwc/fws (fws pre-negated host-side).
    a_re = mm(r, fwc_ref[...]) + bre_ref[...]      # (H, Wf*C)
    a_im = mm(r, fws_ref[...]) + bim_ref[...]
    # fft over H (rows)
    fhc = fhc_ref[...]
    fhs = fhs_ref[...]
    f_re = mm(fhc, a_re) + mm(fhs, a_im)
    f_im = mm(fhc, a_im) - mm(fhs, a_re)

    def branch(v, w_a, b_a, w_b, b_b):             # conv1x1 -> LeakyReLU(0.1) -> conv1x1
        h1 = mm(v, w_a) + b_a
        h1 = jnp.where(h1 > 0, h1, NEG_SLOPE * h1)
        return mm(h1, w_b) + b_b

    pr = branch(f_re, wr1_ref[...], br1_ref[...], wr2_ref[...], br2_ref[...])
    pi = branch(f_im, wi1_ref[...], bi1_ref[...], wi2_ref[...], bi2_ref[...])

    # inverse: complex ifft over H (fhc/fhs symmetric), then irfft over W with the post
    # 1x1 conv folded into iwc/iws.
    g_re = (mm(fhc, pr) - mm(fhs, pi)) * (1.0 / H)
    g_im = (mm(fhc, pi) + mm(fhs, pr)) * (1.0 / H)
    frb = mm(g_re, iwc_ref[...]) - mm(g_im, iws_ref[...]) + bpost_ref[...] + r

    out_ref[0] = (frb + x).astype(out_ref.dtype)   # outer residual with the block input


def build_kernel_params(raw, H, W):
    """Host-side weight folding: collapse + band the 3x3 conv, build DFT matrices,
    block-diagonal 1x1 convs, and fold fpre/post 1x1 convs into the W-DFT matrices so the
    kernel stays in the lane-dense (h, w*C) layout and runs two fewer matmuls per image."""
    (w1, w2, b2, wpre, bpre, wr1, br1, wr2, br2,
     wi1, bi1, wi2, bi2, wpost, bpost) = raw
    f32 = jnp.float32
    hi = lax.Precision.HIGHEST
    Wf = W // 2 + 1
    eye_c = jnp.eye(C, dtype=f32)

    # Row-shift (halo) matrices: rows h-1 and h+1, stacked -> one (2H, H) matmul in-kernel.
    ri = jnp.arange(H)[:, None]
    ci = jnp.arange(H)[None, :]
    shift2 = jnp.concatenate([(ci == ri - 1).astype(f32),
                              (ci == ri + 1).astype(f32)], axis=0)       # (2H, H)

    # Collapse conv3x3(in->tmp, no bias) + conv1x1(tmp->out, bias) -> (3,3,C,C) + (C,)
    wc = jnp.einsum("yxit,to->yxio", w1, w2, precision=hi)
    # Band along W: one (3*W*C, W*C) matrix; row blocks ordered dy = 0,1,2 (rows h-1,h,h+1)
    wband = jnp.concatenate([
        sum(jnp.kron(jnp.eye(W, k=1 - dx, dtype=f32), wc[dy, dx]) for dx in range(K))
        for dy in range(K)], axis=0)
    brb = jnp.tile(b2, W)[None, :]                                       # (1, W*C)

    # Forward rfft-over-W matrices ('backward' norm), with fpre 1x1 folded in.
    wk = (jnp.arange(W)[:, None] * jnp.arange(Wf)[None, :]) % W
    ang_w = (2.0 * jnp.pi / W) * wk.astype(f32)
    fwc = jnp.kron(jnp.cos(ang_w), eye_c)                                # (W*C, Wf*C)
    fws = jnp.kron(jnp.sin(ang_w), eye_c)
    wpre_bd = jnp.kron(jnp.eye(W, dtype=f32), wpre)
    bpre_t = jnp.tile(bpre, W)[None, :]
    fwc2 = jnp.dot(wpre_bd, fwc, precision=hi)                           # (W*C, Wf*C)
    fws2 = -jnp.dot(wpre_bd, fws, precision=hi)                          # sign: a_im = -p@fws
    bre = jnp.dot(bpre_t, fwc, precision=hi)                             # (1, Wf*C)
    bim = -jnp.dot(bpre_t, fws, precision=hi)

    # fft-over-H matrices (symmetric).
    hk = (jnp.arange(H)[:, None] * jnp.arange(H)[None, :]) % H
    ang_h = (2.0 * jnp.pi / H) * hk.astype(f32)
    fhc = jnp.cos(ang_h)                                                 # (H, H)
    fhs = jnp.sin(ang_h)

    # Inverse irfft-over-W matrices, with the post 1x1 conv folded in.
    alpha = jnp.ones((Wf,), f32).at[1:W // 2].set(2.0)                   # irfft column weights
    kwg = (jnp.arange(Wf)[:, None] * jnp.arange(W)[None, :]) % W
    ang_iw = (2.0 * jnp.pi / W) * kwg.astype(f32)
    iwc = jnp.kron(alpha[:, None] * jnp.cos(ang_iw) / W, eye_c)          # (Wf*C, W*C)
    iws = jnp.kron(alpha[:, None] * jnp.sin(ang_iw) / W, eye_c)
    wpost_bd = jnp.kron(jnp.eye(W, dtype=f32), wpost)
    iwc2 = jnp.dot(iwc, wpost_bd, precision=hi)                          # (Wf*C, W*C)
    iws2 = jnp.dot(iws, wpost_bd, precision=hi)
    bpost_t = jnp.tile(bpost, W)[None, :]                                # (1, W*C)

    # Real/imag branch 1x1 convs as block-diagonal matrices in the (., kw*C) layout.
    eye_wf = jnp.eye(Wf, dtype=f32)

    def bd_wf(w, b):
        return jnp.kron(eye_wf, w), jnp.tile(b, Wf)[None, :]

    wr1_bd, br1_t = bd_wf(wr1, br1)
    wr2_bd, br2_t = bd_wf(wr2, br2)
    wi1_bd, bi1_t = bd_wf(wi1, bi1)
    wi2_bd, bi2_t = bd_wf(wi2, bi2)

    return (shift2, wband, brb, fwc2, fws2, bre, bim, fhc, fhs,
            wr1_bd, br1_t, wr2_bd, br2_t, wi1_bd, bi1_t, wi2_bd, bi2_t,
            iwc2, iws2, bpost_t)


def forward_pallas(x, raw):
    """x: (N, H, W, C) float32 NHWC (== torch NCHW here since H == W == C == 16)."""
    N, H, W, c = x.shape
    assert c == C
    kp = build_kernel_params(raw, H, W)
    WC = W * C
    x2 = x.reshape(N, H, WC)          # free reshape: lane-dense (256-wide) I/O slabs

    def const_spec(a):
        return pl.BlockSpec(a.shape, lambda n, nd=a.ndim: (0,) * nd)

    out = pl.pallas_call(
        _frb_kernel,
        out_shape=jax.ShapeDtypeStruct((N, H, WC), x.dtype),
        grid=(N,),
        in_specs=[pl.BlockSpec((1, H, WC), lambda n: (n, 0, 0))]
                 + [const_spec(a) for a in kp],
        out_specs=pl.BlockSpec((1, H, WC), lambda n: (n, 0, 0)),
        compiler_params=pltpu.CompilerParams(
            dimension_semantics=("parallel",)),      # batch axis -> both v7x TensorCores
    )(x2, *kp)
    return out.reshape(N, H, W, C)


def forward_ref(x, raw):
    """Pure-JAX reference of the same forward pass (NHWC), full-precision matmuls."""
    (w1, w2, b2, wpre, bpre, wr1, br1, wr2, br2,
     wi1, bi1, wi2, bi2, wpost, bpost) = raw
    N, H, W, _ = x.shape
    hi = lax.Precision.HIGHEST
    dn = ("NHWC", "HWIO", "NHWC")

    t = lax.conv_general_dilated(x, w1, (1, 1), "SAME",
                                 dimension_numbers=dn, precision=hi)
    t = jnp.einsum("nhwt,tc->nhwc", t, w2, precision=hi) + b2
    r = jax.nn.relu(x + t)

    p = jnp.einsum("nhwc,cd->nhwd", r, wpre, precision=hi) + bpre
    F = jnp.fft.rfft2(p, axes=(1, 2))

    def branch(v, wa, ba, wb, bb):
        h = jnp.einsum("nhkc,cd->nhkd", v, wa, precision=hi) + ba
        h = jnp.where(h > 0, h, NEG_SLOPE * h)
        return jnp.einsum("nhkc,cd->nhkd", h, wb, precision=hi) + bb

    pr = branch(jnp.real(F), wr1, br1, wr2, br2)
    pi = branch(jnp.imag(F), wi1, bi1, wi2, bi2)
    y = jnp.fft.irfft2(pr + 1j * pi, s=(H, W), axes=(1, 2))
    y = jnp.einsum("nhwc,cd->nhwd", y, wpost, precision=hi) + bpost
    return (y + r) + x


def make_params(key):
    ks = jax.random.split(key, 15)
    s = 0.1
    n = jax.random.normal
    f32 = jnp.float32
    w1 = s * n(ks[0], (K, K, C, CT), f32)      # conv_expand 3x3 (no bias)
    w2 = s * n(ks[1], (CT, C), f32)            # conv_squeeze 1x1
    b2 = s * n(ks[2], (C,), f32)
    wpre = s * n(ks[3], (C, C), f32)           # FreBlock9 fpre 1x1
    bpre = s * n(ks[4], (C,), f32)
    wr1 = s * n(ks[5], (C, C), f32)            # real branch
    br1 = s * n(ks[6], (C,), f32)
    wr2 = s * n(ks[7], (C, C), f32)
    br2 = s * n(ks[8], (C,), f32)
    wi1 = s * n(ks[9], (C, C), f32)            # imag branch
    bi1 = s * n(ks[10], (C,), f32)
    wi2 = s * n(ks[11], (C, C), f32)
    bi2 = s * n(ks[12], (C,), f32)
    wpost = s * n(ks[13], (C, C), f32)         # FreBlock9 post 1x1
    bpost = s * n(ks[14], (C,), f32)
    return (w1, w2, b2, wpre, bpre, wr1, br1, wr2, br2,
            wi1, bi1, wi2, bi2, wpost, bpost)


if __name__ == "__main__":
    key = jax.random.PRNGKey(0)
    kx, kparams = jax.random.split(key)
    N, H, W = 2, 16, 16
    x = jax.random.normal(kx, (N, H, W, C), jnp.float32)  # NHWC (== torch NCHW (2,16,16,16))
    params = make_params(kparams)

    out = jax.block_until_ready(forward_pallas(x, params))
    ref = jax.block_until_ready(forward_ref(x, params))

    assert out.shape == (N, H, W, C)
    max_err = float(jnp.max(jnp.abs(out - ref)))
    # Tight enough to catch layout/transpose bugs (O(0.1+) errors) while allowing f32
    # DFT-matmul vs XLA-FFT accumulation-order differences at |F| ~ 50.
    assert max_err < 1e-3, f"mismatch vs reference: {max_err}"
    print("KERNEL_OK")
</pallas_src>

<mosaic_0001>
module attributes {stable_mosaic.version = 11 : i64} {
  func.func @_frb_kernel(%arg0: i32, %arg1: memref<1x16x256xf32, #tpu.memory_space<vmem>>, %arg2: memref<32x16xf32, #tpu.memory_space<vmem>>, %arg3: memref<768x256xf32, #tpu.memory_space<vmem>>, %arg4: memref<1x256xf32, #tpu.memory_space<vmem>>, %arg5: memref<256x144xf32, #tpu.memory_space<vmem>>, %arg6: memref<256x144xf32, #tpu.memory_space<vmem>>, %arg7: memref<1x144xf32, #tpu.memory_space<vmem>>, %arg8: memref<1x144xf32, #tpu.memory_space<vmem>>, %arg9: memref<16x16xf32, #tpu.memory_space<vmem>>, %arg10: memref<16x16xf32, #tpu.memory_space<vmem>>, %arg11: memref<144x144xf32, #tpu.memory_space<vmem>>, %arg12: memref<1x144xf32, #tpu.memory_space<vmem>>, %arg13: memref<144x144xf32, #tpu.memory_space<vmem>>, %arg14: memref<1x144xf32, #tpu.memory_space<vmem>>, %arg15: memref<144x144xf32, #tpu.memory_space<vmem>>, %arg16: memref<1x144xf32, #tpu.memory_space<vmem>>, %arg17: memref<144x144xf32, #tpu.memory_space<vmem>>, %arg18: memref<1x144xf32, #tpu.memory_space<vmem>>, %arg19: memref<144x256xf32, #tpu.memory_space<vmem>>, %arg20: memref<144x256xf32, #tpu.memory_space<vmem>>, %arg21: memref<1x256xf32, #tpu.memory_space<vmem>>, %arg22: memref<1x16x256xf32, #tpu.memory_space<vmem>>) attributes {dimension_semantics = [#tpu.dimension_semantics<parallel>], iteration_bounds = array<i64: 2>, scalar_prefetch = 0 : i64, scratch_operands = 0 : i64, tpu.core_type = #tpu.core_type<tc>, window_params = [{transform_indices = @transform_0, window_bounds = array<i64: 1, 16, 256>}, {pipeline_mode = #tpu.pipeline_mode<synchronous>, transform_indices = @transform_1, window_bounds = array<i64: 32, 16>}, {pipeline_mode = #tpu.pipeline_mode<synchronous>, transform_indices = @transform_2, window_bounds = array<i64: 768, 256>}, {pipeline_mode = #tpu.pipeline_mode<synchronous>, transform_indices = @transform_3, window_bounds = array<i64: 1, 256>}, {pipeline_mode = #tpu.pipeline_mode<synchronous>, transform_indices = @transform_4, window_bounds = array<i64: 256, 144>}, {pipeline_mode = #tpu.pipeline_mode<synchronous>, transform_indices = @transform_5, window_bounds = array<i64: 256, 144>}, {pipeline_mode = #tpu.pipeline_mode<synchronous>, transform_indices = @transform_6, window_bounds = array<i64: 1, 144>}, {pipeline_mode = #tpu.pipeline_mode<synchronous>, transform_indices = @transform_7, window_bounds = array<i64: 1, 144>}, {pipeline_mode = #tpu.pipeline_mode<synchronous>, transform_indices = @transform_8, window_bounds = array<i64: 16, 16>}, {pipeline_mode = #tpu.pipeline_mode<synchronous>, transform_indices = @transform_9, window_bounds = array<i64: 16, 16>}, {pipeline_mode = #tpu.pipeline_mode<synchronous>, transform_indices = @transform_10, window_bounds = array<i64: 144, 144>}, {pipeline_mode = #tpu.pipeline_mode<synchronous>, transform_indices = @transform_11, window_bounds = array<i64: 1, 144>}, {pipeline_mode = #tpu.pipeline_mode<synchronous>, transform_indices = @transform_12, window_bounds = array<i64: 144, 144>}, {pipeline_mode = #tpu.pipeline_mode<synchronous>, transform_indices = @transform_13, window_bounds = array<i64: 1, 144>}, {pipeline_mode = #tpu.pipeline_mode<synchronous>, transform_indices = @transform_14, window_bounds = array<i64: 144, 144>}, {pipeline_mode = #tpu.pipeline_mode<synchronous>, transform_indices = @transform_15, window_bounds = array<i64: 1, 144>}, {pipeline_mode = #tpu.pipeline_mode<synchronous>, transform_indices = @transform_16, window_bounds = array<i64: 144, 144>}, {pipeline_mode = #tpu.pipeline_mode<synchronous>, transform_indices = @transform_17, window_bounds = array<i64: 1, 144>}, {pipeline_mode = #tpu.pipeline_mode<synchronous>, transform_indices = @transform_18, window_bounds = array<i64: 144, 256>}, {pipeline_mode = #tpu.pipeline_mode<synchronous>, transform_indices = @transform_19, window_bounds = array<i64: 144, 256>}, {pipeline_mode = #tpu.pipeline_mode<synchronous>, transform_indices = @transform_20, window_bounds = array<i64: 1, 256>}, {transform_indices = @transform_21, window_bounds = array<i64: 1, 16, 256>}]} {
    %c0 = arith.constant 0 : index
    %c0_0 = arith.constant 0 : index
    %c0_1 = arith.constant 0 : index
    %0 = vector.load %arg1[%c0, %c0_0, %c0_1] : memref<1x16x256xf32, #tpu.memory_space<vmem>>, vector<1x16x256xf32>
    %1 = vector.shape_cast %0 : vector<1x16x256xf32> to vector<16x256xf32>
    %c0_2 = arith.constant 0 : index
    %c0_3 = arith.constant 0 : index
    %2 = vector.load %arg2[%c0_2, %c0_3] : memref<32x16xf32, #tpu.memory_space<vmem>>, vector<32x16xf32>
    %cst = arith.constant dense<0.000000e+00> : vector<32x256xf32>
    %3 = tpu.matmul %2, %1, %cst {dimension_numbers = #tpu.dot_dimension_numbers<[1], [0], [0], [1], [0, 0, 1, 1], [], []>} : vector<32x16xf32>, vector<16x256xf32>, vector<32x256xf32> -> vector<32x256xf32>
    %4 = vector.extract_strided_slice %3 {offsets = [0, 0], sizes = [16, 256], strides = [1, 1]} : vector<32x256xf32> to vector<16x256xf32>
    %5 = vector.extract_strided_slice %3 {offsets = [16, 0], sizes = [16, 256], strides = [1, 1]} : vector<32x256xf32> to vector<16x256xf32>
    %6 = tpu.concatenate %4, %1, %5 in 1 : vector<16x256xf32>, vector<16x256xf32>, vector<16x256xf32> -> vector<16x768xf32>
    %c0_4 = arith.constant 0 : index
    %c0_5 = arith.constant 0 : index
    %7 = vector.load %arg3[%c0_4, %c0_5] : memref<768x256xf32, #tpu.memory_space<vmem>>, vector<768x256xf32>
    %cst_6 = arith.constant dense<0.000000e+00> : vector<16x256xf32>
    %8 = tpu.matmul %6, %7, %cst_6 {dimension_numbers = #tpu.dot_dimension_numbers<[1], [0], [0], [1], [0, 0, 1, 1], [], []>} : vector<16x768xf32>, vector<768x256xf32>, vector<16x256xf32> -> vector<16x256xf32>
    %9 = arith.addf %1, %8 : vector<16x256xf32>
    %c0_7 = arith.constant 0 : index
    %c0_8 = arith.constant 0 : index
    %10 = vector.load %arg4[%c0_7, %c0_8] : memref<1x256xf32, #tpu.memory_space<vmem>>, vector<1x256xf32>
    %11 = vector.broadcast %10 : vector<1x256xf32> to vector<16x256xf32>
    %12 = arith.addf %9, %11 : vector<16x256xf32>
    %cst_9 = arith.constant 0.000000e+00 : f32
    %13 = vector.broadcast %cst_9 : f32 to vector<16x256xf32>
    %14 = arith.maximumf %12, %13 : vector<16x256xf32>
    %c0_10 = arith.constant 0 : index
    %c0_11 = arith.constant 0 : index
    %15 = vector.load %arg5[%c0_10, %c0_11] : memref<256x144xf32, #tpu.memory_space<vmem>>, vector<256x144xf32>
    %cst_12 = arith.constant dense<0.000000e+00> : vector<16x144xf32>
    %16 = tpu.matmul %14, %15, %cst_12 {dimension_numbers = #tpu.dot_dimension_numbers<[1], [0], [0], [1], [0, 0, 1, 1], [], []>} : vector<16x256xf32>, vector<256x144xf32>, vector<16x144xf32> -> vector<16x144xf32>
    %c0_13 = arith.constant 0 : index
    %c0_14 = arith.constant 0 : index
    %17 = vector.load %arg7[%c0_13, %c0_14] : memref<1x144xf32, #tpu.memory_space<vmem>>, vector<1x144xf32>
    %18 = vector.broadcast %17 : vector<1x144xf32> to vector<16x144xf32>
    %19 = arith.addf %16, %18 : vector<16x144xf32>
    %c0_15 = arith.constant 0 : index
    %c0_16 = arith.constant 0 : index
    %20 = vector.load %arg6[%c0_15, %c0_16] : memref<256x144xf32, #tpu.memory_space<vmem>>, vector<256x144xf32>
    %cst_17 = arith.constant dense<0.000000e+00> : vector<16x144xf32>
    %21 = tpu.matmul %14, %20, %cst_17 {dimension_numbers = #tpu.dot_dimension_numbers<[1], [0], [0], [1], [0, 0, 1, 1], [], []>} : vector<16x256xf32>, vector<256x144xf32>, vector<16x144xf32> -> vector<16x144xf32>
    %c0_18 = arith.constant 0 : index
    %c0_19 = arith.constant 0 : index
    %22 = vector.load %arg8[%c0_18, %c0_19] : memref<1x144xf32, #tpu.memory_space<vmem>>, vector<1x144xf32>
    %23 = vector.broadcast %22 : vector<1x144xf32> to vector<16x144xf32>
    %24 = arith.addf %21, %23 : vector<16x144xf32>
    %c0_20 = arith.constant 0 : index
    %c0_21 = arith.constant 0 : index
    %25 = vector.load %arg9[%c0_20, %c0_21] : memref<16x16xf32, #tpu.memory_space<vmem>>, vector<16x16xf32>
    %c0_22 = arith.constant 0 : index
    %c0_23 = arith.constant 0 : index
    %26 = vector.load %arg10[%c0_22, %c0_23] : memref<16x16xf32, #tpu.memory_space<vmem>>, vector<16x16xf32>
    %cst_24 = arith.constant dense<0.000000e+00> : vector<16x144xf32>
    %27 = tpu.matmul %25, %19, %cst_24 {dimension_numbers = #tpu.dot_dimension_numbers<[1], [0], [0], [1], [0, 0, 1, 1], [], []>} : vector<16x16xf32>, vector<16x144xf32>, vector<16x144xf32> -> vector<16x144xf32>
    %cst_25 = arith.constant dense<0.000000e+00> : vector<16x144xf32>
    %28 = tpu.matmul %26, %24, %cst_25 {dimension_numbers = #tpu.dot_dimension_numbers<[1], [0], [0], [1], [0, 0, 1, 1], [], []>} : vector<16x16xf32>, vector<16x144xf32>, vector<16x144xf32> -> vector<16x144xf32>
    %29 = arith.addf %27, %28 : vector<16x144xf32>
    %cst_26 = arith.constant dense<0.000000e+00> : vector<16x144xf32>
    %30 = tpu.matmul %25, %24, %cst_26 {dimension_numbers = #tpu.dot_dimension_numbers<[1], [0], [0], [1], [0, 0, 1, 1], [], []>} : vector<16x16xf32>, vector<16x144xf32>, vector<16x144xf32> -> vector<16x144xf32>
    %cst_27 = arith.constant dense<0.000000e+00> : vector<16x144xf32>
    %31 = tpu.matmul %26, %19, %cst_27 {dimension_numbers = #tpu.dot_dimension_numbers<[1], [0], [0], [1], [0, 0, 1, 1], [], []>} : vector<16x16xf32>, vector<16x144xf32>, vector<16x144xf32> -> vector<16x144xf32>
    %32 = arith.subf %30, %31 : vector<16x144xf32>
    %c0_28 = arith.constant 0 : index
    %c0_29 = arith.constant 0 : index
    %33 = vector.load %arg11[%c0_28, %c0_29] : memref<144x144xf32, #tpu.memory_space<vmem>>, vector<144x144xf32>
    %c0_30 = arith.constant 0 : index
    %c0_31 = arith.constant 0 : index
    %34 = vector.load %arg12[%c0_30, %c0_31] : memref<1x144xf32, #tpu.memory_space<vmem>>, vector<1x144xf32>
    %c0_32 = arith.constant 0 : index
    %c0_33 = arith.constant 0 : index
    %35 = vector.load %arg13[%c0_32, %c0_33] : memref<144x144xf32, #tpu.memory_space<vmem>>, vector<144x144xf32>
    %c0_34 = arith.constant 0 : index
    %c0_35 = arith.constant 0 : index
    %36 = vector.load %arg14[%c0_34, %c0_35] : memref<1x144xf32, #tpu.memory_space<vmem>>, vector<1x144xf32>
    %cst_36 = arith.constant dense<0.000000e+00> : vector<16x144xf32>
    %37 = tpu.matmul %29, %33, %cst_36 {dimension_numbers = #tpu.dot_dimension_numbers<[1], [0], [0], [1], [0, 0, 1, 1], [], []>} : vector<16x144xf32>, vector<144x144xf32>, vector<16x144xf32> -> vector<16x144xf32>
    %38 = vector.broadcast %34 : vector<1x144xf32> to vector<16x144xf32>
    %39 = arith.addf %37, %38 : vector<16x144xf32>
    %cst_37 = arith.constant 0.000000e+00 : f32
    %40 = vector.broadcast %cst_37 : f32 to vector<16x144xf32>
    %41 = arith.cmpf ogt, %39, %40 : vector<16x144xf32>
    %cst_38 = arith.constant 1.000000e-01 : f32
    %42 = vector.broadcast %cst_38 : f32 to vector<16x144xf32>
    %43 = arith.mulf %42, %39 : vector<16x144xf32>
    %44 = arith.select %41, %39, %43 : vector<16x144xi1>, vector<16x144xf32>
    %cst_39 = arith.constant dense<0.000000e+00> : vector<16x144xf32>
    %45 = tpu.matmul %44, %35, %cst_39 {dimension_numbers = #tpu.dot_dimension_numbers<[1], [0], [0], [1], [0, 0, 1, 1], [], []>} : vector<16x144xf32>, vector<144x144xf32>, vector<16x144xf32> -> vector<16x144xf32>
    %46 = vector.broadcast %36 : vector<1x144xf32> to vector<16x144xf32>
    %47 = arith.addf %45, %46 : vector<16x144xf32>
    %c0_40 = arith.constant 0 : index
    %c0_41 = arith.constant 0 : index
    %48 = vector.load %arg15[%c0_40, %c0_41] : memref<144x144xf32, #tpu.memory_space<vmem>>, vector<144x144xf32>
    %c0_42 = arith.constant 0 : index
    %c0_43 = arith.constant 0 : index
    %49 = vector.load %arg16[%c0_42, %c0_43] : memref<1x144xf32, #tpu.memory_space<vmem>>, vector<1x144xf32>
    %c0_44 = arith.constant 0 : index
    %c0_45 = arith.constant 0 : index
    %50 = vector.load %arg17[%c0_44, %c0_45] : memref<144x144xf32, #tpu.memory_space<vmem>>, vector<144x144xf32>
    %c0_46 = arith.constant 0 : index
    %c0_47 = arith.constant 0 : index
    %51 = vector.load %arg18[%c0_46, %c0_47] : memref<1x144xf32, #tpu.memory_space<vmem>>, vector<1x144xf32>
    %cst_48 = arith.constant dense<0.000000e+00> : vector<16x144xf32>
    %52 = tpu.matmul %32, %48, %cst_48 {dimension_numbers = #tpu.dot_dimension_numbers<[1], [0], [0], [1], [0, 0, 1, 1], [], []>} : vector<16x144xf32>, vector<144x144xf32>, vector<16x144xf32> -> vector<16x144xf32>
    %53 = vector.broadcast %49 : vector<1x144xf32> to vector<16x144xf32>
    %54 = arith.addf %52, %53 : vector<16x144xf32>
    %cst_49 = arith.constant 0.000000e+00 : f32
    %55 = vector.broadcast %cst_49 : f32 to vector<16x144xf32>
    %56 = arith.cmpf ogt, %54, %55 : vector<16x144xf32>
    %cst_50 = arith.constant 1.000000e-01 : f32
    %57 = vector.broadcast %cst_50 : f32 to vector<16x144xf32>
    %58 = arith.mulf %57, %54 : vector<16x144xf32>
    %59 = arith.select %56, %54, %58 : vector<16x144xi1>, vector<16x144xf32>
    %cst_51 = arith.constant dense<0.000000e+00> : vector<16x144xf32>
    %60 = tpu.matmul %59, %50, %cst_51 {dimension_numbers = #tpu.dot_dimension_numbers<[1], [0], [0], [1], [0, 0, 1, 1], [], []>} : vector<16x144xf32>, vector<144x144xf32>, vector<16x144xf32> -> vector<16x144xf32>
    %61 = vector.broadcast %51 : vector<1x144xf32> to vector<16x144xf32>
    %62 = arith.addf %60, %61 : vector<16x144xf32>
    %cst_52 = arith.constant dense<0.000000e+00> : vector<16x144xf32>
    %63 = tpu.matmul %25, %47, %cst_52 {dimension_numbers = #tpu.dot_dimension_numbers<[1], [0], [0], [1], [0, 0, 1, 1], [], []>} : vector<16x16xf32>, vector<16x144xf32>, vector<16x144xf32> -> vector<16x144xf32>
    %cst_53 = arith.constant dense<0.000000e+00> : vector<16x144xf32>
    %64 = tpu.matmul %26, %62, %cst_53 {dimension_numbers = #tpu.dot_dimension_numbers<[1], [0], [0], [1], [0, 0, 1, 1], [], []>} : vector<16x16xf32>, vector<16x144xf32>, vector<16x144xf32> -> vector<16x144xf32>
    %65 = arith.subf %63, %64 : vector<16x144xf32>
    %cst_54 = arith.constant 6.250000e-02 : f32
    %66 = vector.broadcast %cst_54 : f32 to vector<16x144xf32>
    %67 = arith.mulf %65, %66 : vector<16x144xf32>
    %cst_55 = arith.constant dense<0.000000e+00> : vector<16x144xf32>
    %68 = tpu.matmul %25, %62, %cst_55 {dimension_numbers = #tpu.dot_dimension_numbers<[1], [0], [0], [1], [0, 0, 1, 1], [], []>} : vector<16x16xf32>, vector<16x144xf32>, vector<16x144xf32> -> vector<16x144xf32>
    %cst_56 = arith.constant dense<0.000000e+00> : vector<16x144xf32>
    %69 = tpu.matmul %26, %47, %cst_56 {dimension_numbers = #tpu.dot_dimension_numbers<[1], [0], [0], [1], [0, 0, 1, 1], [], []>} : vector<16x16xf32>, vector<16x144xf32>, vector<16x144xf32> -> vector<16x144xf32>
    %70 = arith.addf %68, %69 : vector<16x144xf32>
    %cst_57 = arith.constant 6.250000e-02 : f32
    %71 = vector.broadcast %cst_57 : f32 to vector<16x144xf32>
    %72 = arith.mulf %70, %71 : vector<16x144xf32>
    %c0_58 = arith.constant 0 : index
    %c0_59 = arith.constant 0 : index
    %73 = vector.load %arg19[%c0_58, %c0_59] : memref<144x256xf32, #tpu.memory_space<vmem>>, vector<144x256xf32>
    %cst_60 = arith.constant dense<0.000000e+00> : vector<16x256xf32>
    %74 = tpu.matmul %67, %73, %cst_60 {dimension_numbers = #tpu.dot_dimension_numbers<[1], [0], [0], [1], [0, 0, 1, 1], [], []>} : vector<16x144xf32>, vector<144x256xf32>, vector<16x256xf32> -> vector<16x256xf32>
    %c0_61 = arith.constant 0 : index
    %c0_62 = arith.constant 0 : index
    %75 = vector.load %arg20[%c0_61, %c0_62] : memref<144x256xf32, #tpu.memory_space<vmem>>, vector<144x256xf32>
    %cst_63 = arith.constant dense<0.000000e+00> : vector<16x256xf32>
    %76 = tpu.matmul %72, %75, %cst_63 {dimension_numbers = #tpu.dot_dimension_numbers<[1], [0], [0], [1], [0, 0, 1, 1], [], []>} : vector<16x144xf32>, vector<144x256xf32>, vector<16x256xf32> -> vector<16x256xf32>
    %77 = arith.subf %74, %76 : vector<16x256xf32>
    %c0_64 = arith.constant 0 : index
    %c0_65 = arith.constant 0 : index
    %78 = vector.load %arg21[%c0_64, %c0_65] : memref<1x256xf32, #tpu.memory_space<vmem>>, vector<1x256xf32>
    %79 = vector.broadcast %78 : vector<1x256xf32> to vector<16x256xf32>
    %80 = arith.addf %77, %79 : vector<16x256xf32>
    %81 = arith.addf %80, %14 : vector<16x256xf32>
    %82 = arith.addf %81, %1 : vector<16x256xf32>
    %c0_66 = arith.constant 0 : index
    %c0_67 = arith.constant 0 : index
    %c0_68 = arith.constant 0 : index
    %83 = vector.load %arg22[%c0_66, %c0_67, %c0_68] : memref<1x16x256xf32, #tpu.memory_space<vmem>>, vector<1x16x256xf32>
    %84 = vector.shape_cast %83 : vector<1x16x256xf32> to vector<16x256xf32>
    %85 = vector.shape_cast %82 : vector<16x256xf32> to vector<1x16x256xf32>
    tpu.vector_store %arg22[%c0_66, %c0_67, %c0_68], %85 {strides = array<i32>} : memref<1x16x256xf32, #tpu.memory_space<vmem>>, vector<1x16x256xf32>,
    return
  }
  func.func @transform_0(%arg0: i32) -> (i32, i32, i32) {
    %c0_i32 = arith.constant 0 : i32
    %c0_i32_0 = arith.constant 0 : i32
    %c0_i32_1 = arith.constant 0 : i32
    return %arg0, %c0_i32, %c0_i32_0 : i32, i32, i32
  }
  func.func @transform_1(%arg0: i32) -> (i32, i32) {
    %c0_i32 = arith.constant 0 : i32
    %c0_i32_0 = arith.constant 0 : i32
    %c0_i32_1 = arith.constant 0 : i32
    return %c0_i32, %c0_i32_0 : i32, i32
  }
  func.func @transform_2(%arg0: i32) -> (i32, i32) {
    %c0_i32 = arith.constant 0 : i32
    %c0_i32_0 = arith.constant 0 : i32
    %c0_i32_1 = arith.constant 0 : i32
    return %c0_i32, %c0_i32_0 : i32, i32
  }
  func.func @transform_3(%arg0: i32) -> (i32, i32) {
    %c0_i32 = arith.constant 0 : i32
    %c0_i32_0 = arith.constant 0 : i32
    %c0_i32_1 = arith.constant 0 : i32
    return %c0_i32, %c0_i32_0 : i32, i32
  }
  func.func @transform_4(%arg0: i32) -> (i32, i32) {
    %c0_i32 = arith.constant 0 : i32
    %c0_i32_0 = arith.constant 0 : i32
    %c0_i32_1 = arith.constant 0 : i32
    return %c0_i32, %c0_i32_0 : i32, i32
  }
  func.func @transform_5(%arg0: i32) -> (i32, i32) {
    %c0_i32 = arith.constant 0 : i32
    %c0_i32_0 = arith.constant 0 : i32
    %c0_i32_1 = arith.constant 0 : i32
    return %c0_i32, %c0_i32_0 : i32, i32
  }
  func.func @transform_6(%arg0: i32) -> (i32, i32) {
    %c0_i32 = arith.constant 0 : i32
    %c0_i32_0 = arith.constant 0 : i32
    %c0_i32_1 = arith.constant 0 : i32
    return %c0_i32, %c0_i32_0 : i32, i32
  }
  func.func @transform_7(%arg0: i32) -> (i32, i32) {
    %c0_i32 = arith.constant 0 : i32
    %c0_i32_0 = arith.constant 0 : i32
    %c0_i32_1 = arith.constant 0 : i32
    return %c0_i32, %c0_i32_0 : i32, i32
  }
  func.func @transform_8(%arg0: i32) -> (i32, i32) {
    %c0_i32 = arith.constant 0 : i32
    %c0_i32_0 = arith.constant 0 : i32
    %c0_i32_1 = arith.constant 0 : i32
    return %c0_i32, %c0_i32_0 : i32, i32
  }
  func.func @transform_9(%arg0: i32) -> (i32, i32) {
    %c0_i32 = arith.constant 0 : i32
    %c0_i32_0 = arith.constant 0 : i32
    %c0_i32_1 = arith.constant 0 : i32
    return %c0_i32, %c0_i32_0 : i32, i32
  }
  func.func @transform_10(%arg0: i32) -> (i32, i32) {
    %c0_i32 = arith.constant 0 : i32
    %c0_i32_0 = arith.constant 0 : i32
    %c0_i32_1 = arith.constant 0 : i32
    return %c0_i32, %c0_i32_0 : i32, i32
  }
  func.func @transform_11(%arg0: i32) -> (i32, i32) {
    %c0_i32 = arith.constant 0 : i32
    %c0_i32_0 = arith.constant 0 : i32
    %c0_i32_1 = arith.constant 0 : i32
    return %c0_i32, %c0_i32_0 : i32, i32
  }
  func.func @transform_12(%arg0: i32) -> (i32, i32) {
    %c0_i32 = arith.constant 0 : i32
    %c0_i32_0 = arith.constant 0 : i32
    %c0_i32_1 = arith.constant 0 : i32
    return %c0_i32, %c0_i32_0 : i32, i32
  }
  func.func @transform_13(%arg0: i32) -> (i32, i32) {
    %c0_i32 = arith.constant 0 : i32
    %c0_i32_0 = arith.constant 0 : i32
    %c0_i32_1 = arith.constant 0 : i32
    return %c0_i32, %c0_i32_0 : i32, i32
  }
  func.func @transform_14(%arg0: i32) -> (i32, i32) {
    %c0_i32 = arith.constant 0 : i32
    %c0_i32_0 = arith.constant 0 : i32
    %c0_i32_1 = arith.constant 0 : i32
    return %c0_i32, %c0_i32_0 : i32, i32
  }
  func.func @transform_15(%arg0: i32) -> (i32, i32) {
    %c0_i32 = arith.constant 0 : i32
    %c0_i32_0 = arith.constant 0 : i32
    %c0_i32_1 = arith.constant 0 : i32
    return %c0_i32, %c0_i32_0 : i32, i32
  }
  func.func @transform_16(%arg0: i32) -> (i32, i32) {
    %c0_i32 = arith.constant 0 : i32
    %c0_i32_0 = arith.constant 0 : i32
    %c0_i32_1 = arith.constant 0 : i32
    return %c0_i32, %c0_i32_0 : i32, i32
  }
  func.func @transform_17(%arg0: i32) -> (i32, i32) {
    %c0_i32 = arith.constant 0 : i32
    %c0_i32_0 = arith.constant 0 : i32
    %c0_i32_1 = arith.constant 0 : i32
    return %c0_i32, %c0_i32_0 : i32, i32
  }
  func.func @transform_18(%arg0: i32) -> (i32, i32) {
    %c0_i32 = arith.constant 0 : i32
    %c0_i32_0 = arith.constant 0 : i32
    %c0_i32_1 = arith.constant 0 : i32
    return %c0_i32, %c0_i32_0 : i32, i32
  }
  func.func @transform_19(%arg0: i32) -> (i32, i32) {
    %c0_i32 = arith.constant 0 : i32
    %c0_i32_0 = arith.constant 0 : i32
    %c0_i32_1 = arith.constant 0 : i32
    return %c0_i32, %c0_i32_0 : i32, i32
  }
  func.func @transform_20(%arg0: i32) -> (i32, i32) {
    %c0_i32 = arith.constant 0 : i32
    %c0_i32_0 = arith.constant 0 : i32
    %c0_i32_1 = arith.constant 0 : i32
    return %c0_i32, %c0_i32_0 : i32, i32
  }
  func.func @transform_21(%arg0: i32) -> (i32, i32, i32) {
    %c0_i32 = arith.constant 0 : i32
    %c0_i32_0 = arith.constant 0 : i32
    %c0_i32_1 = arith.constant 0 : i32
    return %arg0, %c0_i32, %c0_i32_0 : i32, i32, i32
  }
}

</mosaic_0001>

<llo_original>
// kernel: tpu_custom_call.1
$region0: #{tpu_custom_call.1}
  #allocation0 [shape = 'u32[]', space=smem, size = 0x4, offset = 0x4, fixed_abs, tag = 'smem constant byte address 0x4 - core index']
  #allocation1 [shape = 'u32[144,128]{1,0:T(1,128)}', space=vmem, size = 0x12000, scoped, tag = 'internal scratch']
  %s0 = inlined_call_operand.vmem [shape: f32[2,16,256], index: 0, kind: input, shape index: {}]
  %s1 = inlined_call_operand.vmem [shape: f32[32,16], index: 1, kind: input, shape index: {}]
  %s2 = inlined_call_operand.vmem [shape: f32[768,256], index: 2, kind: input, shape index: {}]
  %s3 = inlined_call_operand.vmem [shape: f32[1,256], index: 3, kind: input, shape index: {}]
  %s4 = inlined_call_operand.vmem [shape: f32[256,144], index: 4, kind: input, shape index: {}]
  %s5 = inlined_call_operand.vmem [shape: f32[256,144], index: 5, kind: input, shape index: {}]
  %s6 = inlined_call_operand.vmem [shape: f32[1,144], index: 6, kind: input, shape index: {}]
  %s7 = inlined_call_operand.vmem [shape: f32[1,144], index: 7, kind: input, shape index: {}]
  %s8 = inlined_call_operand.vmem [shape: f32[16,16], index: 8, kind: input, shape index: {}]
  %s9 = inlined_call_operand.vmem [shape: f32[16,16], index: 9, kind: input, shape index: {}]
  %s10 = inlined_call_operand.hbm [shape: f32[144,144], index: 10, kind: input, shape index: {}]
  %s11 = inlined_call_operand.vmem [shape: f32[1,144], index: 11, kind: input, shape index: {}]
  %s12 = inlined_call_operand.hbm [shape: f32[144,144], index: 12, kind: input, shape index: {}]
  %s13 = inlined_call_operand.vmem [shape: f32[1,144], index: 13, kind: input, shape index: {}]
  %s14 = inlined_call_operand.hbm [shape: f32[144,144], index: 14, kind: input, shape index: {}]
  %s15 = inlined_call_operand.vmem [shape: f32[1,144], index: 15, kind: input, shape index: {}]
  %s16 = inlined_call_operand.hbm [shape: f32[144,144], index: 16, kind: input, shape index: {}]
  %s17 = inlined_call_operand.vmem [shape: f32[1,144], index: 17, kind: input, shape index: {}]
  %s18 = inlined_call_operand.hbm [shape: f32[144,256], index: 18, kind: input, shape index: {}]
  %s19 = inlined_call_operand.hbm [shape: f32[144,256], index: 19, kind: input, shape index: {}]
  %s20 = inlined_call_operand.vmem [shape: f32[1,256], index: 20, kind: input, shape index: {}]
  %s21 = inlined_call_operand.hbm [shape: f32[2,16,256], index: 21, kind: output, shape index: {}]
  %s22 = sld [smem:[#allocation0]]
  $region141: #{tpu_custom_call.1} parent=0
    _
  %s24 = ssub.s32 1, %s22
  %s25 = scalar_select 0, %s24, %s22
  $region1: #{tpu_custom_call.1} parent=0
    #allocation2 [shape = 'u8[147456]{0}', space=vmem, size = 0x24000, scoped, tag = 'input window, operand 10, single buffered']
    #allocation3 [shape = 's32[2]{0}', space=sflag, size = 0x8, scoped, tag = 'scoped memory for tpu_custom_call.1']
    #allocation4 [shape = 's32[2]{0}', space=sflag, size = 0x8, scoped, tag = 'scoped memory for tpu_custom_call.1']
    #allocation5 [shape = 'u8[147456]{0}', space=vmem, size = 0x24000, scoped, tag = 'input window, operand 12, single buffered']
    #allocation6 [shape = 's32[1]{0}', space=sflag, size = 0x4, scoped, tag = 'scoped memory for tpu_custom_call.1']
    #allocation7 [shape = 'u8[147456]{0}', space=vmem, size = 0x24000, scoped, tag = 'input window, operand 14, single buffered']
    #allocation8 [shape = 'u8[147456]{0}', space=vmem, size = 0x24000, scoped, tag = 'input window, operand 16, single buffered']
    #allocation9 [shape = 's32[1]{0}', space=sflag, size = 0x4, scoped, tag = 'scoped memory for tpu_custom_call.1']
    #allocation10 [shape = 'u8[147456]{0}', space=vmem, size = 0x24000, scoped, tag = 'input window, operand 18, single buffered']
    #allocation11 [shape = 'u8[147456]{0}', space=vmem, size = 0x24000, scoped, tag = 'input window, operand 19, single buffered']
    #allocation12 [shape = 's32[1]{0}', space=sflag, size = 0x4, scoped, tag = 'scoped memory for tpu_custom_call.1']
    #allocation13 [shape = 'u8[32768]{0}', space=vmem, size = 0x8000, scoped, tag = 'output window, operand 0']
    %26 = vsyncpa [#allocation3], 0
    %27 = vsyncpa [#allocation6], 0
    %28 = vsyncpa [#allocation9], 0
    %29 = vsyncpa [#allocation12], 0
    %30 = vsyncpa [#allocation4], 0
    %s31 = scalar_lea.sflag [#allocation4], 1
    %32 = vsyncpa %s31, 0
    loop: start=0, step=1, limit=4
    $region2: #{tpu_custom_call.1} parent=1 // loop_pre_header
      _
    $region3: #{tpu_custom_call.1} parent=1 // loop_header
      %s34 = sphi 0, %s38
      %p35 = scmp.ge.s32.totalorder %s34, 4
      %s44 = sphi 0, %s46
      %s47 = sphi 0, %s44
      %s48 = sphi 0, %s47
      %s64 = sphi 0, %s48
      %s68 = sphi 0, %s68
      %s70 = sphi 0, %s68
      %s71 = sphi 0, %s70
      %s85 = sphi 0, %s71
      %s89 = sphi 0, %s89
      %s91 = sphi 0, %s89
      %s92 = sphi 0, %s91
      %s106 = sphi 0, %s92
      %s110 = sphi 0, %s110
      %s112 = sphi 0, %s110
      %s113 = sphi 0, %s112
      %s127 = sphi 0, %s113
      %s131 = sphi 0, %s131
      %s133 = sphi 0, %s131
      %s134 = sphi 0, %s133
      %s148 = sphi 0, %s134
      %s152 = sphi 0, %s152
      %s154 = sphi 0, %s152
      %s155 = sphi 0, %s154
      %s169 = sphi 0, %s155
      %s173 = sphi 0, %s173
      %s175 = sphi 0, %s173
      %s176 = sphi 0, %s175
      %s190 = sphi 0, %s176
      %s194 = sphi 0, %s194
      %s196 = sphi 0, %s194
      %s197 = sphi 0, %s196
      %s211 = sphi 0, %s197
      %s215 = sphi 0, %s215
      %s217 = sphi 0, %s215
      %s218 = sphi 0, %s217
      %s232 = sphi 0, %s218
      %s236 = sphi 0, %s236
      %s238 = sphi 0, %s236
      %s239 = sphi 0, %s238
      %s253 = sphi 0, %s239
      %s257 = sphi 0, %s257
      %s259 = sphi 0, %s257
      %s260 = sphi 0, %s259
      %s274 = sphi 0, %s260
      %s278 = sphi 0, %s278
      %s280 = sphi 0, %s278
      %s281 = sphi 0, %s280
      %s295 = sphi 0, %s281
      %s299 = sphi 0, %s299
      %s301 = sphi 0, %s299
      %s302 = sphi 0, %s301
      %s316 = sphi 0, %s302
      %s320 = sphi 0, %s320
      %s322 = sphi 0, %s320
      %s323 = sphi 0, %s322
      %s337 = sphi 0, %s323
      %s341 = sphi 0, %s341
      %s343 = sphi 0, %s341
      %s344 = sphi 0, %s343
      %s358 = sphi 0, %s344
      %s362 = sphi 0, %s362
      %s364 = sphi 0, %s362
      %s365 = sphi 0, %s364
      %s379 = sphi 0, %s365
      %s383 = sphi 0, %s383
      %s385 = sphi 0, %s383
      %s386 = sphi 0, %s385
      %s400 = sphi 0, %s386
      %s404 = sphi 0, %s404
      %s406 = sphi 0, %s404
      %s407 = sphi 0, %s406
      %s421 = sphi 0, %s407
      %s425 = sphi 0, %s425
      %s427 = sphi 0, %s425
      %s428 = sphi 0, %s427
      %s442 = sphi 0, %s428
      %s446 = sphi 0, %s446
      %s448 = sphi 0, %s446
      %s449 = sphi 0, %s448
      %s463 = sphi 0, %s449
      %s467 = sphi 0, %s467
      %s469 = sphi 0, %s467
      %s470 = sphi 0, %s469
      %s484 = sphi 0, %s470
      %s490 = sphi 0, %s492
      %s493 = sphi 0, %s490
      %s494 = sphi 0, %s493
      %s510 = sphi 0, %s494
    $region4: #{tpu_custom_call.1} parent=1 // loop_header_branch
      %37 = sbr.rel (%p35) target = $region8
    $region5: #{tpu_custom_call.1} parent=1 // loop_body
      %s39 = ssub.s32 %s34, 1
      %s40 = ssub.s32 %s34, 2
      %s41 = sadd.s32 %s34, 1
      %s42 = ssub.s32 %s34, %s41
      %p43 = scmp.eq.s32.totalorder %s42, 0
      %s45 = sadd.s32 %s44, 1
      %s46 = scalar_select %p43, %s44, %s45
      %p49 = pneg %p43
      %p50 = scmp.eq.s32.totalorder %s34, 1
      %p51 = por %p49, %p50
      %p52 = scmp.ne.s32.totalorder %s44, %s47
      %p53 = scmp.eq.s32.totalorder %s34, 0
      %p54 = por %p52, %p53
      %p55 = scmp.ne.s32.totalorder %s44, %s47
      %p56 = scmp.eq.s32.totalorder %s39, 1
      %p57 = por %p55, %p56
      %p58 = scmp.ne.s32.totalorder %s47, %s48
      %p59 = scmp.eq.s32.totalorder %s39, 0
      %p60 = por %p58, %p59
      %p61 = scmp.ne.s32.totalorder %s47, %s48
      %p62 = scmp.eq.s32.totalorder %s40, 1
      %p63 = por %p61, %p62
      %p65 = scmp.ne.s32.totalorder %s48, %s64
      %p66 = scmp.eq.s32.totalorder %s40, 0
      %p67 = por %p65, %p66
      %s69 = sadd.s32 %s68, 1
      %p72 = scmp.eq.s32.totalorder %s34, 1
      %p73 = scmp.ne.s32.totalorder %s68, %s70
      %p74 = scmp.eq.s32.totalorder %s34, 0
      %p75 = por %p73, %p74
      %p76 = scmp.ne.s32.totalorder %s68, %s70
      %p77 = scmp.eq.s32.totalorder %s39, 1
      %p78 = por %p76, %p77
      %p79 = scmp.ne.s32.totalorder %s70, %s71
      %p80 = scmp.eq.s32.totalorder %s39, 0
      %p81 = por %p79, %p80
      %p82 = scmp.ne.s32.totalorder %s70, %s71
      %p83 = scmp.eq.s32.totalorder %s40, 1
      %p84 = por %p82, %p83
      %p86 = scmp.ne.s32.totalorder %s71, %s85
      %p87 = scmp.eq.s32.totalorder %s40, 0
      %p88 = por %p86, %p87
      %s90 = sadd.s32 %s89, 1
      %p93 = scmp.eq.s32.totalorder %s34, 1
      %p94 = scmp.ne.s32.totalorder %s89, %s91
      %p95 = scmp.eq.s32.totalorder %s34, 0
      %p96 = por %p94, %p95
      %p97 = scmp.ne.s32.totalorder %s89, %s91
      %p98 = scmp.eq.s32.totalorder %s39, 1
      %p99 = por %p97, %p98
      %p100 = scmp.ne.s32.totalorder %s91, %s92
      %p101 = scmp.eq.s32.totalorder %s39, 0
      %p102 = por %p100, %p101
      %p103 = scmp.ne.s32.totalorder %s91, %s92
      %p104 = scmp.eq.s32.totalorder %s40, 1
      %p105 = por %p103, %p104
      %p107 = scmp.ne.s32.totalorder %s92, %s106
      %p108 = scmp.eq.s32.totalorder %s40, 0
      %p109 = por %p107, %p108
      %s111 = sadd.s32 %s110, 1
      %p114 = scmp.eq.s32.totalorder %s34, 1
      %p115 = scmp.ne.s32.totalorder %s110, %s112
      %p116 = scmp.eq.s32.totalorder %s34, 0
      %p117 = por %p115, %p116
      %p118 = scmp.ne.s32.totalorder %s110, %s112
      %p119 = scmp.eq.s32.totalorder %s39, 1
      %p120 = por %p118, %p119
      %p121 = scmp.ne.s32.totalorder %s112, %s113
      %p122 = scmp.eq.s32.totalorder %s39, 0
      %p123 = por %p121, %p122
      %p124 = scmp.ne.s32.totalorder %s112, %s113
      %p125 = scmp.eq.s32.totalorder %s40, 1
      %p126 = por %p124, %p125
      %p128 = scmp.ne.s32.totalorder %s113, %s127
      %p129 = scmp.eq.s32.totalorder %s40, 0
      %p130 = por %p128, %p129
      %s132 = sadd.s32 %s131, 1
      %p135 = scmp.eq.s32.totalorder %s34, 1
      %p136 = scmp.ne.s32.totalorder %s131, %s133
      %p137 = scmp.eq.s32.totalorder %s34, 0
      %p138 = por %p136, %p137
      %p139 = scmp.ne.s32.totalorder %s131, %s133
      %p140 = scmp.eq.s32.totalorder %s39, 1
      %p141 = por %p139, %p140
      %p142 = scmp.ne.s32.totalorder %s133, %s134
      %p143 = scmp.eq.s32.totalorder %s39, 0
      %p144 = por %p142, %p143
      %p145 = scmp.ne.s32.totalorder %s133, %s134
      %p146 = scmp.eq.s32.totalorder %s40, 1
      %p147 = por %p145, %p146
      %p149 = scmp.ne.s32.totalorder %s134, %s148
      %p150 = scmp.eq.s32.totalorder %s40, 0
      %p151 = por %p149, %p150
      %s153 = sadd.s32 %s152, 1
      %p156 = scmp.eq.s32.totalorder %s34, 1
      %p157 = scmp.ne.s32.totalorder %s152, %s154
      %p158 = scmp.eq.s32.totalorder %s34, 0
      %p159 = por %p157, %p158
      %p160 = scmp.ne.s32.totalorder %s152, %s154
      %p161 = scmp.eq.s32.totalorder %s39, 1
      %p162 = por %p160, %p161
      %p163 = scmp.ne.s32.totalorder %s154, %s155
      %p164 = scmp.eq.s32.totalorder %s39, 0
      %p165 = por %p163, %p164
      %p166 = scmp.ne.s32.totalorder %s154, %s155
      %p167 = scmp.eq.s32.totalorder %s40, 1
      %p168 = por %p166, %p167
      %p170 = scmp.ne.s32.totalorder %s155, %s169
      %p171 = scmp.eq.s32.totalorder %s40, 0
      %p172 = por %p170, %p171
      %s174 = sadd.s32 %s173, 1
      %p177 = scmp.eq.s32.totalorder %s34, 1
      %p178 = scmp.ne.s32.totalorder %s173, %s175
      %p179 = scmp.eq.s32.totalorder %s34, 0
      %p180 = por %p178, %p179
      %p181 = scmp.ne.s32.totalorder %s173, %s175
      %p182 = scmp.eq.s32.totalorder %s39, 1
      %p183 = por %p181, %p182
      %p184 = scmp.ne.s32.totalorder %s175, %s176
      %p185 = scmp.eq.s32.totalorder %s39, 0
      %p186 = por %p184, %p185
      %p187 = scmp.ne.s32.totalorder %s175, %s176
      %p188 = scmp.eq.s32.totalorder %s40, 1
      %p189 = por %p187, %p188
      %p191 = scmp.ne.s32.totalorder %s176, %s190
      %p192 = scmp.eq.s32.totalorder %s40, 0
      %p193 = por %p191, %p192
      %s195 = sadd.s32 %s194, 1
      %p198 = scmp.eq.s32.totalorder %s34, 1
      %p199 = scmp.ne.s32.totalorder %s194, %s196
      %p200 = scmp.eq.s32.totalorder %s34, 0
      %p201 = por %p199, %p200
      %p202 = scmp.ne.s32.totalorder %s194, %s196
      %p203 = scmp.eq.s32.totalorder %s39, 1
      %p204 = por %p202, %p203
      %p205 = scmp.ne.s32.totalorder %s196, %s197
      %p206 = scmp.eq.s32.totalorder %s39, 0
      %p207 = por %p205, %p206
      %p208 = scmp.ne.s32.totalorder %s196, %s197
      %p209 = scmp.eq.s32.totalorder %s40, 1
      %p210 = por %p208, %p209
      %p212 = scmp.ne.s32.totalorder %s197, %s211
      %p213 = scmp.eq.s32.totalorder %s40, 0
      %p214 = por %p212, %p213
      %s216 = sadd.s32 %s215, 1
      %p219 = scmp.eq.s32.totalorder %s34, 1
      %p220 = scmp.ne.s32.totalorder %s215, %s217
      %p221 = scmp.eq.s32.totalorder %s34, 0
      %p222 = por %p220, %p221
      %p223 = scmp.ne.s32.totalorder %s215, %s217
      %p224 = scmp.eq.s32.totalorder %s39, 1
      %p225 = por %p223, %p224
      %p226 = scmp.ne.s32.totalorder %s217, %s218
      %p227 = scmp.eq.s32.totalorder %s39, 0
      %p228 = por %p226, %p227
      %p229 = scmp.ne.s32.totalorder %s217, %s218
      %p230 = scmp.eq.s32.totalorder %s40, 1
      %p231 = por %p229, %p230
      %p233 = scmp.ne.s32.totalorder %s218, %s232
      %p234 = scmp.eq.s32.totalorder %s40, 0
      %p235 = por %p233, %p234
      %s237 = sadd.s32 %s236, 1
      %p240 = scmp.eq.s32.totalorder %s34, 1
      %p241 = scmp.ne.s32.totalorder %s236, %s238
      %p242 = scmp.eq.s32.totalorder %s34, 0
      %p243 = por %p241, %p242
      %p244 = scmp.ne.s32.totalorder %s236, %s238
      %p245 = scmp.eq.s32.totalorder %s39, 1
      %p246 = por %p244, %p245
      %p247 = scmp.ne.s32.totalorder %s238, %s239
      %p248 = scmp.eq.s32.totalorder %s39, 0
      %p249 = por %p247, %p248
      %p250 = scmp.ne.s32.totalorder %s238, %s239
      %p251 = scmp.eq.s32.totalorder %s40, 1
      %p252 = por %p250, %p251
      %p254 = scmp.ne.s32.totalorder %s239, %s253
      %p255 = scmp.eq.s32.totalorder %s40, 0
      %p256 = por %p254, %p255
      %s258 = sadd.s32 %s257, 1
      %p261 = scmp.eq.s32.totalorder %s34, 1
      %p262 = scmp.ne.s32.totalorder %s257, %s259
      %p263 = scmp.eq.s32.totalorder %s34, 0
      %p264 = por %p262, %p263
      %p265 = scmp.ne.s32.totalorder %s257, %s259
      %p266 = scmp.eq.s32.totalorder %s39, 1
      %p267 = por %p265, %p266
      %p268 = scmp.ne.s32.totalorder %s259, %s260
      %p269 = scmp.eq.s32.totalorder %s39, 0
      %p270 = por %p268, %p269
      %p271 = scmp.ne.s32.totalorder %s259, %s260
      %p272 = scmp.eq.s32.totalorder %s40, 1
      %p273 = por %p271, %p272
      %p275 = scmp.ne.s32.totalorder %s260, %s274
      %p276 = scmp.eq.s32.totalorder %s40, 0
      %p277 = por %p275, %p276
      %s279 = sadd.s32 %s278, 1
      %p282 = scmp.eq.s32.totalorder %s34, 1
      %p283 = scmp.ne.s32.totalorder %s278, %s280
      %p284 = scmp.eq.s32.totalorder %s34, 0
      %p285 = por %p283, %p284
      %p286 = scmp.ne.s32.totalorder %s278, %s280
      %p287 = scmp.eq.s32.totalorder %s39, 1
      %p288 = por %p286, %p287
      %p289 = scmp.ne.s32.totalorder %s280, %s281
      %p290 = scmp.eq.s32.totalorder %s39, 0
      %p291 = por %p289, %p290
      %p292 = scmp.ne.s32.totalorder %s280, %s281
      %p293 = scmp.eq.s32.totalorder %s40, 1
      %p294 = por %p292, %p293
      %p296 = scmp.ne.s32.totalorder %s281, %s295
      %p297 = scmp.eq.s32.totalorder %s40, 0
      %p298 = por %p296, %p297
      %s300 = sadd.s32 %s299, 1
      %p303 = scmp.eq.s32.totalorder %s34, 1
      %p304 = scmp.ne.s32.totalorder %s299, %s301
      %p305 = scmp.eq.s32.totalorder %s34, 0
      %p306 = por %p304, %p305
      %p307 = scmp.ne.s32.totalorder %s299, %s301
      %p308 = scmp.eq.s32.totalorder %s39, 1
      %p309 = por %p307, %p308
      %p310 = scmp.ne.s32.totalorder %s301, %s302
      %p311 = scmp.eq.s32.totalorder %s39, 0
      %p312 = por %p310, %p311
      %p313 = scmp.ne.s32.totalorder %s301, %s302
      %p314 = scmp.eq.s32.totalorder %s40, 1
      %p315 = por %p313, %p314
      %p317 = scmp.ne.s32.totalorder %s302, %s316
      %p318 = scmp.eq.s32.totalorder %s40, 0
      %p319 = por %p317, %p318
      %s321 = sadd.s32 %s320, 1
      %p324 = scmp.eq.s32.totalorder %s34, 1
      %p325 = scmp.ne.s32.totalorder %s320, %s322
      %p326 = scmp.eq.s32.totalorder %s34, 0
      %p327 = por %p325, %p326
      %p328 = scmp.ne.s32.totalorder %s320, %s322
      %p329 = scmp.eq.s32.totalorder %s39, 1
      %p330 = por %p328, %p329
      %p331 = scmp.ne.s32.totalorder %s322, %s323
      %p332 = scmp.eq.s32.totalorder %s39, 0
      %p333 = por %p331, %p332
      %p334 = scmp.ne.s32.totalorder %s322, %s323
      %p335 = scmp.eq.s32.totalorder %s40, 1
      %p336 = por %p334, %p335
      %p338 = scmp.ne.s32.totalorder %s323, %s337
      %p339 = scmp.eq.s32.totalorder %s40, 0
      %p340 = por %p338, %p339
      %s342 = sadd.s32 %s341, 1
      %p345 = scmp.eq.s32.totalorder %s34, 1
      %p346 = scmp.ne.s32.totalorder %s341, %s343
      %p347 = scmp.eq.s32.totalorder %s34, 0
      %p348 = por %p346, %p347
      %p349 = scmp.ne.s32.totalorder %s341, %s343
      %p350 = scmp.eq.s32.totalorder %s39, 1
      %p351 = por %p349, %p350
      %p352 = scmp.ne.s32.totalorder %s343, %s344
      %p353 = scmp.eq.s32.totalorder %s39, 0
      %p354 = por %p352, %p353
      %p355 = scmp.ne.s32.totalorder %s343, %s344
      %p356 = scmp.eq.s32.totalorder %s40, 1
      %p357 = por %p355, %p356
      %p359 = scmp.ne.s32.totalorder %s344, %s358
      %p360 = scmp.eq.s32.totalorder %s40, 0
      %p361 = por %p359, %p360
      %s363 = sadd.s32 %s362, 1
      %p366 = scmp.eq.s32.totalorder %s34, 1
      %p367 = scmp.ne.s32.totalorder %s362, %s364
      %p368 = scmp.eq.s32.totalorder %s34, 0
      %p369 = por %p367, %p368
      %p370 = scmp.ne.s32.totalorder %s362, %s364
      %p371 = scmp.eq.s32.totalorder %s39, 1
      %p372 = por %p370, %p371
      %p373 = scmp.ne.s32.totalorder %s364, %s365
      %p374 = scmp.eq.s32.totalorder %s39, 0
      %p375 = por %p373, %p374
      %p376 = scmp.ne.s32.totalorder %s364, %s365
      %p377 = scmp.eq.s32.totalorder %s40, 1
      %p378 = por %p376, %p377
      %p380 = scmp.ne.s32.totalorder %s365, %s379
      %p381 = scmp.eq.s32.totalorder %s40, 0
      %p382 = por %p380, %p381
      %s384 = sadd.s32 %s383, 1
      %p387 = scmp.eq.s32.totalorder %s34, 1
      %p388 = scmp.ne.s32.totalorder %s383, %s385
      %p389 = scmp.eq.s32.totalorder %s34, 0
      %p390 = por %p388, %p389
      %p391 = scmp.ne.s32.totalorder %s383, %s385
      %p392 = scmp.eq.s32.totalorder %s39, 1
      %p393 = por %p391, %p392
      %p394 = scmp.ne.s32.totalorder %s385, %s386
      %p395 = scmp.eq.s32.totalorder %s39, 0
      %p396 = por %p394, %p395
      %p397 = scmp.ne.s32.totalorder %s385, %s386
      %p398 = scmp.eq.s32.totalorder %s40, 1
      %p399 = por %p397, %p398
      %p401 = scmp.ne.s32.totalorder %s386, %s400
      %p402 = scmp.eq.s32.totalorder %s40, 0
      %p403 = por %p401, %p402
      %s405 = sadd.s32 %s404, 1
      %p408 = scmp.eq.s32.totalorder %s34, 1
      %p409 = scmp.ne.s32.totalorder %s404, %s406
      %p410 = scmp.eq.s32.totalorder %s34, 0
      %p411 = por %p409, %p410
      %p412 = scmp.ne.s32.totalorder %s404, %s406
      %p413 = scmp.eq.s32.totalorder %s39, 1
      %p414 = por %p412, %p413
      %p415 = scmp.ne.s32.totalorder %s406, %s407
      %p416 = scmp.eq.s32.totalorder %s39, 0
      %p417 = por %p415, %p416
      %p418 = scmp.ne.s32.totalorder %s406, %s407
      %p419 = scmp.eq.s32.totalorder %s40, 1
      %p420 = por %p418, %p419
      %p422 = scmp.ne.s32.totalorder %s407, %s421
      %p423 = scmp.eq.s32.totalorder %s40, 0
      %p424 = por %p422, %p423
      %s426 = sadd.s32 %s425, 1
      %p429 = scmp.eq.s32.totalorder %s34, 1
      %p430 = scmp.ne.s32.totalorder %s425, %s427
      %p431 = scmp.eq.s32.totalorder %s34, 0
      %p432 = por %p430, %p431
      %p433 = scmp.ne.s32.totalorder %s425, %s427
      %p434 = scmp.eq.s32.totalorder %s39, 1
      %p435 = por %p433, %p434
      %p436 = scmp.ne.s32.totalorder %s427, %s428
      %p437 = scmp.eq.s32.totalorder %s39, 0
      %p438 = por %p436, %p437
      %p439 = scmp.ne.s32.totalorder %s427, %s428
      %p440 = scmp.eq.s32.totalorder %s40, 1
      %p441 = por %p439, %p440
      %p443 = scmp.ne.s32.totalorder %s428, %s442
      %p444 = scmp.eq.s32.totalorder %s40, 0
      %p445 = por %p443, %p444
      %s447 = sadd.s32 %s446, 1
      %p450 = scmp.eq.s32.totalorder %s34, 1
      %p451 = scmp.ne.s32.totalorder %s446, %s448
      %p452 = scmp.eq.s32.totalorder %s34, 0
      %p453 = por %p451, %p452
      %p454 = scmp.ne.s32.totalorder %s446, %s448
      %p455 = scmp.eq.s32.totalorder %s39, 1
      %p456 = por %p454, %p455
      %p457 = scmp.ne.s32.totalorder %s448, %s449
      %p458 = scmp.eq.s32.totalorder %s39, 0
      %p459 = por %p457, %p458
      %p460 = scmp.ne.s32.totalorder %s448, %s449
      %p461 = scmp.eq.s32.totalorder %s40, 1
      %p462 = por %p460, %p461
      %p464 = scmp.ne.s32.totalorder %s449, %s463
      %p465 = scmp.eq.s32.totalorder %s40, 0
      %p466 = por %p464, %p465
      %s468 = sadd.s32 %s467, 1
      %p471 = scmp.eq.s32.totalorder %s34, 1
      %p472 = scmp.ne.s32.totalorder %s467, %s469
      %p473 = scmp.eq.s32.totalorder %s34, 0
      %p474 = por %p472, %p473
      %p475 = scmp.ne.s32.totalorder %s467, %s469
      %p476 = scmp.eq.s32.totalorder %s39, 1
      %p477 = por %p475, %p476
      %p478 = scmp.ne.s32.totalorder %s469, %s470
      %p479 = scmp.eq.s32.totalorder %s39, 0
      %p480 = por %p478, %p479
      %p481 = scmp.ne.s32.totalorder %s469, %s470
      %p482 = scmp.eq.s32.totalorder %s40, 1
      %p483 = por %p481, %p482
      %p485 = scmp.ne.s32.totalorder %s470, %s484
      %p486 = scmp.eq.s32.totalorder %s40, 0
      %p487 = por %p485, %p486
      %s488 = ssub.s32 %s34, %s41
      %p489 = scmp.eq.s32.totalorder %s488, 0
      %s491 = sadd.s32 %s490, 1
      %s492 = scalar_select %p489, %s490, %s491
      %p495 = pneg %p489
      %p496 = scmp.eq.s32.totalorder %s34, 1
      %p497 = por %p495, %p496
      %p498 = scmp.ne.s32.totalorder %s490, %s493
      %p499 = scmp.eq.s32.totalorder %s34, 0
      %p500 = por %p498, %p499
      %p501 = scmp.ne.s32.totalorder %s490, %s493
      %p502 = scmp.eq.s32.totalorder %s39, 1
      %p503 = por %p501, %p502
      %p504 = scmp.ne.s32.totalorder %s493, %s494
      %p505 = scmp.eq.s32.totalorder %s39, 0
      %p506 = por %p504, %p505
      %p507 = scmp.ne.s32.totalorder %s493, %s494
      %p508 = scmp.eq.s32.totalorder %s40, 1
      %p509 = por %p507, %p508
      %p511 = scmp.ne.s32.totalorder %s494, %s510
      %p512 = scmp.eq.s32.totalorder %s40, 0
      %p513 = por %p511, %p512
      %p514 = scmp.le.s32.totalorder 1, %s34
      %p515 = scmp.lt.s32.totalorder %s34, 3
      %p516 = pnand %p514, %p515
      %p517 = pneg %p516
      // Predicated region
      $region9: #{tpu_custom_call.1} parent=5 // pred_check
        _
      $region10: #{tpu_custom_call.1} parent=5 // pred_check_branch
        %519 = sbr.rel (%p516) target = $region12
      $region11: #{tpu_custom_call.1} parent=5 // pred_region
        %s520 = ssub.s32 %s34, 1
        // Predicated region
        $region13: #{tpu_custom_call.1} parent=11 // pred_check
          %p521 = pneg %p81
        $region14: #{tpu_custom_call.1} parent=11 // pred_check_branch
          %523 = sbr.rel (%p521) target = $region16
        $region15: #{tpu_custom_call.1} parent=11 // pred_region
          _
        $region16: #{tpu_custom_call.1} parent=11 // pred_fallthru
          _
        // Predicated region
        $region17: #{tpu_custom_call.1} parent=11 // pred_check
          %p524 = pneg %p102
        $region18: #{tpu_custom_call.1} parent=11 // pred_check_branch
          %526 = sbr.rel (%p524) target = $region20
        $region19: #{tpu_custom_call.1} parent=11 // pred_region
          _
        $region20: #{tpu_custom_call.1} parent=11 // pred_fallthru
          _
        // Predicated region
        $region21: #{tpu_custom_call.1} parent=11 // pred_check
          %p527 = pneg %p123
        $region22: #{tpu_custom_call.1} parent=11 // pred_check_branch
          %529 = sbr.rel (%p527) target = $region24
        $region23: #{tpu_custom_call.1} parent=11 // pred_region
          _
        $region24: #{tpu_custom_call.1} parent=11 // pred_fallthru
          _
        // Predicated region
        $region25: #{tpu_custom_call.1} parent=11 // pred_check
          %p530 = pneg %p144
        $region26: #{tpu_custom_call.1} parent=11 // pred_check_branch
          %532 = sbr.rel (%p530) target = $region28
        $region27: #{tpu_custom_call.1} parent=11 // pred_region
          _
        $region28: #{tpu_custom_call.1} parent=11 // pred_fallthru
          _
        // Predicated region
        $region29: #{tpu_custom_call.1} parent=11 // pred_check
          %p533 = pneg %p165
        $region30: #{tpu_custom_call.1} parent=11 // pred_check_branch
          %535 = sbr.rel (%p533) target = $region32
        $region31: #{tpu_custom_call.1} parent=11 // pred_region
          _
        $region32: #{tpu_custom_call.1} parent=11 // pred_fallthru
          _
        // Predicated region
        $region33: #{tpu_custom_call.1} parent=11 // pred_check
          %p536 = pneg %p186
        $region34: #{tpu_custom_call.1} parent=11 // pred_check_branch
          %538 = sbr.rel (%p536) target = $region36
        $region35: #{tpu_custom_call.1} parent=11 // pred_region
          _
        $region36: #{tpu_custom_call.1} parent=11 // pred_fallthru
          _
        // Predicated region
        $region37: #{tpu_custom_call.1} parent=11 // pred_check
          %p539 = pneg %p207
        $region38: #{tpu_custom_call.1} parent=11 // pred_check_branch
          %541 = sbr.rel (%p539) target = $region40
        $region39: #{tpu_custom_call.1} parent=11 // pred_region
          _
        $region40: #{tpu_custom_call.1} parent=11 // pred_fallthru
          _
        // Predicated region
        $region41: #{tpu_custom_call.1} parent=11 // pred_check
          %p542 = pneg %p228
        $region42: #{tpu_custom_call.1} parent=11 // pred_check_branch
          %544 = sbr.rel (%p542) target = $region44
        $region43: #{tpu_custom_call.1} parent=11 // pred_region
          _
        $region44: #{tpu_custom_call.1} parent=11 // pred_fallthru
          _
        // Predicated region
        $region45: #{tpu_custom_call.1} parent=11 // pred_check
          %p545 = pneg %p249
        $region46: #{tpu_custom_call.1} parent=11 // pred_check_branch
          %547 = sbr.rel (%p545) target = $region48
        $region47: #{tpu_custom_call.1} parent=11 // pred_region
          _
        $region48: #{tpu_custom_call.1} parent=11 // pred_fallthru
          _
        // Predicated region
        $region49: #{tpu_custom_call.1} parent=11 // pred_check
          %p548 = pneg %p270
        $region50: #{tpu_custom_call.1} parent=11 // pred_check_branch
          %550 = sbr.rel (%p548) target = $region52
        $region51: #{tpu_custom_call.1} parent=11 // pred_region
          %s552 = ssub.s32 4608, 4608
          %553 = vsyncadd [#allocation3], %s552
          %s554 = sshll.u32 [#allocation2], 4
          %s555 = int_to_ptr.vmem [resolvable:$true] %s554
          %560 = dma.hbm_to_vmem [thread:$0]  %s10, 4608, %s555, [#allocation3], 256, 256, 16
        $region52: #{tpu_custom_call.1} parent=11 // pred_fallthru
          _
        // Predicated region
        $region53: #{tpu_custom_call.1} parent=11 // pred_check
          %p561 = pneg %p291
        $region54: #{tpu_custom_call.1} parent=11 // pred_check_branch
          %563 = sbr.rel (%p561) target = $region56
        $region55: #{tpu_custom_call.1} parent=11 // pred_region
          _
        $region56: #{tpu_custom_call.1} parent=11 // pred_fallthru
          _
        // Predicated region
        $region57: #{tpu_custom_call.1} parent=11 // pred_check
          %p564 = pneg %p312
        $region58: #{tpu_custom_call.1} parent=11 // pred_check_branch
          %566 = sbr.rel (%p564) target = $region60
        $region59: #{tpu_custom_call.1} parent=11 // pred_region
          %s568 = ssub.s32 4608, 4608
          %569 = vsyncadd [#allocation6], %s568
          %s570 = sshll.u32 [#allocation5], 4
          %s571 = int_to_ptr.vmem [resolvable:$true] %s570
          %576 = dma.hbm_to_vmem [thread:$0]  %s12, 4608, %s571, [#allocation6], 256, 256, 16
        $region60: #{tpu_custom_call.1} parent=11 // pred_fallthru
          _
        // Predicated region
        $region61: #{tpu_custom_call.1} parent=11 // pred_check
          %p577 = pneg %p333
        $region62: #{tpu_custom_call.1} parent=11 // pred_check_branch
          %579 = sbr.rel (%p577) target = $region64
        $region63: #{tpu_custom_call.1} parent=11 // pred_region
          _
        $region64: #{tpu_custom_call.1} parent=11 // pred_fallthru
          _
        // Predicated region
        $region65: #{tpu_custom_call.1} parent=11 // pred_check
          %p580 = pneg %p354
        $region66: #{tpu_custom_call.1} parent=11 // pred_check_branch
          %582 = sbr.rel (%p580) target = $region68
        $region67: #{tpu_custom_call.1} parent=11 // pred_region
          %s584 = ssub.s32 4608, 4608
          %585 = vsyncadd [#allocation6], %s584
          %s586 = sshll.u32 [#allocation7], 4
          %s587 = int_to_ptr.vmem [resolvable:$true] %s586
          %592 = dma.hbm_to_vmem [thread:$0]  %s14, 4608, %s587, [#allocation6], 256, 256, 16
        $region68: #{tpu_custom_call.1} parent=11 // pred_fallthru
          _
        // Predicated region
        $region69: #{tpu_custom_call.1} parent=11 // pred_check
          %p593 = pneg %p375
        $region70: #{tpu_custom_call.1} parent=11 // pred_check_branch
          %595 = sbr.rel (%p593) target = $region72
        $region71: #{tpu_custom_call.1} parent=11 // pred_region
          _
        $region72: #{tpu_custom_call.1} parent=11 // pred_fallthru
          _
        // Predicated region
        $region73: #{tpu_custom_call.1} parent=11 // pred_check
          %p596 = pneg %p396
        $region74: #{tpu_custom_call.1} parent=11 // pred_check_branch
          %598 = sbr.rel (%p596) target = $region76
        $region75: #{tpu_custom_call.1} parent=11 // pred_region
          %s600 = ssub.s32 4608, 4608
          %601 = vsyncadd [#allocation9], %s600
          %s602 = sshll.u32 [#allocation8], 4
          %s603 = int_to_ptr.vmem [resolvable:$true] %s602
          %608 = dma.hbm_to_vmem [thread:$0]  %s16, 4608, %s603, [#allocation9], 256, 256, 16
        $region76: #{tpu_custom_call.1} parent=11 // pred_fallthru
          _
        // Predicated region
        $region77: #{tpu_custom_call.1} parent=11 // pred_check
          %p609 = pneg %p417
        $region78: #{tpu_custom_call.1} parent=11 // pred_check_branch
          %611 = sbr.rel (%p609) target = $region80
        $region79: #{tpu_custom_call.1} parent=11 // pred_region
          _
        $region80: #{tpu_custom_call.1} parent=11 // pred_fallthru
          _
        // Predicated region
        $region81: #{tpu_custom_call.1} parent=11 // pred_check
          %p612 = pneg %p438
        $region82: #{tpu_custom_call.1} parent=11 // pred_check_branch
          %614 = sbr.rel (%p612) target = $region84
        $region83: #{tpu_custom_call.1} parent=11 // pred_region
          %s616 = ssub.s32 4608, 4608
          %617 = vsyncadd [#allocation9], %s616
          %s618 = sshll.u32 [#allocation10], 4
          %s619 = int_to_ptr.vmem [resolvable:$true] %s618
          %624 = dma.hbm_to_vmem [thread:$0]  %s18, 4608, %s619, [#allocation9], 256, 256, 16
        $region84: #{tpu_custom_call.1} parent=11 // pred_fallthru
          _
        // Predicated region
        $region85: #{tpu_custom_call.1} parent=11 // pred_check
          %p625 = pneg %p459
        $region86: #{tpu_custom_call.1} parent=11 // pred_check_branch
          %627 = sbr.rel (%p625) target = $region88
        $region87: #{tpu_custom_call.1} parent=11 // pred_region
          %s629 = ssub.s32 4608, 4608
          %630 = vsyncadd [#allocation12], %s629
          %s631 = sshll.u32 [#allocation11], 4
          %s632 = int_to_ptr.vmem [resolvable:$true] %s631
          %637 = dma.hbm_to_vmem [thread:$0]  %s19, 4608, %s632, [#allocation12], 256, 256, 16
        $region88: #{tpu_custom_call.1} parent=11 // pred_fallthru
          _
        // Predicated region
        $region89: #{tpu_custom_call.1} parent=11 // pred_check
          %p638 = pneg %p480
        $region90: #{tpu_custom_call.1} parent=11 // pred_check_branch
          %640 = sbr.rel (%p638) target = $region92
        $region91: #{tpu_custom_call.1} parent=11 // pred_region
          _
        $region92: #{tpu_custom_call.1} parent=11 // pred_fallthru
          _
      $region12: #{tpu_custom_call.1} parent=5 // pred_fallthru
        _
      %p641 = scmp.lt.s32.totalorder %s34, 2
      // Predicated region
      $region93: #{tpu_custom_call.1} parent=5 // pred_check
        %p642 = pneg %p641
      $region94: #{tpu_custom_call.1} parent=5 // pred_check_branch
        %644 = sbr.rel (%p642) target = $region96
      $region95: #{tpu_custom_call.1} parent=5 // pred_region
        // Predicated region
        $region97: #{tpu_custom_call.1} parent=95 // pred_check
          %p645 = pneg %p54
        $region98: #{tpu_custom_call.1} parent=95 // pred_check_branch
          %647 = sbr.rel (%p645) target = $region100
        $region99: #{tpu_custom_call.1} parent=95 // pred_region
          %p648 = scmp.lt.s32.totalorder %s34, 1
          %s649 = scalar_select %p648, %s34, 1
          %s650 = smul.addr %s649, 4
          %s651 = smul.addr %s650, 8
          %s652 = scalar_lea.vmem %s0, %s651
        $region100: #{tpu_custom_call.1} parent=95 // pred_fallthru
          _
      $region96: #{tpu_custom_call.1} parent=5 // pred_fallthru
        _
      %p653 = scmp.le.s32.totalorder 1, %s34
      %p654 = scmp.lt.s32.totalorder %s34, 3
      %p655 = pnand %p653, %p654
      %p656 = pneg %p655
      // Predicated region
      $region101: #{tpu_custom_call.1} parent=5 // pred_check
        _
      $region102: #{tpu_custom_call.1} parent=5 // pred_check_branch
        %658 = sbr.rel (%p655) target = $region104
      $region103: #{tpu_custom_call.1} parent=5 // pred_region
        %s659 = ssub.s32 %s34, 1
        // Predicated region
        $region105: #{tpu_custom_call.1} parent=103 // pred_check
          %p660 = pneg %p270
        $region106: #{tpu_custom_call.1} parent=103 // pred_check_branch
          %662 = sbr.rel (%p660) target = $region108
        $region107: #{tpu_custom_call.1} parent=103 // pred_region
          %663 = dma.done [#allocation3], 4608
        $region108: #{tpu_custom_call.1} parent=103 // pred_fallthru
          _
        // Predicated region
        $region109: #{tpu_custom_call.1} parent=103 // pred_check
          %p664 = pneg %p312
        $region110: #{tpu_custom_call.1} parent=103 // pred_check_branch
          %666 = sbr.rel (%p664) target = $region112
        $region111: #{tpu_custom_call.1} parent=103 // pred_region
          %667 = dma.done [#allocation6], 4608
        $region112: #{tpu_custom_call.1} parent=103 // pred_fallthru
          _
        // Predicated region
        $region113: #{tpu_custom_call.1} parent=103 // pred_check
          %p668 = pneg %p354
        $region114: #{tpu_custom_call.1} parent=103 // pred_check_branch
          %670 = sbr.rel (%p668) target = $region116
        $region115: #{tpu_custom_call.1} parent=103 // pred_region
          %671 = dma.done [#allocation6], 4608
        $region116: #{tpu_custom_call.1} parent=103 // pred_fallthru
          _
        // Predicated region
        $region117: #{tpu_custom_call.1} parent=103 // pred_check
          %p672 = pneg %p396
        $region118: #{tpu_custom_call.1} parent=103 // pred_check_branch
          %674 = sbr.rel (%p672) target = $region120
        $region119: #{tpu_custom_call.1} parent=103 // pred_region
          %675 = dma.done [#allocation9], 4608
        $region120: #{tpu_custom_call.1} parent=103 // pred_fallthru
          _
        // Predicated region
        $region121: #{tpu_custom_call.1} parent=103 // pred_check
          %p676 = pneg %p438
        $region122: #{tpu_custom_call.1} parent=103 // pred_check_branch
          %678 = sbr.rel (%p676) target = $region124
        $region123: #{tpu_custom_call.1} parent=103 // pred_region
          %679 = dma.done [#allocation9], 4608
        $region124: #{tpu_custom_call.1} parent=103 // pred_fallthru
          _
        // Predicated region
        $region125: #{tpu_custom_call.1} parent=103 // pred_check
          %p680 = pneg %p459
        $region126: #{tpu_custom_call.1} parent=103 // pred_check_branch
          %682 = sbr.rel (%p680) target = $region128
        $region127: #{tpu_custom_call.1} parent=103 // pred_region
          %683 = dma.done [#allocation12], 4608
        $region128: #{tpu_custom_call.1} parent=103 // pred_fallthru
          _
        %p684 = scmp.lt.s32.totalorder %s39, 1
        %s685 = scalar_select %p684, %s39, 1
        %s686 = smul.addr %s685, 4
        %s687 = smul.addr %s686, 8
        %s688 = scalar_lea.vmem %s0, %s687
        %p689 = pneg %p60
        %p690 = pneg %p57
        %p691 = pneg %p81
        %p692 = pneg %p78
        %p693 = pneg %p102
        %p694 = pneg %p99
        %p695 = pneg %p123
        %p696 = pneg %p120
        %p697 = pneg %p144
        %p698 = pneg %p141
        %p699 = pneg %p165
        %p700 = pneg %p162
        %p701 = pneg %p186
        %p702 = pneg %p183
        %p703 = pneg %p207
        %p704 = pneg %p204
        %p705 = pneg %p228
        %p706 = pneg %p225
        %p707 = pneg %p249
        %p708 = pneg %p246
        %p709 = pneg %p270
        %p710 = pneg %p267
        %p711 = pneg %p291
        %p712 = pneg %p288
        %p713 = pneg %p312
        %p714 = pneg %p309
        %p715 = pneg %p333
        %p716 = pneg %p330
        %p717 = pneg %p354
        %p718 = pneg %p351
        %p719 = pneg %p375
        %p720 = pneg %p372
        %p721 = pneg %p396
        %p722 = pneg %p393
        %p723 = pneg %p417
        %p724 = pneg %p414
        %p725 = pneg %p438
        %p726 = pneg %p435
        %p727 = pneg %p459
        %p728 = pneg %p456
        %p729 = pneg %p480
        %p730 = pneg %p477
        %p731 = pneg %p506
        %p732 = pneg %p503
        %s733 = sand.u32 %s493, 1
        %s734 = scalar_lea.sflag [#allocation4], %s733
        %s735 = sand.u32 %s493, 1
        %s736 = smul.addr %s735, 32
        %s737 = scalar_lea.vmem [#allocation13], %s736
        %p738 = scmp.lt.s32.totalorder %s39, 1
        %s739 = scalar_select %p738, %s39, 1
        %s740 = smul.addr %s739, 4
        %s741 = smul.addr %s740, 8
        %s742 = scalar_lea.vmem %s0, %s741
        %v743 = vld [vmem:[%s742] sm:$0xff]
        %v744 = vld [vmem:[%s742 + $0x8] sm:$0xff]
        %v745 = vld [vmem:[%s742 + $0x10] sm:$0xff]
        %v746 = vld [vmem:[%s742 + $0x18] sm:$0xff]
        %v747 = vld [vmem:[%s1] sm:$0xff]
        %v748 = vld [vmem:[%s1 + $0x8] sm:$0xff]
        %v749 = vld [vmem:[%s1 + $0x10] sm:$0xff]
        %v750 = vld [vmem:[%s1 + $0x18] sm:$0xff]
        %vm751 = vcmask 130048
        %v753 = vsel %vm751, %v747, 0
        %v756 = vsel %vm751, %v748, 0
        %v759 = vsel %vm751, %v749, 0
        %v762 = vsel %vm751, %v750, 0
        %764 = vmatprep.subr.mxu0 %v744
        %765 = vmatpush1.msra.mxu0 %v743
        %766 = vmatprep.subr.mxu0 %v746
        %767 = vmatpush1.msra.mxu0 %v745
        %768 = vmatprep.subr.mxu0 0.0
        %769 = vmatpush1.msra.mxu0 0.0
        %770 = vmatprep.subr.mxu0 0.0
        %771 = vmatpush1.msra.mxu0 0.0
        %772 = vmatprep.subr.mxu0 0.0
        %773 = vmatpush1.msra.mxu0 0.0
        %774 = vmatprep.subr.mxu0 0.0
        %775 = vmatpush1.msra.mxu0 0.0
        %776 = vmatprep.subr.mxu0 0.0
        %777 = vmatpush1.msra.mxu0 0.0
        %778 = vmatprep.subr.mxu0 0.0
        %779 = vmatpush1.msra.mxu0 0.0
        %780 = vmatprep.subr.mxu0 0.0
        %781 = vmatpush1.msra.mxu0 0.0
        %782 = vmatprep.subr.mxu0 0.0
        %783 = vmatpush1.msra.mxu0 0.0
        %784 = vmatprep.subr.mxu0 0.0
        %785 = vmatpush1.msra.mxu0 0.0
        %786 = vmatprep.subr.mxu0 0.0
        %787 = vmatpush1.msra.mxu0 0.0
        %788 = vmatprep.subr.mxu0 0.0
        %789 = vmatpush1.msra.mxu0 0.0
        %790 = vmatprep.subr.mxu0 0.0
        %791 = vmatpush1.msra.mxu0 0.0
        %792 = vmatprep.subr.mxu0 0.0
        %793 = vmatpush1.msra.mxu0 0.0
        %794 = vmatprep.subr.mxu0 0.0
        %795 = vmatpush1.msra.mxu0 0.0
        %796 = vmatprep.subr.mxu0 0.0
        %797 = vmatpush1.msra.mxu0 0.0
        %798 = vmatprep.subr.mxu0 0.0
        %799 = vmatpush1.msra.mxu0 0.0
        %800 = vmatprep.subr.mxu0 0.0
        %801 = vmatpush1.msra.mxu0 0.0
        %802 = vmatprep.subr.mxu0 0.0
        %803 = vmatpush1.msra.mxu0 0.0
        %804 = vmatprep.subr.mxu0 0.0
        %805 = vmatpush1.msra.mxu0 0.0
        %806 = vmatprep.subr.mxu0 0.0
        %807 = vmatpush1.msra.mxu0 0.0
        %808 = vmatprep.subr.mxu0 0.0
        %809 = vmatpush1.msra.mxu0 0.0
        %810 = vmatprep.subr.mxu0 0.0
        %811 = vmatpush1.msra.mxu0 0.0
        %812 = vmatprep.subr.mxu0 0.0
        %813 = vmatpush1.msra.mxu0 0.0
        %814 = vmatprep.subr.mxu0 0.0
        %815 = vmatpush1.msra.mxu0 0.0
        %816 = vmatprep.subr.mxu0 0.0
        %817 = vmatpush1.msra.mxu0 0.0
        %818 = vmatprep.subr.mxu0 0.0
        %819 = vmatpush1.msra.mxu0 0.0
        %820 = vmatprep.subr.mxu0 0.0
        %821 = vmatpush1.msra.mxu0 0.0
        %822 = vmatprep.subr.mxu0 0.0
        %823 = vmatpush1.msra.mxu0 0.0
        %824 = vmatprep.subr.mxu0 0.0
        %825 = vmatpush1.msra.mxu0 0.0
        %826 = vmatprep.subr.mxu0 0.0
        %827 = vmatpush1.msra.mxu0 0.0
        %828 = vmatprep.mubr.f32.mxu0 0.0
        %829 = vmatmul.mubr.f32.gmra.mrb[0].mxu0 %v753
        %v830 = vpop.f32.mrb[0].mxu0
        %v831 = vadd.f32 0.0, %v830
        %v832 = vpop.f32.mrb[0].mxu0
        %v833 = vadd.f32 0.0, %v832
        %834 = vmatprep.mubr.f32.mxu0 0.0
        %835 = vmatmul.mubr.f32.gmra.mrb[0].mxu0 %v756
        %v836 = vpop.f32.mrb[0].mxu0
        %v837 = vadd.f32 0.0, %v836
        %v838 = vpop.f32.mrb[0].mxu0
        %v839 = vadd.f32 0.0, %v838
        %840 = vmatprep.mubr.f32.mxu0 0.0
        %841 = vmatmul.mubr.f32.gmra.mrb[0].mxu0 %v759
        %v842 = vpop.f32.mrb[0].mxu0
        %v843 = vadd.f32 0.0, %v842
        %v844 = vpop.f32.mrb[0].mxu0
        %v845 = vadd.f32 0.0, %v844
        %846 = vmatprep.mubr.f32.mxu0 0.0
        %847 = vmatmul.mubr.f32.gmra.mrb[0].mxu0 %v762
        %v848 = vpop.f32.mrb[0].mxu0
        %v849 = vadd.f32 0.0, %v848
        %v850 = vpop.f32.mrb[0].mxu0
        %v851 = vadd.f32 0.0, %v850
        %852 = vdwg.mxu0
        %v853 = vld [vmem:[%s2] sm:$0xff]
        %v854 = vld [vmem:[%s2 + $0x8] sm:$0xff]
        %v855 = vld [vmem:[%s2 + $0x10] sm:$0xff]
        %v856 = vld [vmem:[%s2 + $0x18] sm:$0xff]
        %v857 = vld [vmem:[%s2 + $0x20] sm:$0xff]
        %v858 = vld [vmem:[%s2 + $0x28] sm:$0xff]
        %v859 = vld [vmem:[%s2 + $0x30] sm:$0xff]
        %v860 = vld [vmem:[%s2 + $0x38] sm:$0xff]
        %v861 = vld [vmem:[%s2 + $0x40] sm:$0xff]
        %v862 = vld [vmem:[%s2 + $0x48] sm:$0xff]
        %v863 = vld [vmem:[%s2 + $0x50] sm:$0xff]
        %v864 = vld [vmem:[%s2 + $0x58] sm:$0xff]
        %v865 = vld [vmem:[%s2 + $0x60] sm:$0xff]
        %v866 = vld [vmem:[%s2 + $0x68] sm:$0xff]
        %v867 = vld [vmem:[%s2 + $0x70] sm:$0xff]
        %v868 = vld [vmem:[%s2 + $0x78] sm:$0xff]
        %v869 = vld [vmem:[%s2 + $0x80] sm:$0xff]
        %v870 = vld [vmem:[%s2 + $0x88] sm:$0xff]
        %v871 = vld [vmem:[%s2 + $0x90] sm:$0xff]
        %v872 = vld [vmem:[%s2 + $0x98] sm:$0xff]
        %v873 = vld [vmem:[%s2 + $0xa0] sm:$0xff]
        %v874 = vld [vmem:[%s2 + $0xa8] sm:$0xff]
        %v875 = vld [vmem:[%s2 + $0xb0] sm:$0xff]
        %v876 = vld [vmem:[%s2 + $0xb8] sm:$0xff]
        %v877 = vld [vmem:[%s2 + $0xc0] sm:$0xff]
        %v878 = vld [vmem:[%s2 + $0xc8] sm:$0xff]
        %v879 = vld [vmem:[%s2 + $0xd0] sm:$0xff]
        %v880 = vld [vmem:[%s2 + $0xd8] sm:$0xff]
        %v881 = vld [vmem:[%s2 + $0xe0] sm:$0xff]
        %v882 = vld [vmem:[%s2 + $0xe8] sm:$0xff]
        %v883 = vld [vmem:[%s2 + $0xf0] sm:$0xff]
        %v884 = vld [vmem:[%s2 + $0xf8] sm:$0xff]
        %v885 = vld [vmem:[%s2 + $0x100] sm:$0xff]
        %v886 = vld [vmem:[%s2 + $0x108] sm:$0xff]
        %v887 = vld [vmem:[%s2 + $0x110] sm:$0xff]
        %v888 = vld [vmem:[%s2 + $0x118] sm:$0xff]
        %v889 = vld [vmem:[%s2 + $0x120] sm:$0xff]
        %v890 = vld [vmem:[%s2 + $0x128] sm:$0xff]
        %v891 = vld [vmem:[%s2 + $0x130] sm:$0xff]
        %v892 = vld [vmem:[%s2 + $0x138] sm:$0xff]
        %v893 = vld [vmem:[%s2 + $0x140] sm:$0xff]
        %v894 = vld [vmem:[%s2 + $0x148] sm:$0xff]
        %v895 = vld [vmem:[%s2 + $0x150] sm:$0xff]
        %v896 = vld [vmem:[%s2 + $0x158] sm:$0xff]
        %v897 = vld [vmem:[%s2 + $0x160] sm:$0xff]
        %v898 = vld [vmem:[%s2 + $0x168] sm:$0xff]
        %v899 = vld [vmem:[%s2 + $0x170] sm:$0xff]
        %v900 = vld [vmem:[%s2 + $0x178] sm:$0xff]
        %v901 = vld [vmem:[%s2 + $0x180] sm:$0xff]
        %v902 = vld [vmem:[%s2 + $0x188] sm:$0xff]
        %v903 = vld [vmem:[%s2 + $0x190] sm:$0xff]
        %v904 = vld [vmem:[%s2 + $0x198] sm:$0xff]
        %v905 = vld [vmem:[%s2 + $0x1a0] sm:$0xff]
        %v906 = vld [vmem:[%s2 + $0x1a8] sm:$0xff]
        %v907 = vld [vmem:[%s2 + $0x1b0] sm:$0xff]
        %v908 = vld [vmem:[%s2 + $0x1b8] sm:$0xff]
        %v909 = vld [vmem:[%s2 + $0x1c0] sm:$0xff]
        %v910 = vld [vmem:[%s2 + $0x1c8] sm:$0xff]
        %v911 = vld [vmem:[%s2 + $0x1d0] sm:$0xff]
        %v912 = vld [vmem:[%s2 + $0x1d8] sm:$0xff]
        %v913 = vld [vmem:[%s2 + $0x1e0] sm:$0xff]
        %v914 = vld [vmem:[%s2 + $0x1e8] sm:$0xff]
        %v915 = vld [vmem:[%s2 + $0x1f0] sm:$0xff]
        %v916 = vld [vmem:[%s2 + $0x1f8] sm:$0xff]
        %v917 = vld [vmem:[%s2 + $0x200] sm:$0xff]
        %v918 = vld [vmem:[%s2 + $0x208] sm:$0xff]
        %v919 = vld [vmem:[%s2 + $0x210] sm:$0xff]
        %v920 = vld [vmem:[%s2 + $0x218] sm:$0xff]
        %v921 = vld [vmem:[%s2 + $0x220] sm:$0xff]
        %v922 = vld [vmem:[%s2 + $0x228] sm:$0xff]
        %v923 = vld [vmem:[%s2 + $0x230] sm:$0xff]
        %v924 = vld [vmem:[%s2 + $0x238] sm:$0xff]
        %v925 = vld [vmem:[%s2 + $0x240] sm:$0xff]
        %v926 = vld [vmem:[%s2 + $0x248] sm:$0xff]
        %v927 = vld [vmem:[%s2 + $0x250] sm:$0xff]
        %v928 = vld [vmem:[%s2 + $0x258] sm:$0xff]
        %v929 = vld [vmem:[%s2 + $0x260] sm:$0xff]
        %v930 = vld [vmem:[%s2 + $0x268] sm:$0xff]
        %v931 = vld [vmem:[%s2 + $0x270] sm:$0xff]
        %v932 = vld [vmem:[%s2 + $0x278] sm:$0xff]
        %v933 = vld [vmem:[%s2 + $0x280] sm:$0xff]
        %v934 = vld [vmem:[%s2 + $0x288] sm:$0xff]
        %v935 = vld [vmem:[%s2 + $0x290] sm:$0xff]
        %v936 = vld [vmem:[%s2 + $0x298] sm:$0xff]
        %v937 = vld [vmem:[%s2 + $0x2a0] sm:$0xff]
        %v938 = vld [vmem:[%s2 + $0x2a8] sm:$0xff]
        %v939 = vld [vmem:[%s2 + $0x2b0] sm:$0xff]
        %v940 = vld [vmem:[%s2 + $0x2b8] sm:$0xff]
        %v941 = vld [vmem:[%s2 + $0x2c0] sm:$0xff]
        %v942 = vld [vmem:[%s2 + $0x2c8] sm:$0xff]
        %v943 = vld [vmem:[%s2 + $0x2d0] sm:$0xff]
        %v944 = vld [vmem:[%s2 + $0x2d8] sm:$0xff]
        %v945 = vld [vmem:[%s2 + $0x2e0] sm:$0xff]
        %v946 = vld [vmem:[%s2 + $0x2e8] sm:$0xff]
        %v947 = vld [vmem:[%s2 + $0x2f0] sm:$0xff]
        %v948 = vld [vmem:[%s2 + $0x2f8] sm:$0xff]
        %v949 = vld [vmem:[%s2 + $0x300] sm:$0xff]
        %v950 = vld [vmem:[%s2 + $0x308] sm:$0xff]
        %v951 = vld [vmem:[%s2 + $0x310] sm:$0xff]
        %v952 = vld [vmem:[%s2 + $0x318] sm:$0xff]
        %v953 = vld [vmem:[%s2 + $0x320] sm:$0xff]
        %v954 = vld [vmem:[%s2 + $0x328] sm:$0xff]
        %v955 = vld [vmem:[%s2 + $0x330] sm:$0xff]
        %v956 = vld [vmem:[%s2 + $0x338] sm:$0xff]
        %v957 = vld [vmem:[%s2 + $0x340] sm:$0xff]
        %v958 = vld [vmem:[%s2 + $0x348] sm:$0xff]
        %v959 = vld [vmem:[%s2 + $0x350] sm:$0xff]
        %v960 = vld [vmem:[%s2 + $0x358] sm:$0xff]
        %v961 = vld [vmem:[%s2 + $0x360] sm:$0xff]
        %v962 = vld [vmem:[%s2 + $0x368] sm:$0xff]
        %v963 = vld [vmem:[%s2 + $0x370] sm:$0xff]
        %v964 = vld [vmem:[%s2 + $0x378] sm:$0xff]
        %v965 = vld [vmem:[%s2 + $0x380] sm:$0xff]
        %v966 = vld [vmem:[%s2 + $0x388] sm:$0xff]
        %v967 = vld [vmem:[%s2 + $0x390] sm:$0xff]
        %v968 = vld [vmem:[%s2 + $0x398] sm:$0xff]
        %v969 = vld [vmem:[%s2 + $0x3a0] sm:$0xff]
        %v970 = vld [vmem:[%s2 + $0x3a8] sm:$0xff]
        %v971 = vld [vmem:[%s2 + $0x3b0] sm:$0xff]
        %v972 = vld [vmem:[%s2 + $0x3b8] sm:$0xff]
        %v973 = vld [vmem:[%s2 + $0x3c0] sm:$0xff]
        %v974 = vld [vmem:[%s2 + $0x3c8] sm:$0xff]
        %v975 = vld [vmem:[%s2 + $0x3d0] sm:$0xff]
        %v976 = vld [vmem:[%s2 + $0x3d8] sm:$0xff]
        %v977 = vld [vmem:[%s2 + $0x3e0] sm:$0xff]
        %v978 = vld [vmem:[%s2 + $0x3e8] sm:$0xff]
        %v979 = vld [vmem:[%s2 + $0x3f0] sm:$0xff]
        %v980 = vld [vmem:[%s2 + $0x3f8] sm:$0xff]
        %v981 = vld [vmem:[%s2 + $0x400] sm:$0xff]
        %v982 = vld [vmem:[%s2 + $0x408] sm:$0xff]
        %v983 = vld [vmem:[%s2 + $0x410] sm:$0xff]
        %v984 = vld [vmem:[%s2 + $0x418] sm:$0xff]
        %v985 = vld [vmem:[%s2 + $0x420] sm:$0xff]
        %v986 = vld [vmem:[%s2 + $0x428] sm:$0xff]
        %v987 = vld [vmem:[%s2 + $0x430] sm:$0xff]
        %v988 = vld [vmem:[%s2 + $0x438] sm:$0xff]
        %v989 = vld [vmem:[%s2 + $0x440] sm:$0xff]
        %v990 = vld [vmem:[%s2 + $0x448] sm:$0xff]
        %v991 = vld [vmem:[%s2 + $0x450] sm:$0xff]
        %v992 = vld [vmem:[%s2 + $0x458] sm:$0xff]
        %v993 = vld [vmem:[%s2 + $0x460] sm:$0xff]
        %v994 = vld [vmem:[%s2 + $0x468] sm:$0xff]
        %v995 = vld [vmem:[%s2 + $0x470] sm:$0xff]
        %v996 = vld [vmem:[%s2 + $0x478] sm:$0xff]
        %v997 = vld [vmem:[%s2 + $0x480] sm:$0xff]
        %v998 = vld [vmem:[%s2 + $0x488] sm:$0xff]
        %v999 = vld [vmem:[%s2 + $0x490] sm:$0xff]
        %v1000 = vld [vmem:[%s2 + $0x498] sm:$0xff]
        %v1001 = vld [vmem:[%s2 + $0x4a0] sm:$0xff]
        %v1002 = vld [vmem:[%s2 + $0x4a8] sm:$0xff]
        %v1003 = vld [vmem:[%s2 + $0x4b0] sm:$0xff]
        %v1004 = vld [vmem:[%s2 + $0x4b8] sm:$0xff]
        %v1005 = vld [vmem:[%s2 + $0x4c0] sm:$0xff]
        %v1006 = vld [vmem:[%s2 + $0x4c8] sm:$0xff]
        %v1007 = vld [vmem:[%s2 + $0x4d0] sm:$0xff]
        %v1008 = vld [vmem:[%s2 + $0x4d8] sm:$0xff]
        %v1009 = vld [vmem:[%s2 + $0x4e0] sm:$0xff]
        %v1010 = vld [vmem:[%s2 + $0x4e8] sm:$0xff]
        %v1011 = vld [vmem:[%s2 + $0x4f0] sm:$0xff]
        %v1012 = vld [vmem:[%s2 + $0x4f8] sm:$0xff]
        %v1013 = vld [vmem:[%s2 + $0x500] sm:$0xff]
        %v1014 = vld [vmem:[%s2 + $0x508] sm:$0xff]
        %v1015 = vld [vmem:[%s2 + $0x510] sm:$0xff]
        %v1016 = vld [vmem:[%s2 + $0x518] sm:$0xff]
        %v1017 = vld [vmem:[%s2 + $0x520] sm:$0xff]
        %v1018 = vld [vmem:[%s2 + $0x528] sm:$0xff]
        %v1019 = vld [vmem:[%s2 + $0x530] sm:$0xff]
        %v1020 = vld [vmem:[%s2 + $0x538] sm:$0xff]
        %v1021 = vld [vmem:[%s2 + $0x540] sm:$0xff]
        %v1022 = vld [vmem:[%s2 + $0x548] sm:$0xff]
        %v1023 = vld [vmem:[%s2 + $0x550] sm:$0xff]
        %v1024 = vld [vmem:[%s2 + $0x558] sm:$0xff]
        %v1025 = vld [vmem:[%s2 + $0x560] sm:$0xff]
        %v1026 = vld [vmem:[%s2 + $0x568] sm:$0xff]
        %v1027 = vld [vmem:[%s2 + $0x570] sm:$0xff]
        %v1028 = vld [vmem:[%s2 + $0x578] sm:$0xff]
        %v1029 = vld [vmem:[%s2 + $0x580] sm:$0xff]
        %v1030 = vld [vmem:[%s2 + $0x588] sm:$0xff]
        %v1031 = vld [vmem:[%s2 + $0x590] sm:$0xff]
        %v1032 = vld [vmem:[%s2 + $0x598] sm:$0xff]
        %v1033 = vld [vmem:[%s2 + $0x5a0] sm:$0xff]
        %v1034 = vld [vmem:[%s2 + $0x5a8] sm:$0xff]
        %v1035 = vld [vmem:[%s2 + $0x5b0] sm:$0xff]
        %v1036 = vld [vmem:[%s2 + $0x5b8] sm:$0xff]
        %v1037 = vld [vmem:[%s2 + $0x5c0] sm:$0xff]
        %v1038 = vld [vmem:[%s2 + $0x5c8] sm:$0xff]
        %v1039 = vld [vmem:[%s2 + $0x5d0] sm:$0xff]
        %v1040 = vld [vmem:[%s2 + $0x5d8] sm:$0xff]
        %v1041 = vld [vmem:[%s2 + $0x5e0] sm:$0xff]
        %v1042 = vld [vmem:[%s2 + $0x5e8] sm:$0xff]
        %v1043 = vld [vmem:[%s2 + $0x5f0] sm:$0xff]
        %v1044 = vld [vmem:[%s2 + $0x5f8] sm:$0xff]
        %1045 = vmatprep.subr.mxu0 %v854
        %1046 = vmatpush1.msra.mxu0 %v853
        %1047 = vmatprep.subr.mxu0 %v856
        %1048 = vmatpush1.msra.mxu0 %v855
        %1049 = vmatprep.subr.mxu0 %v858
        %1050 = vmatpush1.msra.mxu0 %v857
        %1051 = vmatprep.subr.mxu0 %v860
        %1052 = vmatpush1.msra.mxu0 %v859
        %1053 = vmatprep.subr.mxu0 %v862
        %1054 = vmatpush1.msra.mxu0 %v861
        %1055 = vmatprep.subr.mxu0 %v864
        %1056 = vmatpush1.msra.mxu0 %v863
        %1057 = vmatprep.subr.mxu0 %v866
        %1058 = vmatpush1.msra.mxu0 %v865
        %1059 = vmatprep.subr.mxu0 %v868
        %1060 = vmatpush1.msra.mxu0 %v867
        %1061 = vmatprep.subr.mxu0 %v870
        %1062 = vmatpush1.msra.mxu0 %v869
        %1063 = vmatprep.subr.mxu0 %v872
        %1064 = vmatpush1.msra.mxu0 %v871
        %1065 = vmatprep.subr.mxu0 %v874
        %1066 = vmatpush1.msra.mxu0 %v873
        %1067 = vmatprep.subr.mxu0 %v876
        %1068 = vmatpush1.msra.mxu0 %v875
        %1069 = vmatprep.subr.mxu0 %v878
        %1070 = vmatpush1.msra.mxu0 %v877
        %1071 = vmatprep.subr.mxu0 %v880
        %1072 = vmatpush1.msra.mxu0 %v879
        %1073 = vmatprep.subr.mxu0 %v882
        %1074 = vmatpush1.msra.mxu0 %v881
        %1075 = vmatprep.subr.mxu0 %v884
        %1076 = vmatpush1.msra.mxu0 %v883
        %1077 = vmatprep.subr.mxu0 %v886
        %1078 = vmatpush1.msra.mxu0 %v885
        %1079 = vmatprep.subr.mxu0 %v888
        %1080 = vmatpush1.msra.mxu0 %v887
        %1081 = vmatprep.subr.mxu0 %v890
        %1082 = vmatpush1.msra.mxu0 %v889
        %1083 = vmatprep.subr.mxu0 %v892
        %1084 = vmatpush1.msra.mxu0 %v891
        %1085 = vmatprep.subr.mxu0 %v894
        %1086 = vmatpush1.msra.mxu0 %v893
        %1087 = vmatprep.subr.mxu0 %v896
        %1088 = vmatpush1.msra.mxu0 %v895
        %1089 = vmatprep.subr.mxu0 %v898
        %1090 = vmatpush1.msra.mxu0 %v897
        %1091 = vmatprep.subr.mxu0 %v900
        %1092 = vmatpush1.msra.mxu0 %v899
        %1093 = vmatprep.subr.mxu0 %v902
        %1094 = vmatpush1.msra.mxu0 %v901
        %1095 = vmatprep.subr.mxu0 %v904
        %1096 = vmatpush1.msra.mxu0 %v903
        %1097 = vmatprep.subr.mxu0 %v906
        %1098 = vmatpush1.msra.mxu0 %v905
        %1099 = vmatprep.subr.mxu0 %v908
        %1100 = vmatpush1.msra.mxu0 %v907
        %1101 = vmatprep.subr.mxu0 %v910
        %1102 = vmatpush1.msra.mxu0 %v909
        %1103 = vmatprep.subr.mxu0 %v912
        %1104 = vmatpush1.msra.mxu0 %v911
        %1105 = vmatprep.subr.mxu0 %v914
        %1106 = vmatpush1.msra.mxu0 %v913
        %1107 = vmatprep.subr.mxu0 %v916
        %1108 = vmatpush1.msra.mxu0 %v915
        %1109 = vmatprep.mubr.f32.mxu0 %v833
        %1110 = vmatmul.mubr.f32.gmra.mrb[0].mxu0 %v831
        %v1111 = vpop.f32.mrb[0].mxu0
        %v1112 = vadd.f32 0.0, %v1111
        %v1113 = vpop.f32.mrb[0].mxu0
        %v1114 = vadd.f32 0.0, %v1113
        %1115 = vmatprep.mubr.f32.mxu0 %v839
        %1116 = vmatmul.mubr.f32.gmra.mrb[0].mxu0 %v837
        %v1117 = vpop.f32.mrb[0].mxu0
        %v1118 = vadd.f32 0.0, %v1117
        %v1119 = vpop.f32.mrb[0].mxu0
        %v1120 = vadd.f32 0.0, %v1119
        %1121 = vdwg.mxu0
        %1122 = vmatprep.subr.mxu0 %v918
        %1123 = vmatpush1.msra.mxu0 %v917
        %1124 = vmatprep.subr.mxu0 %v920
        %1125 = vmatpush1.msra.mxu0 %v919
        %1126 = vmatprep.subr.mxu0 %v922
        %1127 = vmatpush1.msra.mxu0 %v921
        %1128 = vmatprep.subr.mxu0 %v924
        %1129 = vmatpush1.msra.mxu0 %v923
        %1130 = vmatprep.subr.mxu0 %v926
        %1131 = vmatpush1.msra.mxu0 %v925
        %1132 = vmatprep.subr.mxu0 %v928
        %1133 = vmatpush1.msra.mxu0 %v927
        %1134 = vmatprep.subr.mxu0 %v930
        %1135 = vmatpush1.msra.mxu0 %v929
        %1136 = vmatprep.subr.mxu0 %v932
        %1137 = vmatpush1.msra.mxu0 %v931
        %1138 = vmatprep.subr.mxu0 %v934
        %1139 = vmatpush1.msra.mxu0 %v933
        %1140 = vmatprep.subr.mxu0 %v936
        %1141 = vmatpush1.msra.mxu0 %v935
        %1142 = vmatprep.subr.mxu0 %v938
        %1143 = vmatpush1.msra.mxu0 %v937
        %1144 = vmatprep.subr.mxu0 %v940
        %1145 = vmatpush1.msra.mxu0 %v939
        %1146 = vmatprep.subr.mxu0 %v942
        %1147 = vmatpush1.msra.mxu0 %v941
        %1148 = vmatprep.subr.mxu0 %v944
        %1149 = vmatpush1.msra.mxu0 %v943
        %1150 = vmatprep.subr.mxu0 %v946
        %1151 = vmatpush1.msra.mxu0 %v945
        %1152 = vmatprep.subr.mxu0 %v948
        %1153 = vmatpush1.msra.mxu0 %v947
        %1154 = vmatprep.subr.mxu0 %v950
        %1155 = vmatpush1.msra.mxu0 %v949
        %1156 = vmatprep.subr.mxu0 %v952
        %1157 = vmatpush1.msra.mxu0 %v951
        %1158 = vmatprep.subr.mxu0 %v954
        %1159 = vmatpush1.msra.mxu0 %v953
        %1160 = vmatprep.subr.mxu0 %v956
        %1161 = vmatpush1.msra.mxu0 %v955
        %1162 = vmatprep.subr.mxu0 %v958
        %1163 = vmatpush1.msra.mxu0 %v957
        %1164 = vmatprep.subr.mxu0 %v960
        %1165 = vmatpush1.msra.mxu0 %v959
        %1166 = vmatprep.subr.mxu0 %v962
        %1167 = vmatpush1.msra.mxu0 %v961
        %1168 = vmatprep.subr.mxu0 %v964
        %1169 = vmatpush1.msra.mxu0 %v963
        %1170 = vmatprep.subr.mxu0 %v966
        %1171 = vmatpush1.msra.mxu0 %v965
        %1172 = vmatprep.subr.mxu0 %v968
        %1173 = vmatpush1.msra.mxu0 %v967
        %1174 = vmatprep.subr.mxu0 %v970
        %1175 = vmatpush1.msra.mxu0 %v969
        %1176 = vmatprep.subr.mxu0 %v972
        %1177 = vmatpush1.msra.mxu0 %v971
        %1178 = vmatprep.subr.mxu0 %v974
        %1179 = vmatpush1.msra.mxu0 %v973
        %1180 = vmatprep.subr.mxu0 %v976
        %1181 = vmatpush1.msra.mxu0 %v975
        %1182 = vmatprep.subr.mxu0 %v978
        %1183 = vmatpush1.msra.mxu0 %v977
        %1184 = vmatprep.subr.mxu0 %v980
        %1185 = vmatpush1.msra.mxu0 %v979
        %1186 = vmatprep.mubr.f32.mxu0 %v744
        %1187 = vmatmul.mubr.f32.gmra.mrb[0].mxu0 %v743
        %v1188 = vpop.f32.mrb[0].mxu0
        %v1189 = vadd.f32 %v1112, %v1188
        %v1190 = vpop.f32.mrb[0].mxu0
        %v1191 = vadd.f32 %v1114, %v1190
        %1192 = vmatprep.mubr.f32.mxu0 %v746
        %1193 = vmatmul.mubr.f32.gmra.mrb[0].mxu0 %v745
        %v1194 = vpop.f32.mrb[0].mxu0
        %v1195 = vadd.f32 %v1118, %v1194
        %v1196 = vpop.f32.mrb[0].mxu0
        %v1197 = vadd.f32 %v1120, %v1196
        %1198 = vdwg.mxu0
        %1199 = vmatprep.subr.mxu0 %v982
        %1200 = vmatpush1.msra.mxu0 %v981
        %1201 = vmatprep.subr.mxu0 %v984
        %1202 = vmatpush1.msra.mxu0 %v983
        %1203 = vmatprep.subr.mxu0 %v986
        %1204 = vmatpush1.msra.mxu0 %v985
        %1205 = vmatprep.subr.mxu0 %v988
        %1206 = vmatpush1.msra.mxu0 %v987
        %1207 = vmatprep.subr.mxu0 %v990
        %1208 = vmatpush1.msra.mxu0 %v989
        %1209 = vmatprep.subr.mxu0 %v992
        %1210 = vmatpush1.msra.mxu0 %v991
        %1211 = vmatprep.subr.mxu0 %v994
        %1212 = vmatpush1.msra.mxu0 %v993
        %1213 = vmatprep.subr.mxu0 %v996
        %1214 = vmatpush1.msra.mxu0 %v995
        %1215 = vmatprep.subr.mxu0 %v998
        %1216 = vmatpush1.msra.mxu0 %v997
        %1217 = vmatprep.subr.mxu0 %v1000
        %1218 = vmatpush1.msra.mxu0 %v999
        %1219 = vmatprep.subr.mxu0 %v1002
        %1220 = vmatpush1.msra.mxu0 %v1001
        %1221 = vmatprep.subr.mxu0 %v1004
        %1222 = vmatpush1.msra.mxu0 %v1003
        %1223 = vmatprep.subr.mxu0 %v1006
        %1224 = vmatpush1.msra.mxu0 %v1005
        %1225 = vmatprep.subr.mxu0 %v1008
        %1226 = vmatpush1.msra.mxu0 %v1007
        %1227 = vmatprep.subr.mxu0 %v1010
        %1228 = vmatpush1.msra.mxu0 %v1009
        %1229 = vmatprep.subr.mxu0 %v1012
        %1230 = vmatpush1.msra.mxu0 %v1011
        %1231 = vmatprep.subr.mxu0 %v1014
        %1232 = vmatpush1.msra.mxu0 %v1013
        %1233 = vmatprep.subr.mxu0 %v1016
        %1234 = vmatpush1.msra.mxu0 %v1015
        %1235 = vmatprep.subr.mxu0 %v1018
        %1236 = vmatpush1.msra.mxu0 %v1017
        %1237 = vmatprep.subr.mxu0 %v1020
        %1238 = vmatpush1.msra.mxu0 %v1019
        %1239 = vmatprep.subr.mxu0 %v1022
        %1240 = vmatpush1.msra.mxu0 %v1021
        %1241 = vmatprep.subr.mxu0 %v1024
        %1242 = vmatpush1.msra.mxu0 %v1023
        %1243 = vmatprep.subr.mxu0 %v1026
        %1244 = vmatpush1.msra.mxu0 %v1025
        %1245 = vmatprep.subr.mxu0 %v1028
        %1246 = vmatpush1.msra.mxu0 %v1027
        %1247 = vmatprep.subr.mxu0 %v1030
        %1248 = vmatpush1.msra.mxu0 %v1029
        %1249 = vmatprep.subr.mxu0 %v1032
        %1250 = vmatpush1.msra.mxu0 %v1031
        %1251 = vmatprep.subr.mxu0 %v1034
        %1252 = vmatpush1.msra.mxu0 %v1033
        %1253 = vmatprep.subr.mxu0 %v1036
        %1254 = vmatpush1.msra.mxu0 %v1035
        %1255 = vmatprep.subr.mxu0 %v1038
        %1256 = vmatpush1.msra.mxu0 %v1037
        %1257 = vmatprep.subr.mxu0 %v1040
        %1258 = vmatpush1.msra.mxu0 %v1039
        %1259 = vmatprep.subr.mxu0 %v1042
        %1260 = vmatpush1.msra.mxu0 %v1041
        %1261 = vmatprep.subr.mxu0 %v1044
        %1262 = vmatpush1.msra.mxu0 %v1043
        %1263 = vmatprep.mubr.f32.mxu0 %v845
        %1264 = vmatmul.mubr.f32.gmra.mrb[0].mxu0 %v843
        %v1265 = vpop.f32.mrb[0].mxu0
        %v1266 = vadd.f32 %v1189, %v1265
        %v1267 = vpop.f32.mrb[0].mxu0
        %v1268 = vadd.f32 %v1191, %v1267
        %1269 = vmatprep.mubr.f32.mxu0 %v851
        %1270 = vmatmul.mubr.f32.gmra.mrb[0].mxu0 %v849
        %v1271 = vpop.f32.mrb[0].mxu0
        %v1272 = vadd.f32 %v1195, %v1271
        %v1273 = vpop.f32.mrb[0].mxu0
        %v1274 = vadd.f32 %v1197, %v1273
        %1275 = vdwg.mxu0
        %v1276 = vadd.f32 %v743, %v1266
        %v1277 = vadd.f32 %v744, %v1268
        %v1278 = vadd.f32 %v745, %v1272
        %v1279 = vadd.f32 %v746, %v1274
        %v1280 = vld [vmem:[%s3] sm:$0x3]
        %v1282 = vlaneseq
        %v1283 = vshrl.u32 %v1282, 7
        %v1284 = vsub.s32 0, %v1283
        %v1285 = vrot.slane %v1280, %v1284
        %v1286 = vlaneseq
        %v1287 = vshrl.u32 %v1286, 7
        %v1288 = vsub.s32 1, %v1287
        %v1289 = vrot.slane %v1280, %v1288
        %v1292 = vadd.f32 %v1276, %v1285
        %v1293 = vadd.f32 %v1277, %v1289
        %v1294 = vadd.f32 %v1278, %v1285
        %v1295 = vadd.f32 %v1279, %v1289
        %v1296 = vmax.f32 %v1292, 0.0
        %v1297 = vmax.f32 %v1293, 0.0
        %v1298 = vmax.f32 %v1294, 0.0
        %v1299 = vmax.f32 %v1295, 0.0
        %v1300 = vld [vmem:[%s4] sm:$0xff]
        %v1301 = vld [vmem:[%s4 + $0x8] sm:$0xff]
        %v1302 = vld [vmem:[%s4 + $0x10] sm:$0xff]
        %v1303 = vld [vmem:[%s4 + $0x18] sm:$0xff]
        %v1304 = vld [vmem:[%s4 + $0x20] sm:$0xff]
        %v1305 = vld [vmem:[%s4 + $0x28] sm:$0xff]
        %v1306 = vld [vmem:[%s4 + $0x30] sm:$0xff]
        %v1307 = vld [vmem:[%s4 + $0x38] sm:$0xff]
        %v1308 = vld [vmem:[%s4 + $0x40] sm:$0xff]
        %v1309 = vld [vmem:[%s4 + $0x48] sm:$0xff]
        %v1310 = vld [vmem:[%s4 + $0x50] sm:$0xff]
        %v1311 = vld [vmem:[%s4 + $0x58] sm:$0xff]
        %v1312 = vld [vmem:[%s4 + $0x60] sm:$0xff]
        %v1313 = vld [vmem:[%s4 + $0x68] sm:$0xff]
        %v1314 = vld [vmem:[%s4 + $0x70] sm:$0xff]
        %v1315 = vld [vmem:[%s4 + $0x78] sm:$0xff]
        %v1316 = vld [vmem:[%s4 + $0x80] sm:$0xff]
        %v1317 = vld [vmem:[%s4 + $0x88] sm:$0xff]
        %v1318 = vld [vmem:[%s4 + $0x90] sm:$0xff]
        %v1319 = vld [vmem:[%s4 + $0x98] sm:$0xff]
        %v1320 = vld [vmem:[%s4 + $0xa0] sm:$0xff]
        %v1321 = vld [vmem:[%s4 + $0xa8] sm:$0xff]
        %v1322 = vld [vmem:[%s4 + $0xb0] sm:$0xff]
        %v1323 = vld [vmem:[%s4 + $0xb8] sm:$0xff]
        %v1324 = vld [vmem:[%s4 + $0xc0] sm:$0xff]
        %v1325 = vld [vmem:[%s4 + $0xc8] sm:$0xff]
        %v1326 = vld [vmem:[%s4 + $0xd0] sm:$0xff]
        %v1327 = vld [vmem:[%s4 + $0xd8] sm:$0xff]
        %v1328 = vld [vmem:[%s4 + $0xe0] sm:$0xff]
        %v1329 = vld [vmem:[%s4 + $0xe8] sm:$0xff]
        %v1330 = vld [vmem:[%s4 + $0xf0] sm:$0xff]
        %v1331 = vld [vmem:[%s4 + $0xf8] sm:$0xff]
        %v1332 = vld [vmem:[%s4 + $0x100] sm:$0xff]
        %v1333 = vld [vmem:[%s4 + $0x108] sm:$0xff]
        %v1334 = vld [vmem:[%s4 + $0x110] sm:$0xff]
        %v1335 = vld [vmem:[%s4 + $0x118] sm:$0xff]
        %v1336 = vld [vmem:[%s4 + $0x120] sm:$0xff]
        %v1337 = vld [vmem:[%s4 + $0x128] sm:$0xff]
        %v1338 = vld [vmem:[%s4 + $0x130] sm:$0xff]
        %v1339 = vld [vmem:[%s4 + $0x138] sm:$0xff]
        %v1340 = vld [vmem:[%s4 + $0x140] sm:$0xff]
        %v1341 = vld [vmem:[%s4 + $0x148] sm:$0xff]
        %v1342 = vld [vmem:[%s4 + $0x150] sm:$0xff]
        %v1343 = vld [vmem:[%s4 + $0x158] sm:$0xff]
        %v1344 = vld [vmem:[%s4 + $0x160] sm:$0xff]
        %v1345 = vld [vmem:[%s4 + $0x168] sm:$0xff]
        %v1346 = vld [vmem:[%s4 + $0x170] sm:$0xff]
        %v1347 = vld [vmem:[%s4 + $0x178] sm:$0xff]
        %v1348 = vld [vmem:[%s4 + $0x180] sm:$0xff]
        %v1349 = vld [vmem:[%s4 + $0x188] sm:$0xff]
        %v1350 = vld [vmem:[%s4 + $0x190] sm:$0xff]
        %v1351 = vld [vmem:[%s4 + $0x198] sm:$0xff]
        %v1352 = vld [vmem:[%s4 + $0x1a0] sm:$0xff]
        %v1353 = vld [vmem:[%s4 + $0x1a8] sm:$0xff]
        %v1354 = vld [vmem:[%s4 + $0x1b0] sm:$0xff]
        %v1355 = vld [vmem:[%s4 + $0x1b8] sm:$0xff]
        %v1356 = vld [vmem:[%s4 + $0x1c0] sm:$0xff]
        %v1357 = vld [vmem:[%s4 + $0x1c8] sm:$0xff]
        %v1358 = vld [vmem:[%s4 + $0x1d0] sm:$0xff]
        %v1359 = vld [vmem:[%s4 + $0x1d8] sm:$0xff]
        %v1360 = vld [vmem:[%s4 + $0x1e0] sm:$0xff]
        %v1361 = vld [vmem:[%s4 + $0x1e8] sm:$0xff]
        %v1362 = vld [vmem:[%s4 + $0x1f0] sm:$0xff]
        %v1363 = vld [vmem:[%s4 + $0x1f8] sm:$0xff]
        %v1364 = vld [vmem:[%s6] sm:$0x3]
        %v1366 = vlaneseq
        %v1367 = vshrl.u32 %v1366, 7
        %v1368 = vsub.s32 0, %v1367
        %v1369 = vrot.slane %v1364, %v1368
        %v1370 = vlaneseq
        %v1371 = vshrl.u32 %v1370, 7
        %v1372 = vsub.s32 1, %v1371
        %v1373 = vrot.slane %v1364, %v1372
        %1376 = vmatprep.subr.mxu0 %v1301
        %1377 = vmatpush1.msra.mxu0 %v1300
        %1378 = vmatprep.subr.mxu0 %v1303
        %1379 = vmatpush1.msra.mxu0 %v1302
        %1380 = vmatprep.subr.mxu0 %v1305
        %1381 = vmatpush1.msra.mxu0 %v1304
        %1382 = vmatprep.subr.mxu0 %v1307
        %1383 = vmatpush1.msra.mxu0 %v1306
        %1384 = vmatprep.subr.mxu0 %v1309
        %1385 = vmatpush1.msra.mxu0 %v1308
        %1386 = vmatprep.subr.mxu0 %v1311
        %1387 = vmatpush1.msra.mxu0 %v1310
        %1388 = vmatprep.subr.mxu0 %v1313
        %1389 = vmatpush1.msra.mxu0 %v1312
        %1390 = vmatprep.subr.mxu0 %v1315
        %1391 = vmatpush1.msra.mxu0 %v1314
        %1392 = vmatprep.subr.mxu0 %v1317
        %1393 = vmatpush1.msra.mxu0 %v1316
        %1394 = vmatprep.subr.mxu0 %v1319
        %1395 = vmatpush1.msra.mxu0 %v1318
        %1396 = vmatprep.subr.mxu0 %v1321
        %1397 = vmatpush1.msra.mxu0 %v1320
        %1398 = vmatprep.subr.mxu0 %v1323
        %1399 = vmatpush1.msra.mxu0 %v1322
        %1400 = vmatprep.subr.mxu0 %v1325
        %1401 = vmatpush1.msra.mxu0 %v1324
        %1402 = vmatprep.subr.mxu0 %v1327
        %1403 = vmatpush1.msra.mxu0 %v1326
        %1404 = vmatprep.subr.mxu0 %v1329
        %1405 = vmatpush1.msra.mxu0 %v1328
        %1406 = vmatprep.subr.mxu0 %v1331
        %1407 = vmatpush1.msra.mxu0 %v1330
        %1408 = vmatprep.subr.mxu0 %v1333
        %1409 = vmatpush1.msra.mxu0 %v1332
        %1410 = vmatprep.subr.mxu0 %v1335
        %1411 = vmatpush1.msra.mxu0 %v1334
        %1412 = vmatprep.subr.mxu0 %v1337
        %1413 = vmatpush1.msra.mxu0 %v1336
        %1414 = vmatprep.subr.mxu0 %v1339
        %1415 = vmatpush1.msra.mxu0 %v1338
        %1416 = vmatprep.subr.mxu0 %v1341
        %1417 = vmatpush1.msra.mxu0 %v1340
        %1418 = vmatprep.subr.mxu0 %v1343
        %1419 = vmatpush1.msra.mxu0 %v1342
        %1420 = vmatprep.subr.mxu0 %v1345
        %1421 = vmatpush1.msra.mxu0 %v1344
        %1422 = vmatprep.subr.mxu0 %v1347
        %1423 = vmatpush1.msra.mxu0 %v1346
        %1424 = vmatprep.subr.mxu0 %v1349
        %1425 = vmatpush1.msra.mxu0 %v1348
        %1426 = vmatprep.subr.mxu0 %v1351
        %1427 = vmatpush1.msra.mxu0 %v1350
        %1428 = vmatprep.subr.mxu0 %v1353
        %1429 = vmatpush1.msra.mxu0 %v1352
        %1430 = vmatprep.subr.mxu0 %v1355
        %1431 = vmatpush1.msra.mxu0 %v1354
        %1432 = vmatprep.subr.mxu0 %v1357
        %1433 = vmatpush1.msra.mxu0 %v1356
        %1434 = vmatprep.subr.mxu0 %v1359
        %1435 = vmatpush1.msra.mxu0 %v1358
        %1436 = vmatprep.subr.mxu0 %v1361
        %1437 = vmatpush1.msra.mxu0 %v1360
        %1438 = vmatprep.subr.mxu0 %v1363
        %1439 = vmatpush1.msra.mxu0 %v1362
        %1440 = vmatprep.mubr.f32.mxu0 %v1297
        %1441 = vmatmul.mubr.f32.gmra.mrb[0].mxu0 %v1296
        %v1442 = vpop.f32.mrb[0].mxu0
        %v1443 = vadd.f32 %v1369, %v1442
        %v1444 = vpop.f32.mrb[0].mxu0
        %v1445 = vadd.f32 %v1373, %v1444
        %1446 = vmatprep.mubr.f32.mxu0 %v1299
        %1447 = vmatmul.mubr.f32.gmra.mrb[0].mxu0 %v1298
        %v1448 = vpop.f32.mrb[0].mxu0
        %v1449 = vadd.f32 %v1369, %v1448
        %v1450 = vpop.f32.mrb[0].mxu0
        %v1451 = vadd.f32 %v1373, %v1450
        %1452 = vdwg.mxu0
        %v1453 = vld [vmem:[%s5] sm:$0xff]
        %v1454 = vld [vmem:[%s5 + $0x8] sm:$0xff]
        %v1455 = vld [vmem:[%s5 + $0x10] sm:$0xff]
        %v1456 = vld [vmem:[%s5 + $0x18] sm:$0xff]
        %v1457 = vld [vmem:[%s5 + $0x20] sm:$0xff]
        %v1458 = vld [vmem:[%s5 + $0x28] sm:$0xff]
        %v1459 = vld [vmem:[%s5 + $0x30] sm:$0xff]
        %v1460 = vld [vmem:[%s5 + $0x38] sm:$0xff]
        %v1461 = vld [vmem:[%s5 + $0x40] sm:$0xff]
        %v1462 = vld [vmem:[%s5 + $0x48] sm:$0xff]
        %v1463 = vld [vmem:[%s5 + $0x50] sm:$0xff]
        %v1464 = vld [vmem:[%s5 + $0x58] sm:$0xff]
        %v1465 = vld [vmem:[%s5 + $0x60] sm:$0xff]
        %v1466 = vld [vmem:[%s5 + $0x68] sm:$0xff]
        %v1467 = vld [vmem:[%s5 + $0x70] sm:$0xff]
        %v1468 = vld [vmem:[%s5 + $0x78] sm:$0xff]
        %v1469 = vld [vmem:[%s5 + $0x80] sm:$0xff]
        %v1470 = vld [vmem:[%s5 + $0x88] sm:$0xff]
        %v1471 = vld [vmem:[%s5 + $0x90] sm:$0xff]
        %v1472 = vld [vmem:[%s5 + $0x98] sm:$0xff]
        %v1473 = vld [vmem:[%s5 + $0xa0] sm:$0xff]
        %v1474 = vld [vmem:[%s5 + $0xa8] sm:$0xff]
        %v1475 = vld [vmem:[%s5 + $0xb0] sm:$0xff]
        %v1476 = vld [vmem:[%s5 + $0xb8] sm:$0xff]
        %v1477 = vld [vmem:[%s5 + $0xc0] sm:$0xff]
        %v1478 = vld [vmem:[%s5 + $0xc8] sm:$0xff]
        %v1479 = vld [vmem:[%s5 + $0xd0] sm:$0xff]
        %v1480 = vld [vmem:[%s5 + $0xd8] sm:$0xff]
        %v1481 = vld [vmem:[%s5 + $0xe0] sm:$0xff]
        %v1482 = vld [vmem:[%s5 + $0xe8] sm:$0xff]
        %v1483 = vld [vmem:[%s5 + $0xf0] sm:$0xff]
        %v1484 = vld [vmem:[%s5 + $0xf8] sm:$0xff]
        %v1485 = vld [vmem:[%s5 + $0x100] sm:$0xff]
        %v1486 = vld [vmem:[%s5 + $0x108] sm:$0xff]
        %v1487 = vld [vmem:[%s5 + $0x110] sm:$0xff]
        %v1488 = vld [vmem:[%s5 + $0x118] sm:$0xff]
        %v1489 = vld [vmem:[%s5 + $0x120] sm:$0xff]
        %v1490 = vld [vmem:[%s5 + $0x128] sm:$0xff]
        %v1491 = vld [vmem:[%s5 + $0x130] sm:$0xff]
        %v1492 = vld [vmem:[%s5 + $0x138] sm:$0xff]
        %v1493 = vld [vmem:[%s5 + $0x140] sm:$0xff]
        %v1494 = vld [vmem:[%s5 + $0x148] sm:$0xff]
        %v1495 = vld [vmem:[%s5 + $0x150] sm:$0xff]
        %v1496 = vld [vmem:[%s5 + $0x158] sm:$0xff]
        %v1497 = vld [vmem:[%s5 + $0x160] sm:$0xff]
        %v1498 = vld [vmem:[%s5 + $0x168] sm:$0xff]
        %v1499 = vld [vmem:[%s5 + $0x170] sm:$0xff]
        %v1500 = vld [vmem:[%s5 + $0x178] sm:$0xff]
        %v1501 = vld [vmem:[%s5 + $0x180] sm:$0xff]
        %v1502 = vld [vmem:[%s5 + $0x188] sm:$0xff]
        %v1503 = vld [vmem:[%s5 + $0x190] sm:$0xff]
        %v1504 = vld [vmem:[%s5 + $0x198] sm:$0xff]
        %v1505 = vld [vmem:[%s5 + $0x1a0] sm:$0xff]
        %v1506 = vld [vmem:[%s5 + $0x1a8] sm:$0xff]
        %v1507 = vld [vmem:[%s5 + $0x1b0] sm:$0xff]
        %v1508 = vld [vmem:[%s5 + $0x1b8] sm:$0xff]
        %v1509 = vld [vmem:[%s5 + $0x1c0] sm:$0xff]
        %v1510 = vld [vmem:[%s5 + $0x1c8] sm:$0xff]
        %v1511 = vld [vmem:[%s5 + $0x1d0] sm:$0xff]
        %v1512 = vld [vmem:[%s5 + $0x1d8] sm:$0xff]
        %v1513 = vld [vmem:[%s5 + $0x1e0] sm:$0xff]
        %v1514 = vld [vmem:[%s5 + $0x1e8] sm:$0xff]
        %v1515 = vld [vmem:[%s5 + $0x1f0] sm:$0xff]
        %v1516 = vld [vmem:[%s5 + $0x1f8] sm:$0xff]
        %v1517 = vld [vmem:[%s7] sm:$0x3]
        %v1519 = vlaneseq
        %v1520 = vshrl.u32 %v1519, 7
        %v1521 = vsub.s32 0, %v1520
        %v1522 = vrot.slane %v1517, %v1521
        %v1523 = vlaneseq
        %v1524 = vshrl.u32 %v1523, 7
        %v1525 = vsub.s32 1, %v1524
        %v1526 = vrot.slane %v1517, %v1525
        %1529 = vmatprep.subr.mxu0 %v1454
        %1530 = vmatpush1.msra.mxu0 %v1453
        %1531 = vmatprep.subr.mxu0 %v1456
        %1532 = vmatpush1.msra.mxu0 %v1455
        %1533 = vmatprep.subr.mxu0 %v1458
        %1534 = vmatpush1.msra.mxu0 %v1457
        %1535 = vmatprep.subr.mxu0 %v1460
        %1536 = vmatpush1.msra.mxu0 %v1459
        %1537 = vmatprep.subr.mxu0 %v1462
        %1538 = vmatpush1.msra.mxu0 %v1461
        %1539 = vmatprep.subr.mxu0 %v1464
        %1540 = vmatpush1.msra.mxu0 %v1463
        %1541 = vmatprep.subr.mxu0 %v1466
        %1542 = vmatpush1.msra.mxu0 %v1465
        %1543 = vmatprep.subr.mxu0 %v1468
        %1544 = vmatpush1.msra.mxu0 %v1467
        %1545 = vmatprep.subr.mxu0 %v1470
        %1546 = vmatpush1.msra.mxu0 %v1469
        %1547 = vmatprep.subr.mxu0 %v1472
        %1548 = vmatpush1.msra.mxu0 %v1471
        %1549 = vmatprep.subr.mxu0 %v1474
        %1550 = vmatpush1.msra.mxu0 %v1473
        %1551 = vmatprep.subr.mxu0 %v1476
        %1552 = vmatpush1.msra.mxu0 %v1475
        %1553 = vmatprep.subr.mxu0 %v1478
        %1554 = vmatpush1.msra.mxu0 %v1477
        %1555 = vmatprep.subr.mxu0 %v1480
        %1556 = vmatpush1.msra.mxu0 %v1479
        %1557 = vmatprep.subr.mxu0 %v1482
        %1558 = vmatpush1.msra.mxu0 %v1481
        %1559 = vmatprep.subr.mxu0 %v1484
        %1560 = vmatpush1.msra.mxu0 %v1483
        %1561 = vmatprep.subr.mxu0 %v1486
        %1562 = vmatpush1.msra.mxu0 %v1485
        %1563 = vmatprep.subr.mxu0 %v1488
        %1564 = vmatpush1.msra.mxu0 %v1487
        %1565 = vmatprep.subr.mxu0 %v1490
        %1566 = vmatpush1.msra.mxu0 %v1489
        %1567 = vmatprep.subr.mxu0 %v1492
        %1568 = vmatpush1.msra.mxu0 %v1491
        %1569 = vmatprep.subr.mxu0 %v1494
        %1570 = vmatpush1.msra.mxu0 %v1493
        %1571 = vmatprep.subr.mxu0 %v1496
        %1572 = vmatpush1.msra.mxu0 %v1495
        %1573 = vmatprep.subr.mxu0 %v1498
        %1574 = vmatpush1.msra.mxu0 %v1497
        %1575 = vmatprep.subr.mxu0 %v1500
        %1576 = vmatpush1.msra.mxu0 %v1499
        %1577 = vmatprep.subr.mxu0 %v1502
        %1578 = vmatpush1.msra.mxu0 %v1501
        %1579 = vmatprep.subr.mxu0 %v1504
        %1580 = vmatpush1.msra.mxu0 %v1503
        %1581 = vmatprep.subr.mxu0 %v1506
        %1582 = vmatpush1.msra.mxu0 %v1505
        %1583 = vmatprep.subr.mxu0 %v1508
        %1584 = vmatpush1.msra.mxu0 %v1507
        %1585 = vmatprep.subr.mxu0 %v1510
        %1586 = vmatpush1.msra.mxu0 %v1509
        %1587 = vmatprep.subr.mxu0 %v1512
        %1588 = vmatpush1.msra.mxu0 %v1511
        %1589 = vmatprep.subr.mxu0 %v1514
        %1590 = vmatpush1.msra.mxu0 %v1513
        %1591 = vmatprep.subr.mxu0 %v1516
        %1592 = vmatpush1.msra.mxu0 %v1515
        %1593 = vmatprep.mubr.f32.mxu0 %v1297
        %1594 = vmatmul.mubr.f32.gmra.mrb[0].mxu0 %v1296
        %v1595 = vpop.f32.mrb[0].mxu0
        %v1596 = vadd.f32 %v1522, %v1595
        %v1597 = vpop.f32.mrb[0].mxu0
        %v1598 = vadd.f32 %v1526, %v1597
        %1599 = vmatprep.mubr.f32.mxu0 %v1299
        %1600 = vmatmul.mubr.f32.gmra.mrb[0].mxu0 %v1298
        %v1601 = vpop.f32.mrb[0].mxu0
        %v1602 = vadd.f32 %v1522, %v1601
        %v1603 = vpop.f32.mrb[0].mxu0
        %v1604 = vadd.f32 %v1526, %v1603
        %1605 = vdwg.mxu0
        %v1606 = vld [vmem:[%s8] sm:$0xff]
        %v1607 = vld [vmem:[%s8 + $0x8] sm:$0xff]
        %v1608 = vld [vmem:[%s9] sm:$0xff]
        %v1609 = vld [vmem:[%s9 + $0x8] sm:$0xff]
        %v1611 = vsel %vm751, %v1608, 0
        %v1614 = vsel %vm751, %v1609, 0
        %1616 = vmatprep.subr.mxu0 %v1598
        %1617 = vmatpush1.msra.mxu0 %v1596
        %1618 = vmatprep.subr.mxu0 %v1604
        %1619 = vmatpush1.msra.mxu0 %v1602
        %1620 = vmatprep.subr.mxu0 0.0
        %1621 = vmatpush1.msra.mxu0 0.0
        %1622 = vmatprep.subr.mxu0 0.0
        %1623 = vmatpush1.msra.mxu0 0.0
        %1624 = vmatprep.subr.mxu0 0.0
        %1625 = vmatpush1.msra.mxu0 0.0
        %1626 = vmatprep.subr.mxu0 0.0
        %1627 = vmatpush1.msra.mxu0 0.0
        %1628 = vmatprep.subr.mxu0 0.0
        %1629 = vmatpush1.msra.mxu0 0.0
        %1630 = vmatprep.subr.mxu0 0.0
        %1631 = vmatpush1.msra.mxu0 0.0
        %1632 = vmatprep.subr.mxu0 0.0
        %1633 = vmatpush1.msra.mxu0 0.0
        %1634 = vmatprep.subr.mxu0 0.0
        %1635 = vmatpush1.msra.mxu0 0.0
        %1636 = vmatprep.subr.mxu0 0.0
        %1637 = vmatpush1.msra.mxu0 0.0
        %1638 = vmatprep.subr.mxu0 0.0
        %1639 = vmatpush1.msra.mxu0 0.0
        %1640 = vmatprep.subr.mxu0 0.0
        %1641 = vmatpush1.msra.mxu0 0.0
        %1642 = vmatprep.subr.mxu0 0.0
        %1643 = vmatpush1.msra.mxu0 0.0
        %1644 = vmatprep.subr.mxu0 0.0
        %1645 = vmatpush1.msra.mxu0 0.0
        %1646 = vmatprep.subr.mxu0 0.0
        %1647 = vmatpush1.msra.mxu0 0.0
        %1648 = vmatprep.subr.mxu0 0.0
        %1649 = vmatpush1.msra.mxu0 0.0
        %1650 = vmatprep.subr.mxu0 0.0
        %1651 = vmatpush1.msra.mxu0 0.0
        %1652 = vmatprep.subr.mxu0 0.0
        %1653 = vmatpush1.msra.mxu0 0.0
        %1654 = vmatprep.subr.mxu0 0.0
        %1655 = vmatpush1.msra.mxu0 0.0
        %1656 = vmatprep.subr.mxu0 0.0
        %1657 = vmatpush1.msra.mxu0 0.0
        %1658 = vmatprep.subr.mxu0 0.0
        %1659 = vmatpush1.msra.mxu0 0.0
        %1660 = vmatprep.subr.mxu0 0.0
        %1661 = vmatpush1.msra.mxu0 0.0
        %1662 = vmatprep.subr.mxu0 0.0
        %1663 = vmatpush1.msra.mxu0 0.0
        %1664 = vmatprep.subr.mxu0 0.0
        %1665 = vmatpush1.msra.mxu0 0.0
        %1666 = vmatprep.subr.mxu0 0.0
        %1667 = vmatpush1.msra.mxu0 0.0
        %1668 = vmatprep.subr.mxu0 0.0
        %1669 = vmatpush1.msra.mxu0 0.0
        %1670 = vmatprep.subr.mxu0 0.0
        %1671 = vmatpush1.msra.mxu0 0.0
        %1672 = vmatprep.subr.mxu0 0.0
        %1673 = vmatpush1.msra.mxu0 0.0
        %1674 = vmatprep.subr.mxu0 0.0
        %1675 = vmatpush1.msra.mxu0 0.0
        %1676 = vmatprep.subr.mxu0 0.0
        %1677 = vmatpush1.msra.mxu0 0.0
        %1678 = vmatprep.subr.mxu0 0.0
        %1679 = vmatpush1.msra.mxu0 0.0
        %1680 = vmatprep.mubr.f32.mxu0 0.0
        %1681 = vmatmul.mubr.f32.gmra.mrb[0].mxu0 %v1611
        %v1682 = vpop.f32.mrb[0].mxu0
        %v1683 = vadd.f32 0.0, %v1682
        %v1684 = vpop.f32.mrb[0].mxu0
        %v1685 = vadd.f32 0.0, %v1684
        %1686 = vmatprep.mubr.f32.mxu0 0.0
        %1687 = vmatmul.mubr.f32.gmra.mrb[0].mxu0 %v1614
        %v1688 = vpop.f32.mrb[0].mxu0
        %v1689 = vadd.f32 0.0, %v1688
        %v1690 = vpop.f32.mrb[0].mxu0
        %v1691 = vadd.f32 0.0, %v1690
        %1692 = vdwg.mxu0
        %v1694 = vsel %vm751, %v1606, 0
        %v1697 = vsel %vm751, %v1607, 0
        %1699 = vmatprep.subr.mxu0 %v1445
        %1700 = vmatpush1.msra.mxu0 %v1443
        %1701 = vmatprep.subr.mxu0 %v1451
        %1702 = vmatpush1.msra.mxu0 %v1449
        %1703 = vmatprep.subr.mxu0 0.0
        %1704 = vmatpush1.msra.mxu0 0.0
        %1705 = vmatprep.subr.mxu0 0.0
        %1706 = vmatpush1.msra.mxu0 0.0
        %1707 = vmatprep.subr.mxu0 0.0
        %1708 = vmatpush1.msra.mxu0 0.0
        %1709 = vmatprep.subr.mxu0 0.0
        %1710 = vmatpush1.msra.mxu0 0.0
        %1711 = vmatprep.subr.mxu0 0.0
        %1712 = vmatpush1.msra.mxu0 0.0
        %1713 = vmatprep.subr.mxu0 0.0
        %1714 = vmatpush1.msra.mxu0 0.0
        %1715 = vmatprep.subr.mxu0 0.0
        %1716 = vmatpush1.msra.mxu0 0.0
        %1717 = vmatprep.subr.mxu0 0.0
        %1718 = vmatpush1.msra.mxu0 0.0
        %1719 = vmatprep.subr.mxu0 0.0
        %1720 = vmatpush1.msra.mxu0 0.0
        %1721 = vmatprep.subr.mxu0 0.0
        %1722 = vmatpush1.msra.mxu0 0.0
        %1723 = vmatprep.subr.mxu0 0.0
        %1724 = vmatpush1.msra.mxu0 0.0
        %1725 = vmatprep.subr.mxu0 0.0
        %1726 = vmatpush1.msra.mxu0 0.0
        %1727 = vmatprep.subr.mxu0 0.0
        %1728 = vmatpush1.msra.mxu0 0.0
        %1729 = vmatprep.subr.mxu0 0.0
        %1730 = vmatpush1.msra.mxu0 0.0
        %1731 = vmatprep.subr.mxu0 0.0
        %1732 = vmatpush1.msra.mxu0 0.0
        %1733 = vmatprep.subr.mxu0 0.0
        %1734 = vmatpush1.msra.mxu0 0.0
        %1735 = vmatprep.subr.mxu0 0.0
        %1736 = vmatpush1.msra.mxu0 0.0
        %1737 = vmatprep.subr.mxu0 0.0
        %1738 = vmatpush1.msra.mxu0 0.0
        %1739 = vmatprep.subr.mxu0 0.0
        %1740 = vmatpush1.msra.mxu0 0.0
        %1741 = vmatprep.subr.mxu0 0.0
        %1742 = vmatpush1.msra.mxu0 0.0
        %1743 = vmatprep.subr.mxu0 0.0
        %1744 = vmatpush1.msra.mxu0 0.0
        %1745 = vmatprep.subr.mxu0 0.0
        %1746 = vmatpush1.msra.mxu0 0.0
        %1747 = vmatprep.subr.mxu0 0.0
        %1748 = vmatpush1.msra.mxu0 0.0
        %1749 = vmatprep.subr.mxu0 0.0
        %1750 = vmatpush1.msra.mxu0 0.0
        %1751 = vmatprep.subr.mxu0 0.0
        %1752 = vmatpush1.msra.mxu0 0.0
        %1753 = vmatprep.subr.mxu0 0.0
        %1754 = vmatpush1.msra.mxu0 0.0
        %1755 = vmatprep.subr.mxu0 0.0
        %1756 = vmatpush1.msra.mxu0 0.0
        %1757 = vmatprep.subr.mxu0 0.0
        %1758 = vmatpush1.msra.mxu0 0.0
        %1759 = vmatprep.subr.mxu0 0.0
        %1760 = vmatpush1.msra.mxu0 0.0
        %1761 = vmatprep.subr.mxu0 0.0
        %1762 = vmatpush1.msra.mxu0 0.0
        %1763 = vmatprep.mubr.f32.mxu0 0.0
        %1764 = vmatmul.mubr.f32.gmra.mrb[0].mxu0 %v1694
        %v1765 = vpop.f32.mrb[0].mxu0
        %v1766 = vadd.f32 %v1683, %v1765
        %v1767 = vpop.f32.mrb[0].mxu0
        %v1768 = vadd.f32 %v1685, %v1767
        %1769 = vmatprep.mubr.f32.mxu0 0.0
        %1770 = vmatmul.mubr.f32.gmra.mrb[0].mxu0 %v1697
        %v1771 = vpop.f32.mrb[0].mxu0
        %v1772 = vadd.f32 %v1689, %v1771
        %v1773 = vpop.f32.mrb[0].mxu0
        %v1774 = vadd.f32 %v1691, %v1773
        %1775 = vdwg.mxu0
        %1776 = vmatprep.subr.mxu0 %v1598
        %1777 = vmatpush1.msra.mxu0 %v1596
        %1778 = vmatprep.subr.mxu0 %v1604
        %1779 = vmatpush1.msra.mxu0 %v1602
        %1780 = vmatprep.subr.mxu0 0.0
        %1781 = vmatpush1.msra.mxu0 0.0
        %1782 = vmatprep.subr.mxu0 0.0
        %1783 = vmatpush1.msra.mxu0 0.0
        %1784 = vmatprep.subr.mxu0 0.0
        %1785 = vmatpush1.msra.mxu0 0.0
        %1786 = vmatprep.subr.mxu0 0.0
        %1787 = vmatpush1.msra.mxu0 0.0
        %1788 = vmatprep.subr.mxu0 0.0
        %1789 = vmatpush1.msra.mxu0 0.0
        %1790 = vmatprep.subr.mxu0 0.0
        %1791 = vmatpush1.msra.mxu0 0.0
        %1792 = vmatprep.subr.mxu0 0.0
        %1793 = vmatpush1.msra.mxu0 0.0
        %1794 = vmatprep.subr.mxu0 0.0
        %1795 = vmatpush1.msra.mxu0 0.0
        %1796 = vmatprep.subr.mxu0 0.0
        %1797 = vmatpush1.msra.mxu0 0.0
        %1798 = vmatprep.subr.mxu0 0.0
        %1799 = vmatpush1.msra.mxu0 0.0
        %1800 = vmatprep.subr.mxu0 0.0
        %1801 = vmatpush1.msra.mxu0 0.0
        %1802 = vmatprep.subr.mxu0 0.0
        %1803 = vmatpush1.msra.mxu0 0.0
        %1804 = vmatprep.subr.mxu0 0.0
        %1805 = vmatpush1.msra.mxu0 0.0
        %1806 = vmatprep.subr.mxu0 0.0
        %1807 = vmatpush1.msra.mxu0 0.0
        %1808 = vmatprep.subr.mxu0 0.0
        %1809 = vmatpush1.msra.mxu0 0.0
        %1810 = vmatprep.subr.mxu0 0.0
        %1811 = vmatpush1.msra.mxu0 0.0
        %1812 = vmatprep.subr.mxu0 0.0
        %1813 = vmatpush1.msra.mxu0 0.0
        %1814 = vmatprep.subr.mxu0 0.0
        %1815 = vmatpush1.msra.mxu0 0.0
        %1816 = vmatprep.subr.mxu0 0.0
        %1817 = vmatpush1.msra.mxu0 0.0
        %1818 = vmatprep.subr.mxu0 0.0
        %1819 = vmatpush1.msra.mxu0 0.0
        %1820 = vmatprep.subr.mxu0 0.0
        %1821 = vmatpush1.msra.mxu0 0.0
        %1822 = vmatprep.subr.mxu0 0.0
        %1823 = vmatpush1.msra.mxu0 0.0
        %1824 = vmatprep.subr.mxu0 0.0
        %1825 = vmatpush1.msra.mxu0 0.0
        %1826 = vmatprep.subr.mxu0 0.0
        %1827 = vmatpush1.msra.mxu0 0.0
        %1828 = vmatprep.subr.mxu0 0.0
        %1829 = vmatpush1.msra.mxu0 0.0
        %1830 = vmatprep.subr.mxu0 0.0
        %1831 = vmatpush1.msra.mxu0 0.0
        %1832 = vmatprep.subr.mxu0 0.0
        %1833 = vmatpush1.msra.mxu0 0.0
        %1834 = vmatprep.subr.mxu0 0.0
        %1835 = vmatpush1.msra.mxu0 0.0
        %1836 = vmatprep.subr.mxu0 0.0
        %1837 = vmatpush1.msra.mxu0 0.0
        %1838 = vmatprep.subr.mxu0 0.0
        %1839 = vmatpush1.msra.mxu0 0.0
        %1840 = vmatprep.mubr.f32.mxu0 0.0
        %1841 = vmatmul.mubr.f32.gmra.mrb[0].mxu0 %v1694
        %v1842 = vpop.f32.mrb[0].mxu0
        %v1843 = vadd.f32 0.0, %v1842
        %v1844 = vpop.f32.mrb[0].mxu0
        %v1845 = vadd.f32 0.0, %v1844
        %1846 = vmatprep.mubr.f32.mxu0 0.0
        %1847 = vmatmul.mubr.f32.gmra.mrb[0].mxu0 %v1697
        %v1848 = vpop.f32.mrb[0].mxu0
        %v1849 = vadd.f32 0.0, %v1848
        %v1850 = vpop.f32.mrb[0].mxu0
        %v1851 = vadd.f32 0.0, %v1850
        %1852 = vdwg.mxu0
        %1853 = vmatprep.subr.mxu0 %v1445
        %1854 = vmatpush1.msra.mxu0 %v1443
        %1855 = vmatprep.subr.mxu0 %v1451
        %1856 = vmatpush1.msra.mxu0 %v1449
        %1857 = vmatprep.subr.mxu0 0.0
        %1858 = vmatpush1.msra.mxu0 0.0
        %1859 = vmatprep.subr.mxu0 0.0
        %1860 = vmatpush1.msra.mxu0 0.0
        %1861 = vmatprep.subr.mxu0 0.0
        %1862 = vmatpush1.msra.mxu0 0.0
        %1863 = vmatprep.subr.mxu0 0.0
        %1864 = vmatpush1.msra.mxu0 0.0
        %1865 = vmatprep.subr.mxu0 0.0
        %1866 = vmatpush1.msra.mxu0 0.0
        %1867 = vmatprep.subr.mxu0 0.0
        %1868 = vmatpush1.msra.mxu0 0.0
        %1869 = vmatprep.subr.mxu0 0.0
        %1870 = vmatpush1.msra.mxu0 0.0
        %1871 = vmatprep.subr.mxu0 0.0
        %1872 = vmatpush1.msra.mxu0 0.0
        %1873 = vmatprep.subr.mxu0 0.0
        %1874 = vmatpush1.msra.mxu0 0.0
        %1875 = vmatprep.subr.mxu0 0.0
        %1876 = vmatpush1.msra.mxu0 0.0
        %1877 = vmatprep.subr.mxu0 0.0
        %1878 = vmatpush1.msra.mxu0 0.0
        %1879 = vmatprep.subr.mxu0 0.0
        %1880 = vmatpush1.msra.mxu0 0.0
        %1881 = vmatprep.subr.mxu0 0.0
        %1882 = vmatpush1.msra.mxu0 0.0
        %1883 = vmatprep.subr.mxu0 0.0
        %1884 = vmatpush1.msra.mxu0 0.0
        %1885 = vmatprep.subr.mxu0 0.0
        %1886 = vmatpush1.msra.mxu0 0.0
        %1887 = vmatprep.subr.mxu0 0.0
        %1888 = vmatpush1.msra.mxu0 0.0
        %1889 = vmatprep.subr.mxu0 0.0
        %1890 = vmatpush1.msra.mxu0 0.0
        %1891 = vmatprep.subr.mxu0 0.0
        %1892 = vmatpush1.msra.mxu0 0.0
        %1893 = vmatprep.subr.mxu0 0.0
        %1894 = vmatpush1.msra.mxu0 0.0
        %1895 = vmatprep.subr.mxu0 0.0
        %1896 = vmatpush1.msra.mxu0 0.0
        %1897 = vmatprep.subr.mxu0 0.0
        %1898 = vmatpush1.msra.mxu0 0.0
        %1899 = vmatprep.subr.mxu0 0.0
        %1900 = vmatpush1.msra.mxu0 0.0
        %1901 = vmatprep.subr.mxu0 0.0
        %1902 = vmatpush1.msra.mxu0 0.0
        %1903 = vmatprep.subr.mxu0 0.0
        %1904 = vmatpush1.msra.mxu0 0.0
        %1905 = vmatprep.subr.mxu0 0.0
        %1906 = vmatpush1.msra.mxu0 0.0
        %1907 = vmatprep.subr.mxu0 0.0
        %1908 = vmatpush1.msra.mxu0 0.0
        %1909 = vmatprep.subr.mxu0 0.0
        %1910 = vmatpush1.msra.mxu0 0.0
        %1911 = vmatprep.subr.mxu0 0.0
        %1912 = vmatpush1.msra.mxu0 0.0
        %1913 = vmatprep.subr.mxu0 0.0
        %1914 = vmatpush1.msra.mxu0 0.0
        %1915 = vmatprep.subr.mxu0 0.0
        %1916 = vmatpush1.msra.mxu0 0.0
        %1917 = vmatprep.mubr.f32.mxu0 0.0
        %1918 = vmatmul.mubr.f32.gmra.mrb[0].mxu0 %v1611
        %v1919 = vpop.f32.mrb[0].mxu0
        %v1920 = vadd.f32 0.0, %v1919
        %v1921 = vpop.f32.mrb[0].mxu0
        %v1922 = vadd.f32 0.0, %v1921
        %1923 = vmatprep.mubr.f32.mxu0 0.0
        %1924 = vmatmul.mubr.f32.gmra.mrb[0].mxu0 %v1614
        %v1925 = vpop.f32.mrb[0].mxu0
        %v1926 = vadd.f32 0.0, %v1925
        %v1927 = vpop.f32.mrb[0].mxu0
        %v1928 = vadd.f32 0.0, %v1927
        %1929 = vdwg.mxu0
        %v1930 = vsub.f32 %v1843, %v1920
        %v1931 = vsub.f32 %v1845, %v1922
        %v1932 = vsub.f32 %v1849, %v1926
        %v1933 = vsub.f32 %v1851, %v1928
        %v1934 = vld [vmem:[#allocation2] sm:$0xff]
        %v1935 = vld [vmem:[#allocation2 + $0x8] sm:$0xff]
        %v1936 = vld [vmem:[#allocation2 + $0x10] sm:$0xff]
        %v1937 = vld [vmem:[#allocation2 + $0x18] sm:$0xff]
        %v1938 = vld [vmem:[#allocation2 + $0x20] sm:$0xff]
        %v1939 = vld [vmem:[#allocation2 + $0x28] sm:$0xff]
        %v1940 = vld [vmem:[#allocation2 + $0x30] sm:$0xff]
        %v1941 = vld [vmem:[#allocation2 + $0x38] sm:$0xff]
        %v1942 = vld [vmem:[#allocation2 + $0x40] sm:$0xff]
        %v1943 = vld [vmem:[#allocation2 + $0x48] sm:$0xff]
        %v1944 = vld [vmem:[#allocation2 + $0x50] sm:$0xff]
        %v1945 = vld [vmem:[#allocation2 + $0x58] sm:$0xff]
        %v1946 = vld [vmem:[#allocation2 + $0x60] sm:$0xff]
        %v1947 = vld [vmem:[#allocation2 + $0x68] sm:$0xff]
        %v1948 = vld [vmem:[#allocation2 + $0x70] sm:$0xff]
        %v1949 = vld [vmem:[#allocation2 + $0x78] sm:$0xff]
        %v1950 = vld [vmem:[#allocation2 + $0x80] sm:$0xff]
        %v1951 = vld [vmem:[#allocation2 + $0x88] sm:$0xff]
        %v1952 = vld [vmem:[#allocation2 + $0x90] sm:$0xff]
        %v1953 = vld [vmem:[#allocation2 + $0x98] sm:$0xff]
        %v1954 = vld [vmem:[#allocation2 + $0xa0] sm:$0xff]
        %v1955 = vld [vmem:[#allocation2 + $0xa8] sm:$0xff]
        %v1956 = vld [vmem:[#allocation2 + $0xb0] sm:$0xff]
        %v1957 = vld [vmem:[#allocation2 + $0xb8] sm:$0xff]
        %v1958 = vld [vmem:[#allocation2 + $0xc0] sm:$0xff]
        %v1959 = vld [vmem:[#allocation2 + $0xc8] sm:$0xff]
        %v1960 = vld [vmem:[#allocation2 + $0xd0] sm:$0xff]
        %v1961 = vld [vmem:[#allocation2 + $0xd8] sm:$0xff]
        %v1962 = vld [vmem:[#allocation2 + $0xe0] sm:$0xff]
        %v1963 = vld [vmem:[#allocation2 + $0xe8] sm:$0xff]
        %v1964 = vld [vmem:[#allocation2 + $0xf0] sm:$0xff]
        %v1965 = vld [vmem:[#allocation2 + $0xf8] sm:$0xff]
        %v1966 = vld [vmem:[#allocation2 + $0x100] sm:$0xff]
        %v1967 = vld [vmem:[#allocation2 + $0x108] sm:$0xff]
        %v1968 = vld [vmem:[#allocation2 + $0x110] sm:$0xff]
        %v1969 = vld [vmem:[#allocation2 + $0x118] sm:$0xff]
        %v1970 = vld [vmem:[%s11] sm:$0x3]
        %v1971 = vld [vmem:[#allocation5] sm:$0xff]
        %v1972 = vld [vmem:[#allocation5 + $0x8] sm:$0xff]
        %v1973 = vld [vmem:[#allocation5 + $0x10] sm:$0xff]
        %v1974 = vld [vmem:[#allocation5 + $0x18] sm:$0xff]
        %v1975 = vld [vmem:[#allocation5 + $0x20] sm:$0xff]
        %v1976 = vld [vmem:[#allocation5 + $0x28] sm:$0xff]
        %v1977 = vld [vmem:[#allocation5 + $0x30] sm:$0xff]
        %v1978 = vld [vmem:[#allocation5 + $0x38] sm:$0xff]
        %v1979 = vld [vmem:[#allocation5 + $0x40] sm:$0xff]
        %v1980 = vld [vmem:[#allocation5 + $0x48] sm:$0xff]
        %v1981 = vld [vmem:[#allocation5 + $0x50] sm:$0xff]
        %v1982 = vld [vmem:[#allocation5 + $0x58] sm:$0xff]
        %v1983 = vld [vmem:[#allocation5 + $0x60] sm:$0xff]
        %v1984 = vld [vmem:[#allocation5 + $0x68] sm:$0xff]
        %v1985 = vld [vmem:[#allocation5 + $0x70] sm:$0xff]
        %v1986 = vld [vmem:[#allocation5 + $0x78] sm:$0xff]
        %v1987 = vld [vmem:[#allocation5 + $0x80] sm:$0xff]
        %v1988 = vld [vmem:[#allocation5 + $0x88] sm:$0xff]
        %v1989 = vld [vmem:[#allocation5 + $0x90] sm:$0xff]
        %v1990 = vld [vmem:[#allocation5 + $0x98] sm:$0xff]
        %v1991 = vld [vmem:[#allocation5 + $0xa0] sm:$0xff]
        %v1992 = vld [vmem:[#allocation5 + $0xa8] sm:$0xff]
        %v1993 = vld [vmem:[#allocation5 + $0xb0] sm:$0xff]
        %v1994 = vld [vmem:[#allocation5 + $0xb8] sm:$0xff]
        %v1995 = vld [vmem:[#allocation5 + $0xc0] sm:$0xff]
        %v1996 = vld [vmem:[#allocation5 + $0xc8] sm:$0xff]
        %v1997 = vld [vmem:[#allocation5 + $0xd0] sm:$0xff]
        %v1998 = vld [vmem:[#allocation5 + $0xd8] sm:$0xff]
        %v1999 = vld [vmem:[#allocation5 + $0xe0] sm:$0xff]
        %v2000 = vld [vmem:[#allocation5 + $0xe8] sm:$0xff]
        %v2001 = vld [vmem:[#allocation5 + $0xf0] sm:$0xff]
        %v2002 = vld [vmem:[#allocation5 + $0xf8] sm:$0xff]
        %v2003 = vld [vmem:[#allocation5 + $0x100] sm:$0xff]
        %v2004 = vld [vmem:[#allocation5 + $0x108] sm:$0xff]
        %v2005 = vld [vmem:[#allocation5 + $0x110] sm:$0xff]
        %v2006 = vld [vmem:[#allocation5 + $0x118] sm:$0xff]
        %v2007 = vld [vmem:[%s13] sm:$0x3]
        %v2009 = vlaneseq
        %v2010 = vshrl.u32 %v2009, 7
        %v2011 = vsub.s32 0, %v2010
        %v2012 = vrot.slane %v1970, %v2011
        %v2013 = vlaneseq
        %v2014 = vshrl.u32 %v2013, 7
        %v2015 = vsub.s32 1, %v2014
        %v2016 = vrot.slane %v1970, %v2015
        %v2020 = vsel %vm751, %v1768, 0
        %v2023 = vsel %vm751, %v1774, 0
        %2025 = vmatprep.subr.mxu0 %v1935
        %2026 = vmatpush1.msra.mxu0 %v1934
        %2027 = vmatprep.subr.mxu0 %v1937
        %2028 = vmatpush1.msra.mxu0 %v1936
        %2029 = vmatprep.subr.mxu0 %v1939
        %2030 = vmatpush1.msra.mxu0 %v1938
        %2031 = vmatprep.subr.mxu0 %v1941
        %2032 = vmatpush1.msra.mxu0 %v1940
        %2033 = vmatprep.subr.mxu0 %v1943
        %2034 = vmatpush1.msra.mxu0 %v1942
        %2035 = vmatprep.subr.mxu0 %v1945
        %2036 = vmatpush1.msra.mxu0 %v1944
        %2037 = vmatprep.subr.mxu0 %v1947
        %2038 = vmatpush1.msra.mxu0 %v1946
        %2039 = vmatprep.subr.mxu0 %v1949
        %2040 = vmatpush1.msra.mxu0 %v1948
        %2041 = vmatprep.subr.mxu0 %v1951
        %2042 = vmatpush1.msra.mxu0 %v1950
        %2043 = vmatprep.subr.mxu0 %v1953
        %2044 = vmatpush1.msra.mxu0 %v1952
        %2045 = vmatprep.subr.mxu0 %v1955
        %2046 = vmatpush1.msra.mxu0 %v1954
        %2047 = vmatprep.subr.mxu0 %v1957
        %2048 = vmatpush1.msra.mxu0 %v1956
        %2049 = vmatprep.subr.mxu0 %v1959
        %2050 = vmatpush1.msra.mxu0 %v1958
        %2051 = vmatprep.subr.mxu0 %v1961
        %2052 = vmatpush1.msra.mxu0 %v1960
        %2053 = vmatprep.subr.mxu0 %v1963
        %2054 = vmatpush1.msra.mxu0 %v1962
        %2055 = vmatprep.subr.mxu0 %v1965
        %2056 = vmatpush1.msra.mxu0 %v1964
        %2057 = vmatprep.subr.mxu0 %v1967
        %2058 = vmatpush1.msra.mxu0 %v1966
        %2059 = vmatprep.subr.mxu0 %v1969
        %2060 = vmatpush1.msra.mxu0 %v1968
        %2061 = vmatprep.subr.mxu0 0.0
        %2062 = vmatpush1.msra.mxu0 0.0
        %2063 = vmatprep.subr.mxu0 0.0
        %2064 = vmatpush1.msra.mxu0 0.0
        %2065 = vmatprep.subr.mxu0 0.0
        %2066 = vmatpush1.msra.mxu0 0.0
        %2067 = vmatprep.subr.mxu0 0.0
        %2068 = vmatpush1.msra.mxu0 0.0
        %2069 = vmatprep.subr.mxu0 0.0
        %2070 = vmatpush1.msra.mxu0 0.0
        %2071 = vmatprep.subr.mxu0 0.0
        %2072 = vmatpush1.msra.mxu0 0.0
        %2073 = vmatprep.subr.mxu0 0.0
        %2074 = vmatpush1.msra.mxu0 0.0
        %2075 = vmatprep.subr.mxu0 0.0
        %2076 = vmatpush1.msra.mxu0 0.0
        %2077 = vmatprep.subr.mxu0 0.0
        %2078 = vmatpush1.msra.mxu0 0.0
        %2079 = vmatprep.subr.mxu0 0.0
        %2080 = vmatpush1.msra.mxu0 0.0
        %2081 = vmatprep.subr.mxu0 0.0
        %2082 = vmatpush1.msra.mxu0 0.0
        %2083 = vmatprep.subr.mxu0 0.0
        %2084 = vmatpush1.msra.mxu0 0.0
        %2085 = vmatprep.subr.mxu0 0.0
        %2086 = vmatpush1.msra.mxu0 0.0
        %2087 = vmatprep.subr.mxu0 0.0
        %2088 = vmatpush1.msra.mxu0 0.0
        %2089 = vmatprep.mubr.f32.mxu0 %v2020
        %2090 = vmatmul.mubr.f32.gmra.mrb[0].mxu0 %v1766
        %v2091 = vpop.f32.mrb[0].mxu0
        %v2092 = vadd.f32 %v2012, %v2091
        %v2093 = vpop.f32.mrb[0].mxu0
        %v2094 = vadd.f32 %v2016, %v2093
        %2095 = vmatprep.mubr.f32.mxu0 %v2023
        %2096 = vmatmul.mubr.f32.gmra.mrb[0].mxu0 %v1772
        %v2097 = vpop.f32.mrb[0].mxu0
        %v2098 = vadd.f32 %v2012, %v2097
        %v2099 = vpop.f32.mrb[0].mxu0
        %v2100 = vadd.f32 %v2016, %v2099
        %2101 = vdwg.mxu0
        %vm2102 = vcmp.gt.f32.partialorder %v2092, 0.0
        %vm2103 = vcmp.gt.f32.partialorder %v2094, 0.0
        %vm2104 = vcmp.gt.f32.partialorder %v2098, 0.0
        %vm2105 = vcmp.gt.f32.partialorder %v2100, 0.0
        %v2106 = vmul.f32 %v2092, 0.1
        %v2107 = vmul.f32 %v2094, 0.1
        %v2108 = vmul.f32 %v2098, 0.1
        %v2109 = vmul.f32 %v2100, 0.1
        %v2110 = vsel %vm2102, %v2092, %v2106
        %v2111 = vsel %vm2103, %v2094, %v2107
        %v2112 = vsel %vm2104, %v2098, %v2108
        %v2113 = vsel %vm2105, %v2100, %v2109
        %v2115 = vlaneseq
        %v2116 = vshrl.u32 %v2115, 7
        %v2117 = vsub.s32 0, %v2116
        %v2118 = vrot.slane %v2007, %v2117
        %v2119 = vlaneseq
        %v2120 = vshrl.u32 %v2119, 7
        %v2121 = vsub.s32 1, %v2120
        %v2122 = vrot.slane %v2007, %v2121
        %v2126 = vsel %vm751, %v2111, 0
        %v2129 = vsel %vm751, %v2113, 0
        %2131 = vmatprep.subr.mxu0 %v1972
        %2132 = vmatpush1.msra.mxu0 %v1971
        %2133 = vmatprep.subr.mxu0 %v1974
        %2134 = vmatpush1.msra.mxu0 %v1973
        %2135 = vmatprep.subr.mxu0 %v1976
        %2136 = vmatpush1.msra.mxu0 %v1975
        %2137 = vmatprep.subr.mxu0 %v1978
        %2138 = vmatpush1.msra.mxu0 %v1977
        %2139 = vmatprep.subr.mxu0 %v1980
        %2140 = vmatpush1.msra.mxu0 %v1979
        %2141 = vmatprep.subr.mxu0 %v1982
        %2142 = vmatpush1.msra.mxu0 %v1981
        %2143 = vmatprep.subr.mxu0 %v1984
        %2144 = vmatpush1.msra.mxu0 %v1983
        %2145 = vmatprep.subr.mxu0 %v1986
        %2146 = vmatpush1.msra.mxu0 %v1985
        %2147 = vmatprep.subr.mxu0 %v1988
        %2148 = vmatpush1.msra.mxu0 %v1987
        %2149 = vmatprep.subr.mxu0 %v1990
        %2150 = vmatpush1.msra.mxu0 %v1989
        %2151 = vmatprep.subr.mxu0 %v1992
        %2152 = vmatpush1.msra.mxu0 %v1991
        %2153 = vmatprep.subr.mxu0 %v1994
        %2154 = vmatpush1.msra.mxu0 %v1993
        %2155 = vmatprep.subr.mxu0 %v1996
        %2156 = vmatpush1.msra.mxu0 %v1995
        %2157 = vmatprep.subr.mxu0 %v1998
        %2158 = vmatpush1.msra.mxu0 %v1997
        %2159 = vmatprep.subr.mxu0 %v2000
        %2160 = vmatpush1.msra.mxu0 %v1999
        %2161 = vmatprep.subr.mxu0 %v2002
        %2162 = vmatpush1.msra.mxu0 %v2001
        %2163 = vmatprep.subr.mxu0 %v2004
        %2164 = vmatpush1.msra.mxu0 %v2003
        %2165 = vmatprep.subr.mxu0 %v2006
        %2166 = vmatpush1.msra.mxu0 %v2005
        %2167 = vmatprep.subr.mxu0 0.0
        %2168 = vmatpush1.msra.mxu0 0.0
        %2169 = vmatprep.subr.mxu0 0.0
        %2170 = vmatpush1.msra.mxu0 0.0
        %2171 = vmatprep.subr.mxu0 0.0
        %2172 = vmatpush1.msra.mxu0 0.0
        %2173 = vmatprep.subr.mxu0 0.0
        %2174 = vmatpush1.msra.mxu0 0.0
        %2175 = vmatprep.subr.mxu0 0.0
        %2176 = vmatpush1.msra.mxu0 0.0
        %2177 = vmatprep.subr.mxu0 0.0
        %2178 = vmatpush1.msra.mxu0 0.0
        %2179 = vmatprep.subr.mxu0 0.0
        %2180 = vmatpush1.msra.mxu0 0.0
        %2181 = vmatprep.subr.mxu0 0.0
        %2182 = vmatpush1.msra.mxu0 0.0
        %2183 = vmatprep.subr.mxu0 0.0
        %2184 = vmatpush1.msra.mxu0 0.0
        %2185 = vmatprep.subr.mxu0 0.0
        %2186 = vmatpush1.msra.mxu0 0.0
        %2187 = vmatprep.subr.mxu0 0.0
        %2188 = vmatpush1.msra.mxu0 0.0
        %2189 = vmatprep.subr.mxu0 0.0
        %2190 = vmatpush1.msra.mxu0 0.0
        %2191 = vmatprep.subr.mxu0 0.0
        %2192 = vmatpush1.msra.mxu0 0.0
        %2193 = vmatprep.subr.mxu0 0.0
        %2194 = vmatpush1.msra.mxu0 0.0
        %2195 = vmatprep.mubr.f32.mxu0 %v2126
        %2196 = vmatmul.mubr.f32.gmra.mrb[0].mxu0 %v2110
        %v2197 = vpop.f32.mrb[0].mxu0
        %v2198 = vadd.f32 %v2118, %v2197
        %v2199 = vpop.f32.mrb[0].mxu0
        %v2200 = vadd.f32 %v2122, %v2199
        %2201 = vmatprep.mubr.f32.mxu0 %v2129
        %2202 = vmatmul.mubr.f32.gmra.mrb[0].mxu0 %v2112
        %v2203 = vpop.f32.mrb[0].mxu0
        %v2204 = vadd.f32 %v2118, %v2203
        %v2205 = vpop.f32.mrb[0].mxu0
        %v2206 = vadd.f32 %v2122, %v2205
        %2207 = vdwg.mxu0
        %v2208 = vld [vmem:[#allocation7] sm:$0xff]
        %v2209 = vld [vmem:[#allocation7 + $0x8] sm:$0xff]
        %v2210 = vld [vmem:[#allocation7 + $0x10] sm:$0xff]
        %v2211 = vld [vmem:[#allocation7 + $0x18] sm:$0xff]
        %v2212 = vld [vmem:[#allocation7 + $0x20] sm:$0xff]
        %v2213 = vld [vmem:[#allocation7 + $0x28] sm:$0xff]
        %v2214 = vld [vmem:[#allocation7 + $0x30] sm:$0xff]
        %v2215 = vld [vmem:[#allocation7 + $0x38] sm:$0xff]
        %v2216 = vld [vmem:[#allocation7 + $0x40] sm:$0xff]
        %v2217 = vld [vmem:[#allocation7 + $0x48] sm:$0xff]
        %v2218 = vld [vmem:[#allocation7 + $0x50] sm:$0xff]
        %v2219 = vld [vmem:[#allocation7 + $0x58] sm:$0xff]
        %v2220 = vld [vmem:[#allocation7 + $0x60] sm:$0xff]
        %v2221 = vld [vmem:[#allocation7 + $0x68] sm:$0xff]
        %v2222 = vld [vmem:[#allocation7 + $0x70] sm:$0xff]
        %v2223 = vld [vmem:[#allocation7 + $0x78] sm:$0xff]
        %v2224 = vld [vmem:[#allocation7 + $0x80] sm:$0xff]
        %v2225 = vld [vmem:[#allocation7 + $0x88] sm:$0xff]
        %v2226 = vld [vmem:[#allocation7 + $0x90] sm:$0xff]
        %v2227 = vld [vmem:[#allocation7 + $0x98] sm:$0xff]
        %v2228 = vld [vmem:[#allocation7 + $0xa0] sm:$0xff]
        %v2229 = vld [vmem:[#allocation7 + $0xa8] sm:$0xff]
        %v2230 = vld [vmem:[#allocation7 + $0xb0] sm:$0xff]
        %v2231 = vld [vmem:[#allocation7 + $0xb8] sm:$0xff]
        %v2232 = vld [vmem:[#allocation7 + $0xc0] sm:$0xff]
        %v2233 = vld [vmem:[#allocation7 + $0xc8] sm:$0xff]
        %v2234 = vld [vmem:[#allocation7 + $0xd0] sm:$0xff]
        %v2235 = vld [vmem:[#allocation7 + $0xd8] sm:$0xff]
        %v2236 = vld [vmem:[#allocation7 + $0xe0] sm:$0xff]
        %v2237 = vld [vmem:[#allocation7 + $0xe8] sm:$0xff]
        %v2238 = vld [vmem:[#allocation7 + $0xf0] sm:$0xff]
        %v2239 = vld [vmem:[#allocation7 + $0xf8] sm:$0xff]
        %v2240 = vld [vmem:[#allocation7 + $0x100] sm:$0xff]
        %v2241 = vld [vmem:[#allocation7 + $0x108] sm:$0xff]
        %v2242 = vld [vmem:[#allocation7 + $0x110] sm:$0xff]
        %v2243 = vld [vmem:[#allocation7 + $0x118] sm:$0xff]
        %v2244 = vld [vmem:[%s15] sm:$0x3]
        %v2245 = vld [vmem:[#allocation8] sm:$0xff]
        %v2246 = vld [vmem:[#allocation8 + $0x8] sm:$0xff]
        %v2247 = vld [vmem:[#allocation8 + $0x10] sm:$0xff]
        %v2248 = vld [vmem:[#allocation8 + $0x18] sm:$0xff]
        %v2249 = vld [vmem:[#allocation8 + $0x20] sm:$0xff]
        %v2250 = vld [vmem:[#allocation8 + $0x28] sm:$0xff]
        %v2251 = vld [vmem:[#allocation8 + $0x30] sm:$0xff]
        %v2252 = vld [vmem:[#allocation8 + $0x38] sm:$0xff]
        %v2253 = vld [vmem:[#allocation8 + $0x40] sm:$0xff]
        %v2254 = vld [vmem:[#allocation8 + $0x48] sm:$0xff]
        %v2255 = vld [vmem:[#allocation8 + $0x50] sm:$0xff]
        %v2256 = vld [vmem:[#allocation8 + $0x58] sm:$0xff]
        %v2257 = vld [vmem:[#allocation8 + $0x60] sm:$0xff]
        %v2258 = vld [vmem:[#allocation8 + $0x68] sm:$0xff]
        %v2259 = vld [vmem:[#allocation8 + $0x70] sm:$0xff]
        %v2260 = vld [vmem:[#allocation8 + $0x78] sm:$0xff]
        %v2261 = vld [vmem:[#allocation8 + $0x80] sm:$0xff]
        %v2262 = vld [vmem:[#allocation8 + $0x88] sm:$0xff]
        %v2263 = vld [vmem:[#allocation8 + $0x90] sm:$0xff]
        %v2264 = vld [vmem:[#allocation8 + $0x98] sm:$0xff]
        %v2265 = vld [vmem:[#allocation8 + $0xa0] sm:$0xff]
        %v2266 = vld [vmem:[#allocation8 + $0xa8] sm:$0xff]
        %v2267 = vld [vmem:[#allocation8 + $0xb0] sm:$0xff]
        %v2268 = vld [vmem:[#allocation8 + $0xb8] sm:$0xff]
        %v2269 = vld [vmem:[#allocation8 + $0xc0] sm:$0xff]
        %v2270 = vld [vmem:[#allocation8 + $0xc8] sm:$0xff]
        %v2271 = vld [vmem:[#allocation8 + $0xd0] sm:$0xff]
        %v2272 = vld [vmem:[#allocation8 + $0xd8] sm:$0xff]
        %v2273 = vld [vmem:[#allocation8 + $0xe0] sm:$0xff]
        %v2274 = vld [vmem:[#allocation8 + $0xe8] sm:$0xff]
        %v2275 = vld [vmem:[#allocation8 + $0xf0] sm:$0xff]
        %v2276 = vld [vmem:[#allocation8 + $0xf8] sm:$0xff]
        %v2277 = vld [vmem:[#allocation8 + $0x100] sm:$0xff]
        %v2278 = vld [vmem:[#allocation8 + $0x108] sm:$0xff]
        %v2279 = vld [vmem:[#allocation8 + $0x110] sm:$0xff]
        %v2280 = vld [vmem:[#allocation8 + $0x118] sm:$0xff]
        %v2281 = vld [vmem:[%s17] sm:$0x3]
        %v2283 = vlaneseq
        %v2284 = vshrl.u32 %v2283, 7
        %v2285 = vsub.s32 0, %v2284
        %v2286 = vrot.slane %v2244, %v2285
        %v2287 = vlaneseq
        %v2288 = vshrl.u32 %v2287, 7
        %v2289 = vsub.s32 1, %v2288
        %v2290 = vrot.slane %v2244, %v2289
        %v2294 = vsel %vm751, %v1931, 0
        %v2297 = vsel %vm751, %v1933, 0
        %2299 = vmatprep.subr.mxu0 %v2209
        %2300 = vmatpush1.msra.mxu0 %v2208
        %2301 = vmatprep.subr.mxu0 %v2211
        %2302 = vmatpush1.msra.mxu0 %v2210
        %2303 = vmatprep.subr.mxu0 %v2213
        %2304 = vmatpush1.msra.mxu0 %v2212
        %2305 = vmatprep.subr.mxu0 %v2215
        %2306 = vmatpush1.msra.mxu0 %v2214
        %2307 = vmatprep.subr.mxu0 %v2217
        %2308 = vmatpush1.msra.mxu0 %v2216
        %2309 = vmatprep.subr.mxu0 %v2219
        %2310 = vmatpush1.msra.mxu0 %v2218
        %2311 = vmatprep.subr.mxu0 %v2221
        %2312 = vmatpush1.msra.mxu0 %v2220
        %2313 = vmatprep.subr.mxu0 %v2223
        %2314 = vmatpush1.msra.mxu0 %v2222
        %2315 = vmatprep.subr.mxu0 %v2225
        %2316 = vmatpush1.msra.mxu0 %v2224
        %2317 = vmatprep.subr.mxu0 %v2227
        %2318 = vmatpush1.msra.mxu0 %v2226
        %2319 = vmatprep.subr.mxu0 %v2229
        %2320 = vmatpush1.msra.mxu0 %v2228
        %2321 = vmatprep.subr.mxu0 %v2231
        %2322 = vmatpush1.msra.mxu0 %v2230
        %2323 = vmatprep.subr.mxu0 %v2233
        %2324 = vmatpush1.msra.mxu0 %v2232
        %2325 = vmatprep.subr.mxu0 %v2235
        %2326 = vmatpush1.msra.mxu0 %v2234
        %2327 = vmatprep.subr.mxu0 %v2237
        %2328 = vmatpush1.msra.mxu0 %v2236
        %2329 = vmatprep.subr.mxu0 %v2239
        %2330 = vmatpush1.msra.mxu0 %v2238
        %2331 = vmatprep.subr.mxu0 %v2241
        %2332 = vmatpush1.msra.mxu0 %v2240
        %2333 = vmatprep.subr.mxu0 %v2243
        %2334 = vmatpush1.msra.mxu0 %v2242
        %2335 = vmatprep.subr.mxu0 0.0
        %2336 = vmatpush1.msra.mxu0 0.0
        %2337 = vmatprep.subr.mxu0 0.0
        %2338 = vmatpush1.msra.mxu0 0.0
        %2339 = vmatprep.subr.mxu0 0.0
        %2340 = vmatpush1.msra.mxu0 0.0
        %2341 = vmatprep.subr.mxu0 0.0
        %2342 = vmatpush1.msra.mxu0 0.0
        %2343 = vmatprep.subr.mxu0 0.0
        %2344 = vmatpush1.msra.mxu0 0.0
        %2345 = vmatprep.subr.mxu0 0.0
        %2346 = vmatpush1.msra.mxu0 0.0
        %2347 = vmatprep.subr.mxu0 0.0
        %2348 = vmatpush1.msra.mxu0 0.0
        %2349 = vmatprep.subr.mxu0 0.0
        %2350 = vmatpush1.msra.mxu0 0.0
        %2351 = vmatprep.subr.mxu0 0.0
        %2352 = vmatpush1.msra.mxu0 0.0
        %2353 = vmatprep.subr.mxu0 0.0
        %2354 = vmatpush1.msra.mxu0 0.0
        %2355 = vmatprep.subr.mxu0 0.0
        %2356 = vmatpush1.msra.mxu0 0.0
        %2357 = vmatprep.subr.mxu0 0.0
        %2358 = vmatpush1.msra.mxu0 0.0
        %2359 = vmatprep.subr.mxu0 0.0
        %2360 = vmatpush1.msra.mxu0 0.0
        %2361 = vmatprep.subr.mxu0 0.0
        %2362 = vmatpush1.msra.mxu0 0.0
        %2363 = vmatprep.mubr.f32.mxu0 %v2294
        %2364 = vmatmul.mubr.f32.gmra.mrb[0].mxu0 %v1930
        %v2365 = vpop.f32.mrb[0].mxu0
        %v2366 = vadd.f32 %v2286, %v2365
        %v2367 = vpop.f32.mrb[0].mxu0
        %v2368 = vadd.f32 %v2290, %v2367
        %2369 = vmatprep.mubr.f32.mxu0 %v2297
        %2370 = vmatmul.mubr.f32.gmra.mrb[0].mxu0 %v1932
        %v2371 = vpop.f32.mrb[0].mxu0
        %v2372 = vadd.f32 %v2286, %v2371
        %v2373 = vpop.f32.mrb[0].mxu0
        %v2374 = vadd.f32 %v2290, %v2373
        %2375 = vdwg.mxu0
        %vm2376 = vcmp.gt.f32.partialorder %v2366, 0.0
        %vm2377 = vcmp.gt.f32.partialorder %v2368, 0.0
        %vm2378 = vcmp.gt.f32.partialorder %v2372, 0.0
        %vm2379 = vcmp.gt.f32.partialorder %v2374, 0.0
        %v2380 = vmul.f32 %v2366, 0.1
        %v2381 = vmul.f32 %v2368, 0.1
        %v2382 = vmul.f32 %v2372, 0.1
        %v2383 = vmul.f32 %v2374, 0.1
        %v2384 = vsel %vm2376, %v2366, %v2380
        %v2385 = vsel %vm2377, %v2368, %v2381
        %v2386 = vsel %vm2378, %v2372, %v2382
        %v2387 = vsel %vm2379, %v2374, %v2383
        %v2389 = vlaneseq
        %v2390 = vshrl.u32 %v2389, 7
        %v2391 = vsub.s32 0, %v2390
        %v2392 = vrot.slane %v2281, %v2391
        %v2393 = vlaneseq
        %v2394 = vshrl.u32 %v2393, 7
        %v2395 = vsub.s32 1, %v2394
        %v2396 = vrot.slane %v2281, %v2395
        %v2400 = vsel %vm751, %v2385, 0
        %v2403 = vsel %vm751, %v2387, 0
        %2405 = vmatprep.subr.mxu0 %v2246
        %2406 = vmatpush1.msra.mxu0 %v2245
        %2407 = vmatprep.subr.mxu0 %v2248
        %2408 = vmatpush1.msra.mxu0 %v2247
        %2409 = vmatprep.subr.mxu0 %v2250
        %2410 = vmatpush1.msra.mxu0 %v2249
        %2411 = vmatprep.subr.mxu0 %v2252
        %2412 = vmatpush1.msra.mxu0 %v2251
        %2413 = vmatprep.subr.mxu0 %v2254
        %2414 = vmatpush1.msra.mxu0 %v2253
        %2415 = vmatprep.subr.mxu0 %v2256
        %2416 = vmatpush1.msra.mxu0 %v2255
        %2417 = vmatprep.subr.mxu0 %v2258
        %2418 = vmatpush1.msra.mxu0 %v2257
        %2419 = vmatprep.subr.mxu0 %v2260
        %2420 = vmatpush1.msra.mxu0 %v2259
        %2421 = vmatprep.subr.mxu0 %v2262
        %2422 = vmatpush1.msra.mxu0 %v2261
        %2423 = vmatprep.subr.mxu0 %v2264
        %2424 = vmatpush1.msra.mxu0 %v2263
        %2425 = vmatprep.subr.mxu0 %v2266
        %2426 = vmatpush1.msra.mxu0 %v2265
        %2427 = vmatprep.subr.mxu0 %v2268
        %2428 = vmatpush1.msra.mxu0 %v2267
        %2429 = vmatprep.subr.mxu0 %v2270
        %2430 = vmatpush1.msra.mxu0 %v2269
        %2431 = vmatprep.subr.mxu0 %v2272
        %2432 = vmatpush1.msra.mxu0 %v2271
        %2433 = vmatprep.subr.mxu0 %v2274
        %2434 = vmatpush1.msra.mxu0 %v2273
        %2435 = vmatprep.subr.mxu0 %v2276
        %2436 = vmatpush1.msra.mxu0 %v2275
        %2437 = vmatprep.subr.mxu0 %v2278
        %2438 = vmatpush1.msra.mxu0 %v2277
        %2439 = vmatprep.subr.mxu0 %v2280
        %2440 = vmatpush1.msra.mxu0 %v2279
        %2441 = vmatprep.subr.mxu0 0.0
        %2442 = vmatpush1.msra.mxu0 0.0
        %2443 = vmatprep.subr.mxu0 0.0
        %2444 = vmatpush1.msra.mxu0 0.0
        %2445 = vmatprep.subr.mxu0 0.0
        %2446 = vmatpush1.msra.mxu0 0.0
        %2447 = vmatprep.subr.mxu0 0.0
        %2448 = vmatpush1.msra.mxu0 0.0
        %2449 = vmatprep.subr.mxu0 0.0
        %2450 = vmatpush1.msra.mxu0 0.0
        %2451 = vmatprep.subr.mxu0 0.0
        %2452 = vmatpush1.msra.mxu0 0.0
        %2453 = vmatprep.subr.mxu0 0.0
        %2454 = vmatpush1.msra.mxu0 0.0
        %2455 = vmatprep.subr.mxu0 0.0
        %2456 = vmatpush1.msra.mxu0 0.0
        %2457 = vmatprep.subr.mxu0 0.0
        %2458 = vmatpush1.msra.mxu0 0.0
        %2459 = vmatprep.subr.mxu0 0.0
        %2460 = vmatpush1.msra.mxu0 0.0
        %2461 = vmatprep.subr.mxu0 0.0
        %2462 = vmatpush1.msra.mxu0 0.0
        %2463 = vmatprep.subr.mxu0 0.0
        %2464 = vmatpush1.msra.mxu0 0.0
        %2465 = vmatprep.subr.mxu0 0.0
        %2466 = vmatpush1.msra.mxu0 0.0
        %2467 = vmatprep.subr.mxu0 0.0
        %2468 = vmatpush1.msra.mxu0 0.0
        %2469 = vmatprep.mubr.f32.mxu0 %v2400
        %2470 = vmatmul.mubr.f32.gmra.mrb[0].mxu0 %v2384
        %v2471 = vpop.f32.mrb[0].mxu0
        %v2472 = vadd.f32 %v2392, %v2471
        %v2473 = vpop.f32.mrb[0].mxu0
        %v2474 = vadd.f32 %v2396, %v2473
        %2475 = vmatprep.mubr.f32.mxu0 %v2403
        %2476 = vmatmul.mubr.f32.gmra.mrb[0].mxu0 %v2386
        %v2477 = vpop.f32.mrb[0].mxu0
        %v2478 = vadd.f32 %v2392, %v2477
        %v2479 = vpop.f32.mrb[0].mxu0
        %v2480 = vadd.f32 %v2396, %v2479
        %2481 = vdwg.mxu0
        %2482 = vmatprep.subr.mxu0 %v2200
        %2483 = vmatpush1.msra.mxu0 %v2198
        %2484 = vmatprep.subr.mxu0 %v2206
        %2485 = vmatpush1.msra.mxu0 %v2204
        %2486 = vmatprep.subr.mxu0 0.0
        %2487 = vmatpush1.msra.mxu0 0.0
        %2488 = vmatprep.subr.mxu0 0.0
        %2489 = vmatpush1.msra.mxu0 0.0
        %2490 = vmatprep.subr.mxu0 0.0
        %2491 = vmatpush1.msra.mxu0 0.0
        %2492 = vmatprep.subr.mxu0 0.0
        %2493 = vmatpush1.msra.mxu0 0.0
        %2494 = vmatprep.subr.mxu0 0.0
        %2495 = vmatpush1.msra.mxu0 0.0
        %2496 = vmatprep.subr.mxu0 0.0
        %2497 = vmatpush1.msra.mxu0 0.0
        %2498 = vmatprep.subr.mxu0 0.0
        %2499 = vmatpush1.msra.mxu0 0.0
        %2500 = vmatprep.subr.mxu0 0.0
        %2501 = vmatpush1.msra.mxu0 0.0
        %2502 = vmatprep.subr.mxu0 0.0
        %2503 = vmatpush1.msra.mxu0 0.0
        %2504 = vmatprep.subr.mxu0 0.0
        %2505 = vmatpush1.msra.mxu0 0.0
        %2506 = vmatprep.subr.mxu0 0.0
        %2507 = vmatpush1.msra.mxu0 0.0
        %2508 = vmatprep.subr.mxu0 0.0
        %2509 = vmatpush1.msra.mxu0 0.0
        %2510 = vmatprep.subr.mxu0 0.0
        %2511 = vmatpush1.msra.mxu0 0.0
        %2512 = vmatprep.subr.mxu0 0.0
        %2513 = vmatpush1.msra.mxu0 0.0
        %2514 = vmatprep.subr.mxu0 0.0
        %2515 = vmatpush1.msra.mxu0 0.0
        %2516 = vmatprep.subr.mxu0 0.0
        %2517 = vmatpush1.msra.mxu0 0.0
        %2518 = vmatprep.subr.mxu0 0.0
        %2519 = vmatpush1.msra.mxu0 0.0
        %2520 = vmatprep.subr.mxu0 0.0
        %2521 = vmatpush1.msra.mxu0 0.0
        %2522 = vmatprep.subr.mxu0 0.0
        %2523 = vmatpush1.msra.mxu0 0.0
        %2524 = vmatprep.subr.mxu0 0.0
        %2525 = vmatpush1.msra.mxu0 0.0
        %2526 = vmatprep.subr.mxu0 0.0
        %2527 = vmatpush1.msra.mxu0 0.0
        %2528 = vmatprep.subr.mxu0 0.0
        %2529 = vmatpush1.msra.mxu0 0.0
        %2530 = vmatprep.subr.mxu0 0.0
        %2531 = vmatpush1.msra.mxu0 0.0
        %2532 = vmatprep.subr.mxu0 0.0
        %2533 = vmatpush1.msra.mxu0 0.0
        %2534 = vmatprep.subr.mxu0 0.0
        %2535 = vmatpush1.msra.mxu0 0.0
        %2536 = vmatprep.subr.mxu0 0.0
        %2537 = vmatpush1.msra.mxu0 0.0
        %2538 = vmatprep.subr.mxu0 0.0
        %2539 = vmatpush1.msra.mxu0 0.0
        %2540 = vmatprep.subr.mxu0 0.0
        %2541 = vmatpush1.msra.mxu0 0.0
        %2542 = vmatprep.subr.mxu0 0.0
        %2543 = vmatpush1.msra.mxu0 0.0
        %2544 = vmatprep.subr.mxu0 0.0
        %2545 = vmatpush1.msra.mxu0 0.0
        %2546 = vmatprep.mubr.f32.mxu0 0.0
        %2547 = vmatmul.mubr.f32.gmra.mrb[0].mxu0 %v1694
        %v2548 = vpop.f32.mrb[0].mxu0
        %v2549 = vadd.f32 0.0, %v2548
        %v2550 = vpop.f32.mrb[0].mxu0
        %v2551 = vadd.f32 0.0, %v2550
        %2552 = vmatprep.mubr.f32.mxu0 0.0
        %2553 = vmatmul.mubr.f32.gmra.mrb[0].mxu0 %v1697
        %v2554 = vpop.f32.mrb[0].mxu0
        %v2555 = vadd.f32 0.0, %v2554
        %v2556 = vpop.f32.mrb[0].mxu0
        %v2557 = vadd.f32 0.0, %v2556
        %2558 = vdwg.mxu0
        %2559 = vmatprep.subr.mxu0 %v2474
        %2560 = vmatpush1.msra.mxu0 %v2472
        %2561 = vmatprep.subr.mxu0 %v2480
        %2562 = vmatpush1.msra.mxu0 %v2478
        %2563 = vmatprep.subr.mxu0 0.0
        %2564 = vmatpush1.msra.mxu0 0.0
        %2565 = vmatprep.subr.mxu0 0.0
        %2566 = vmatpush1.msra.mxu0 0.0
        %2567 = vmatprep.subr.mxu0 0.0
        %2568 = vmatpush1.msra.mxu0 0.0
        %2569 = vmatprep.subr.mxu0 0.0
        %2570 = vmatpush1.msra.mxu0 0.0
        %2571 = vmatprep.subr.mxu0 0.0
        %2572 = vmatpush1.msra.mxu0 0.0
        %2573 = vmatprep.subr.mxu0 0.0
        %2574 = vmatpush1.msra.mxu0 0.0
        %2575 = vmatprep.subr.mxu0 0.0
        %2576 = vmatpush1.msra.mxu0 0.0
        %2577 = vmatprep.subr.mxu0 0.0
        %2578 = vmatpush1.msra.mxu0 0.0
        %2579 = vmatprep.subr.mxu0 0.0
        %2580 = vmatpush1.msra.mxu0 0.0
        %2581 = vmatprep.subr.mxu0 0.0
        %2582 = vmatpush1.msra.mxu0 0.0
        %2583 = vmatprep.subr.mxu0 0.0
        %2584 = vmatpush1.msra.mxu0 0.0
        %2585 = vmatprep.subr.mxu0 0.0
        %2586 = vmatpush1.msra.mxu0 0.0
        %2587 = vmatprep.subr.mxu0 0.0
        %2588 = vmatpush1.msra.mxu0 0.0
        %2589 = vmatprep.subr.mxu0 0.0
        %2590 = vmatpush1.msra.mxu0 0.0
        %2591 = vmatprep.subr.mxu0 0.0
        %2592 = vmatpush1.msra.mxu0 0.0
        %2593 = vmatprep.subr.mxu0 0.0
        %2594 = vmatpush1.msra.mxu0 0.0
        %2595 = vmatprep.subr.mxu0 0.0
        %2596 = vmatpush1.msra.mxu0 0.0
        %2597 = vmatprep.subr.mxu0 0.0
        %2598 = vmatpush1.msra.mxu0 0.0
        %2599 = vmatprep.subr.mxu0 0.0
        %2600 = vmatpush1.msra.mxu0 0.0
        %2601 = vmatprep.subr.mxu0 0.0
        %2602 = vmatpush1.msra.mxu0 0.0
        %2603 = vmatprep.subr.mxu0 0.0
        %2604 = vmatpush1.msra.mxu0 0.0
        %2605 = vmatprep.subr.mxu0 0.0
        %2606 = vmatpush1.msra.mxu0 0.0
        %2607 = vmatprep.subr.mxu0 0.0
        %2608 = vmatpush1.msra.mxu0 0.0
        %2609 = vmatprep.subr.mxu0 0.0
        %2610 = vmatpush1.msra.mxu0 0.0
        %2611 = vmatprep.subr.mxu0 0.0
        %2612 = vmatpush1.msra.mxu0 0.0
        %2613 = vmatprep.subr.mxu0 0.0
        %2614 = vmatpush1.msra.mxu0 0.0
        %2615 = vmatprep.subr.mxu0 0.0
        %2616 = vmatpush1.msra.mxu0 0.0
        %2617 = vmatprep.subr.mxu0 0.0
        %2618 = vmatpush1.msra.mxu0 0.0
        %2619 = vmatprep.subr.mxu0 0.0
        %2620 = vmatpush1.msra.mxu0 0.0
        %2621 = vmatprep.subr.mxu0 0.0
        %2622 = vmatpush1.msra.mxu0 0.0
        %2623 = vmatprep.mubr.f32.mxu0 0.0
        %2624 = vmatmul.mubr.f32.gmra.mrb[0].mxu0 %v1611
        %v2625 = vpop.f32.mrb[0].mxu0
        %v2626 = vadd.f32 0.0, %v2625
        %v2627 = vpop.f32.mrb[0].mxu0
        %v2628 = vadd.f32 0.0, %v2627
        %2629 = vmatprep.mubr.f32.mxu0 0.0
        %2630 = vmatmul.mubr.f32.gmra.mrb[0].mxu0 %v1614
        %v2631 = vpop.f32.mrb[0].mxu0
        %v2632 = vadd.f32 0.0, %v2631
        %v2633 = vpop.f32.mrb[0].mxu0
        %v2634 = vadd.f32 0.0, %v2633
        %2635 = vdwg.mxu0
        %v2636 = vsub.f32 %v2549, %v2626
        %v2637 = vsub.f32 %v2551, %v2628
        %v2638 = vsub.f32 %v2555, %v2632
        %v2639 = vsub.f32 %v2557, %v2634
        %v2640 = vmul.f32 %v2636, 0.0625
        %v2641 = vmul.f32 %v2637, 0.0625
        %v2642 = vmul.f32 %v2638, 0.0625
        %v2643 = vmul.f32 %v2639, 0.0625
        %2644 = vmatprep.subr.mxu0 %v2200
        %2645 = vmatpush1.msra.mxu0 %v2198
        %2646 = vmatprep.subr.mxu0 %v2206
        %2647 = vmatpush1.msra.mxu0 %v2204
        %2648 = vmatprep.subr.mxu0 0.0
        %2649 = vmatpush1.msra.mxu0 0.0
        %2650 = vmatprep.subr.mxu0 0.0
        %2651 = vmatpush1.msra.mxu0 0.0
        %2652 = vmatprep.subr.mxu0 0.0
        %2653 = vmatpush1.msra.mxu0 0.0
        %2654 = vmatprep.subr.mxu0 0.0
        %2655 = vmatpush1.msra.mxu0 0.0
        %2656 = vmatprep.subr.mxu0 0.0
        %2657 = vmatpush1.msra.mxu0 0.0
        %2658 = vmatprep.subr.mxu0 0.0
        %2659 = vmatpush1.msra.mxu0 0.0
        %2660 = vmatprep.subr.mxu0 0.0
        %2661 = vmatpush1.msra.mxu0 0.0
        %2662 = vmatprep.subr.mxu0 0.0
        %2663 = vmatpush1.msra.mxu0 0.0
        %2664 = vmatprep.subr.mxu0 0.0
        %2665 = vmatpush1.msra.mxu0 0.0
        %2666 = vmatprep.subr.mxu0 0.0
        %2667 = vmatpush1.msra.mxu0 0.0
        %2668 = vmatprep.subr.mxu0 0.0
        %2669 = vmatpush1.msra.mxu0 0.0
        %2670 = vmatprep.subr.mxu0 0.0
        %2671 = vmatpush1.msra.mxu0 0.0
        %2672 = vmatprep.subr.mxu0 0.0
        %2673 = vmatpush1.msra.mxu0 0.0
        %2674 = vmatprep.subr.mxu0 0.0
        %2675 = vmatpush1.msra.mxu0 0.0
        %2676 = vmatprep.subr.mxu0 0.0
        %2677 = vmatpush1.msra.mxu0 0.0
        %2678 = vmatprep.subr.mxu0 0.0
        %2679 = vmatpush1.msra.mxu0 0.0
        %2680 = vmatprep.subr.mxu0 0.0
        %2681 = vmatpush1.msra.mxu0 0.0
        %2682 = vmatprep.subr.mxu0 0.0
        %2683 = vmatpush1.msra.mxu0 0.0
        %2684 = vmatprep.subr.mxu0 0.0
        %2685 = vmatpush1.msra.mxu0 0.0
        %2686 = vmatprep.subr.mxu0 0.0
        %2687 = vmatpush1.msra.mxu0 0.0
        %2688 = vmatprep.subr.mxu0 0.0
        %2689 = vmatpush1.msra.mxu0 0.0
        %2690 = vmatprep.subr.mxu0 0.0
        %2691 = vmatpush1.msra.mxu0 0.0
        %2692 = vmatprep.subr.mxu0 0.0
        %2693 = vmatpush1.msra.mxu0 0.0
        %2694 = vmatprep.subr.mxu0 0.0
        %2695 = vmatpush1.msra.mxu0 0.0
        %2696 = vmatprep.subr.mxu0 0.0
        %2697 = vmatpush1.msra.mxu0 0.0
        %2698 = vmatprep.subr.mxu0 0.0
        %2699 = vmatpush1.msra.mxu0 0.0
        %2700 = vmatprep.subr.mxu0 0.0
        %2701 = vmatpush1.msra.mxu0 0.0
        %2702 = vmatprep.subr.mxu0 0.0
        %2703 = vmatpush1.msra.mxu0 0.0
        %2704 = vmatprep.subr.mxu0 0.0
        %2705 = vmatpush1.msra.mxu0 0.0
        %2706 = vmatprep.subr.mxu0 0.0
        %2707 = vmatpush1.msra.mxu0 0.0
        %2708 = vmatprep.mubr.f32.mxu0 0.0
        %2709 = vmatmul.mubr.f32.gmra.mrb[0].mxu0 %v1611
        %v2710 = vpop.f32.mrb[0].mxu0
        %v2711 = vadd.f32 0.0, %v2710
        %v2712 = vpop.f32.mrb[0].mxu0
        %v2713 = vadd.f32 0.0, %v2712
        %2714 = vmatprep.mubr.f32.mxu0 0.0
        %2715 = vmatmul.mubr.f32.gmra.mrb[0].mxu0 %v1614
        %v2716 = vpop.f32.mrb[0].mxu0
        %v2717 = vadd.f32 0.0, %v2716
        %v2718 = vpop.f32.mrb[0].mxu0
        %v2719 = vadd.f32 0.0, %v2718
        %2720 = vdwg.mxu0
        %2721 = vmatprep.subr.mxu0 %v2474
        %2722 = vmatpush1.msra.mxu0 %v2472
        %2723 = vmatprep.subr.mxu0 %v2480
        %2724 = vmatpush1.msra.mxu0 %v2478
        %2725 = vmatprep.subr.mxu0 0.0
        %2726 = vmatpush1.msra.mxu0 0.0
        %2727 = vmatprep.subr.mxu0 0.0
        %2728 = vmatpush1.msra.mxu0 0.0
        %2729 = vmatprep.subr.mxu0 0.0
        %2730 = vmatpush1.msra.mxu0 0.0
        %2731 = vmatprep.subr.mxu0 0.0
        %2732 = vmatpush1.msra.mxu0 0.0
        %2733 = vmatprep.subr.mxu0 0.0
        %2734 = vmatpush1.msra.mxu0 0.0
        %2735 = vmatprep.subr.mxu0 0.0
        %2736 = vmatpush1.msra.mxu0 0.0
        %2737 = vmatprep.subr.mxu0 0.0
        %2738 = vmatpush1.msra.mxu0 0.0
        %2739 = vmatprep.subr.mxu0 0.0
        %2740 = vmatpush1.msra.mxu0 0.0
        %2741 = vmatprep.subr.mxu0 0.0
        %2742 = vmatpush1.msra.mxu0 0.0
        %2743 = vmatprep.subr.mxu0 0.0
        %2744 = vmatpush1.msra.mxu0 0.0
        %2745 = vmatprep.subr.mxu0 0.0
        %2746 = vmatpush1.msra.mxu0 0.0
        %2747 = vmatprep.subr.mxu0 0.0
        %2748 = vmatpush1.msra.mxu0 0.0
        %2749 = vmatprep.subr.mxu0 0.0
        %2750 = vmatpush1.msra.mxu0 0.0
        %2751 = vmatprep.subr.mxu0 0.0
        %2752 = vmatpush1.msra.mxu0 0.0
        %2753 = vmatprep.subr.mxu0 0.0
        %2754 = vmatpush1.msra.mxu0 0.0
        %2755 = vmatprep.subr.mxu0 0.0
        %2756 = vmatpush1.msra.mxu0 0.0
        %2757 = vmatprep.subr.mxu0 0.0
        %2758 = vmatpush1.msra.mxu0 0.0
        %2759 = vmatprep.subr.mxu0 0.0
        %2760 = vmatpush1.msra.mxu0 0.0
        %2761 = vmatprep.subr.mxu0 0.0
        %2762 = vmatpush1.msra.mxu0 0.0
        %2763 = vmatprep.subr.mxu0 0.0
        %2764 = vmatpush1.msra.mxu0 0.0
        %2765 = vmatprep.subr.mxu0 0.0
        %2766 = vmatpush1.msra.mxu0 0.0
        %2767 = vmatprep.subr.mxu0 0.0
        %2768 = vmatpush1.msra.mxu0 0.0
        %2769 = vmatprep.subr.mxu0 0.0
        %2770 = vmatpush1.msra.mxu0 0.0
        %2771 = vmatprep.subr.mxu0 0.0
        %2772 = vmatpush1.msra.mxu0 0.0
        %2773 = vmatprep.subr.mxu0 0.0
        %2774 = vmatpush1.msra.mxu0 0.0
        %2775 = vmatprep.subr.mxu0 0.0
        %2776 = vmatpush1.msra.mxu0 0.0
        %2777 = vmatprep.subr.mxu0 0.0
        %2778 = vmatpush1.msra.mxu0 0.0
        %2779 = vmatprep.subr.mxu0 0.0
        %2780 = vmatpush1.msra.mxu0 0.0
        %2781 = vmatprep.subr.mxu0 0.0
        %2782 = vmatpush1.msra.mxu0 0.0
        %2783 = vmatprep.subr.mxu0 0.0
        %2784 = vmatpush1.msra.mxu0 0.0
        %2785 = vmatprep.mubr.f32.mxu0 0.0
        %2786 = vmatmul.mubr.f32.gmra.mrb[0].mxu0 %v1694
        %v2787 = vpop.f32.mrb[0].mxu0
        %v2788 = vadd.f32 %v2711, %v2787
        %v2789 = vpop.f32.mrb[0].mxu0
        %v2790 = vadd.f32 %v2713, %v2789
        %2791 = vmatprep.mubr.f32.mxu0 0.0
        %2792 = vmatmul.mubr.f32.gmra.mrb[0].mxu0 %v1697
        %v2793 = vpop.f32.mrb[0].mxu0
        %v2794 = vadd.f32 %v2717, %v2793
        %v2795 = vpop.f32.mrb[0].mxu0
        %v2796 = vadd.f32 %v2719, %v2795
        %2797 = vdwg.mxu0
        %v2798 = vmul.f32 %v2788, 0.0625
        %v2799 = vmul.f32 %v2790, 0.0625
        %v2800 = vmul.f32 %v2794, 0.0625
        %v2801 = vmul.f32 %v2796, 0.0625
        %v2802 = vld [vmem:[#allocation10] sm:$0xff]
        %v2803 = vld [vmem:[#allocation10 + $0x8] sm:$0xff]
        %v2804 = vld [vmem:[#allocation10 + $0x10] sm:$0xff]
        %v2805 = vld [vmem:[#allocation10 + $0x18] sm:$0xff]
        %v2806 = vld [vmem:[#allocation10 + $0x20] sm:$0xff]
        %v2807 = vld [vmem:[#allocation10 + $0x28] sm:$0xff]
        %v2808 = vld [vmem:[#allocation10 + $0x30] sm:$0xff]
        %v2809 = vld [vmem:[#allocation10 + $0x38] sm:$0xff]
        %v2810 = vld [vmem:[#allocation10 + $0x40] sm:$0xff]
        %v2811 = vld [vmem:[#allocation10 + $0x48] sm:$0xff]
        %v2812 = vld [vmem:[#allocation10 + $0x50] sm:$0xff]
        %v2813 = vld [vmem:[#allocation10 + $0x58] sm:$0xff]
        %v2814 = vld [vmem:[#allocation10 + $0x60] sm:$0xff]
        %v2815 = vld [vmem:[#allocation10 + $0x68] sm:$0xff]
        %v2816 = vld [vmem:[#allocation10 + $0x70] sm:$0xff]
        %v2817 = vld [vmem:[#allocation10 + $0x78] sm:$0xff]
        %v2818 = vld [vmem:[#allocation10 + $0x80] sm:$0xff]
        %v2819 = vld [vmem:[#allocation10 + $0x88] sm:$0xff]
        %v2820 = vld [vmem:[#allocation10 + $0x90] sm:$0xff]
        %v2821 = vld [vmem:[#allocation10 + $0x98] sm:$0xff]
        %v2822 = vld [vmem:[#allocation10 + $0xa0] sm:$0xff]
        %v2823 = vld [vmem:[#allocation10 + $0xa8] sm:$0xff]
        %v2824 = vld [vmem:[#allocation10 + $0xb0] sm:$0xff]
        %v2825 = vld [vmem:[#allocation10 + $0xb8] sm:$0xff]
        %v2826 = vld [vmem:[#allocation10 + $0xc0] sm:$0xff]
        %v2827 = vld [vmem:[#allocation10 + $0xc8] sm:$0xff]
        %v2828 = vld [vmem:[#allocation10 + $0xd0] sm:$0xff]
        %v2829 = vld [vmem:[#allocation10 + $0xd8] sm:$0xff]
        %v2830 = vld [vmem:[#allocation10 + $0xe0] sm:$0xff]
        %v2831 = vld [vmem:[#allocation10 + $0xe8] sm:$0xff]
        %v2832 = vld [vmem:[#allocation10 + $0xf0] sm:$0xff]
        %v2833 = vld [vmem:[#allocation10 + $0xf8] sm:$0xff]
        %v2834 = vld [vmem:[#allocation10 + $0x100] sm:$0xff]
        %v2835 = vld [vmem:[#allocation10 + $0x108] sm:$0xff]
        %v2836 = vld [vmem:[#allocation10 + $0x110] sm:$0xff]
        %v2837 = vld [vmem:[#allocation10 + $0x118] sm:$0xff]
        %v2839 = vsel %vm751, %v2641, 0
        %v2842 = vsel %vm751, %v2643, 0
        %2844 = vmatprep.subr.mxu0 %v2803
        %2845 = vmatpush1.msra.mxu0 %v2802
        %2846 = vmatprep.subr.mxu0 %v2805
        %2847 = vmatpush1.msra.mxu0 %v2804
        %2848 = vmatprep.subr.mxu0 %v2807
        %2849 = vmatpush1.msra.mxu0 %v2806
        %2850 = vmatprep.subr.mxu0 %v2809
        %2851 = vmatpush1.msra.mxu0 %v2808
        %2852 = vmatprep.subr.mxu0 %v2811
        %2853 = vmatpush1.msra.mxu0 %v2810
        %2854 = vmatprep.subr.mxu0 %v2813
        %2855 = vmatpush1.msra.mxu0 %v2812
        %2856 = vmatprep.subr.mxu0 %v2815
        %2857 = vmatpush1.msra.mxu0 %v2814
        %2858 = vmatprep.subr.mxu0 %v2817
        %2859 = vmatpush1.msra.mxu0 %v2816
        %2860 = vmatprep.subr.mxu0 %v2819
        %2861 = vmatpush1.msra.mxu0 %v2818
        %2862 = vmatprep.subr.mxu0 %v2821
        %2863 = vmatpush1.msra.mxu0 %v2820
        %2864 = vmatprep.subr.mxu0 %v2823
        %2865 = vmatpush1.msra.mxu0 %v2822
        %2866 = vmatprep.subr.mxu0 %v2825
        %2867 = vmatpush1.msra.mxu0 %v2824
        %2868 = vmatprep.subr.mxu0 %v2827
        %2869 = vmatpush1.msra.mxu0 %v2826
        %2870 = vmatprep.subr.mxu0 %v2829
        %2871 = vmatpush1.msra.mxu0 %v2828
        %2872 = vmatprep.subr.mxu0 %v2831
        %2873 = vmatpush1.msra.mxu0 %v2830
        %2874 = vmatprep.subr.mxu0 %v2833
        %2875 = vmatpush1.msra.mxu0 %v2832
        %2876 = vmatprep.subr.mxu0 %v2835
        %2877 = vmatpush1.msra.mxu0 %v2834
        %2878 = vmatprep.subr.mxu0 %v2837
        %2879 = vmatpush1.msra.mxu0 %v2836
        %2880 = vmatprep.subr.mxu0 0.0
        %2881 = vmatpush1.msra.mxu0 0.0
        %2882 = vmatprep.subr.mxu0 0.0
        %2883 = vmatpush1.msra.mxu0 0.0
        %2884 = vmatprep.subr.mxu0 0.0
        %2885 = vmatpush1.msra.mxu0 0.0
        %2886 = vmatprep.subr.mxu0 0.0
        %2887 = vmatpush1.msra.mxu0 0.0
        %2888 = vmatprep.subr.mxu0 0.0
        %2889 = vmatpush1.msra.mxu0 0.0
        %2890 = vmatprep.subr.mxu0 0.0
        %2891 = vmatpush1.msra.mxu0 0.0
        %2892 = vmatprep.subr.mxu0 0.0
        %2893 = vmatpush1.msra.mxu0 0.0
        %2894 = vmatprep.subr.mxu0 0.0
        %2895 = vmatpush1.msra.mxu0 0.0
        %2896 = vmatprep.subr.mxu0 0.0
        %2897 = vmatpush1.msra.mxu0 0.0
        %2898 = vmatprep.subr.mxu0 0.0
        %2899 = vmatpush1.msra.mxu0 0.0
        %2900 = vmatprep.subr.mxu0 0.0
        %2901 = vmatpush1.msra.mxu0 0.0
        %2902 = vmatprep.subr.mxu0 0.0
        %2903 = vmatpush1.msra.mxu0 0.0
        %2904 = vmatprep.subr.mxu0 0.0
        %2905 = vmatpush1.msra.mxu0 0.0
        %2906 = vmatprep.subr.mxu0 0.0
        %2907 = vmatpush1.msra.mxu0 0.0
        %2908 = vmatprep.mubr.f32.mxu0 %v2839
        %2909 = vmatmul.mubr.f32.gmra.mrb[0].mxu0 %v2640
        %v2910 = vpop.f32.mrb[0].mxu0
        %v2911 = vadd.f32 0.0, %v2910
        %v2912 = vpop.f32.mrb[0].mxu0
        %v2913 = vadd.f32 0.0, %v2912
        %2914 = vmatprep.mubr.f32.mxu0 %v2842
        %2915 = vmatmul.mubr.f32.gmra.mrb[0].mxu0 %v2642
        %v2916 = vpop.f32.mrb[0].mxu0
        %v2917 = vadd.f32 0.0, %v2916
        %v2918 = vpop.f32.mrb[0].mxu0
        %v2919 = vadd.f32 0.0, %v2918
        %2920 = vdwg.mxu0
        %v2921 = vld [vmem:[#allocation11] sm:$0xff]
        %v2922 = vld [vmem:[#allocation11 + $0x8] sm:$0xff]
        %v2923 = vld [vmem:[#allocation11 + $0x10] sm:$0xff]
        %v2924 = vld [vmem:[#allocation11 + $0x18] sm:$0xff]
        %v2925 = vld [vmem:[#allocation11 + $0x20] sm:$0xff]
        %v2926 = vld [vmem:[#allocation11 + $0x28] sm:$0xff]
        %v2927 = vld [vmem:[#allocation11 + $0x30] sm:$0xff]
        %v2928 = vld [vmem:[#allocation11 + $0x38] sm:$0xff]
        %v2929 = vld [vmem:[#allocation11 + $0x40] sm:$0xff]
        %v2930 = vld [vmem:[#allocation11 + $0x48] sm:$0xff]
        %v2931 = vld [vmem:[#allocation11 + $0x50] sm:$0xff]
        %v2932 = vld [vmem:[#allocation11 + $0x58] sm:$0xff]
        %v2933 = vld [vmem:[#allocation11 + $0x60] sm:$0xff]
        %v2934 = vld [vmem:[#allocation11 + $0x68] sm:$0xff]
        %v2935 = vld [vmem:[#allocation11 + $0x70] sm:$0xff]
        %v2936 = vld [vmem:[#allocation11 + $0x78] sm:$0xff]
        %v2937 = vld [vmem:[#allocation11 + $0x80] sm:$0xff]
        %v2938 = vld [vmem:[#allocation11 + $0x88] sm:$0xff]
        %v2939 = vld [vmem:[#allocation11 + $0x90] sm:$0xff]
        %v2940 = vld [vmem:[#allocation11 + $0x98] sm:$0xff]
        %v2941 = vld [vmem:[#allocation11 + $0xa0] sm:$0xff]
        %v2942 = vld [vmem:[#allocation11 + $0xa8] sm:$0xff]
        %v2943 = vld [vmem:[#allocation11 + $0xb0] sm:$0xff]
        %v2944 = vld [vmem:[#allocation11 + $0xb8] sm:$0xff]
        %v2945 = vld [vmem:[#allocation11 + $0xc0] sm:$0xff]
        %v2946 = vld [vmem:[#allocation11 + $0xc8] sm:$0xff]
        %v2947 = vld [vmem:[#allocation11 + $0xd0] sm:$0xff]
        %v2948 = vld [vmem:[#allocation11 + $0xd8] sm:$0xff]
        %v2949 = vld [vmem:[#allocation11 + $0xe0] sm:$0xff]
        %v2950 = vld [vmem:[#allocation11 + $0xe8] sm:$0xff]
        %v2951 = vld [vmem:[#allocation11 + $0xf0] sm:$0xff]
        %v2952 = vld [vmem:[#allocation11 + $0xf8] sm:$0xff]
        %v2953 = vld [vmem:[#allocation11 + $0x100] sm:$0xff]
        %v2954 = vld [vmem:[#allocation11 + $0x108] sm:$0xff]
        %v2955 = vld [vmem:[#allocation11 + $0x110] sm:$0xff]
        %v2956 = vld [vmem:[#allocation11 + $0x118] sm:$0xff]
        %v2958 = vsel %vm751, %v2799, 0
        %v2961 = vsel %vm751, %v2801, 0
        %2963 = vmatprep.subr.mxu0 %v2922
        %2964 = vmatpush1.msra.mxu0 %v2921
        %2965 = vmatprep.subr.mxu0 %v2924
        %2966 = vmatpush1.msra.mxu0 %v2923
        %2967 = vmatprep.subr.mxu0 %v2926
        %2968 = vmatpush1.msra.mxu0 %v2925
        %2969 = vmatprep.subr.mxu0 %v2928
        %2970 = vmatpush1.msra.mxu0 %v2927
        %2971 = vmatprep.subr.mxu0 %v2930
        %2972 = vmatpush1.msra.mxu0 %v2929
        %2973 = vmatprep.subr.mxu0 %v2932
        %2974 = vmatpush1.msra.mxu0 %v2931
        %2975 = vmatprep.subr.mxu0 %v2934
        %2976 = vmatpush1.msra.mxu0 %v2933
        %2977 = vmatprep.subr.mxu0 %v2936
        %2978 = vmatpush1.msra.mxu0 %v2935
        %2979 = vmatprep.subr.mxu0 %v2938
        %2980 = vmatpush1.msra.mxu0 %v2937
        %2981 = vmatprep.subr.mxu0 %v2940
        %2982 = vmatpush1.msra.mxu0 %v2939
        %2983 = vmatprep.subr.mxu0 %v2942
        %2984 = vmatpush1.msra.mxu0 %v2941
        %2985 = vmatprep.subr.mxu0 %v2944
        %2986 = vmatpush1.msra.mxu0 %v2943
        %2987 = vmatprep.subr.mxu0 %v2946
        %2988 = vmatpush1.msra.mxu0 %v2945
        %2989 = vmatprep.subr.mxu0 %v2948
        %2990 = vmatpush1.msra.mxu0 %v2947
        %2991 = vmatprep.subr.mxu0 %v2950
        %2992 = vmatpush1.msra.mxu0 %v2949
        %2993 = vmatprep.subr.mxu0 %v2952
        %2994 = vmatpush1.msra.mxu0 %v2951
        %2995 = vmatprep.subr.mxu0 %v2954
        %2996 = vmatpush1.msra.mxu0 %v2953
        %2997 = vmatprep.subr.mxu0 %v2956
        %2998 = vmatpush1.msra.mxu0 %v2955
        %2999 = vmatprep.subr.mxu0 0.0
        %3000 = vmatpush1.msra.mxu0 0.0
        %3001 = vmatprep.subr.mxu0 0.0
        %3002 = vmatpush1.msra.mxu0 0.0
        %3003 = vmatprep.subr.mxu0 0.0
        %3004 = vmatpush1.msra.mxu0 0.0
        %3005 = vmatprep.subr.mxu0 0.0
        %3006 = vmatpush1.msra.mxu0 0.0
        %3007 = vmatprep.subr.mxu0 0.0
        %3008 = vmatpush1.msra.mxu0 0.0
        %3009 = vmatprep.subr.mxu0 0.0
        %3010 = vmatpush1.msra.mxu0 0.0
        %3011 = vmatprep.subr.mxu0 0.0
        %3012 = vmatpush1.msra.mxu0 0.0
        %3013 = vmatprep.subr.mxu0 0.0
        %3014 = vmatpush1.msra.mxu0 0.0
        %3015 = vmatprep.subr.mxu0 0.0
        %3016 = vmatpush1.msra.mxu0 0.0
        %3017 = vmatprep.subr.mxu0 0.0
        %3018 = vmatpush1.msra.mxu0 0.0
        %3019 = vmatprep.subr.mxu0 0.0
        %3020 = vmatpush1.msra.mxu0 0.0
        %3021 = vmatprep.subr.mxu0 0.0
        %3022 = vmatpush1.msra.mxu0 0.0
        %3023 = vmatprep.subr.mxu0 0.0
        %3024 = vmatpush1.msra.mxu0 0.0
        %3025 = vmatprep.subr.mxu0 0.0
        %3026 = vmatpush1.msra.mxu0 0.0
        %3027 = vmatprep.mubr.f32.mxu0 %v2958
        %3028 = vmatmul.mubr.f32.gmra.mrb[0].mxu0 %v2798
        %v3029 = vpop.f32.mrb[0].mxu0
        %v3030 = vadd.f32 0.0, %v3029
        %v3031 = vpop.f32.mrb[0].mxu0
        %v3032 = vadd.f32 0.0, %v3031
        %3033 = vmatprep.mubr.f32.mxu0 %v2961
        %3034 = vmatmul.mubr.f32.gmra.mrb[0].mxu0 %v2800
        %v3035 = vpop.f32.mrb[0].mxu0
        %v3036 = vadd.f32 0.0, %v3035
        %v3037 = vpop.f32.mrb[0].mxu0
        %v3038 = vadd.f32 0.0, %v3037
        %3039 = vdwg.mxu0
        %v3040 = vsub.f32 %v2911, %v3030
        %v3041 = vsub.f32 %v2913, %v3032
        %v3042 = vsub.f32 %v2917, %v3036
        %v3043 = vsub.f32 %v2919, %v3038
        %v3044 = vld [vmem:[%s20] sm:$0x3]
        %v3046 = vlaneseq
        %v3047 = vshrl.u32 %v3046, 7
        %v3048 = vsub.s32 0, %v3047
        %v3049 = vrot.slane %v3044, %v3048
        %v3050 = vlaneseq
        %v3051 = vshrl.u32 %v3050, 7
        %v3052 = vsub.s32 1, %v3051
        %v3053 = vrot.slane %v3044, %v3052
        %v3056 = vadd.f32 %v3040, %v3049
        %v3057 = vadd.f32 %v3041, %v3053
        %v3058 = vadd.f32 %v3042, %v3049
        %v3059 = vadd.f32 %v3043, %v3053
        %v3060 = vadd.f32 %v3056, %v1296
        %v3061 = vadd.f32 %v3057, %v1297
        %v3062 = vadd.f32 %v3058, %v1298
        %v3063 = vadd.f32 %v3059, %v1299
        %v3064 = vadd.f32 %v3060, %v743
        %v3065 = vadd.f32 %v3061, %v744
        %v3066 = vadd.f32 %v3062, %v745
        %v3067 = vadd.f32 %v3063, %v746
        %3068 = vst [vmem:[%s737] sm:$0xff] %v3064
        %3069 = vst [vmem:[%s737 + $0x8] sm:$0xff] %v3065
        %3070 = vst [vmem:[%s737 + $0x10] sm:$0xff] %v3066
        %3071 = vst [vmem:[%s737 + $0x18] sm:$0xff] %v3067
        %s3072 = sand.u32 %s493, 1
        %s3073 = scalar_lea.sflag [#allocation4], %s3072
        %s3074 = sand.u32 %s493, 1
        %s3075 = smul.addr %s3074, 32
        %s3076 = scalar_lea.vmem [#allocation13], %s3075
        // Predicated region
        $region129: #{tpu_custom_call.1} parent=103 // pred_check
          %p3077 = pneg %p503
        $region130: #{tpu_custom_call.1} parent=103 // pred_check_branch
          %3079 = sbr.rel (%p3077) target = $region132
        $region131: #{tpu_custom_call.1} parent=103 // pred_region
          %s3081 = ssub.s32 512, 512
          %3082 = vsyncadd %s3073, %s3081
          %s3083 = smul.addr %s39, 4
          %s3084 = smul.addr %s3083, 128
          %s3085 = scalar_lea.hbm %s21, %s3084
          %s3086 = sshll.u32 %s3076, 4
          %s3087 = int_to_ptr.vmem [resolvable:$true] %s3086
          %3092 = dma.vmem_to_hbm [thread:$0]  %s3087, 512, %s3085, %s3073, 256, 256, 16
        $region132: #{tpu_custom_call.1} parent=103 // pred_fallthru
          _
      $region104: #{tpu_custom_call.1} parent=5 // pred_fallthru
        _
      %p3093 = scmp.le.s32.totalorder 2, %s34
      // Predicated region
      $region133: #{tpu_custom_call.1} parent=5 // pred_check
        %p3094 = pneg %p3093
      $region134: #{tpu_custom_call.1} parent=5 // pred_check_branch
        %3096 = sbr.rel (%p3094) target = $region136
      $region135: #{tpu_custom_call.1} parent=5 // pred_region
        %s3097 = ssub.s32 %s34, 2
        // Predicated region
        $region137: #{tpu_custom_call.1} parent=135 // pred_check
          %p3098 = pneg %p509
        $region138: #{tpu_custom_call.1} parent=135 // pred_check_branch
          %3100 = sbr.rel (%p3098) target = $region140
        $region139: #{tpu_custom_call.1} parent=135 // pred_region
          %s3101 = sand.u32 %s494, 1
          %s3102 = scalar_lea.sflag [#allocation4], %s3101
          %s3103 = sand.u32 %s494, 1
          %s3104 = smul.addr %s3103, 32
          %s3105 = scalar_lea.vmem [#allocation13], %s3104
          %3106 = dma.done %s3102, 512
        $region140: #{tpu_custom_call.1} parent=135 // pred_fallthru
          _
      $region136: #{tpu_custom_call.1} parent=5 // pred_fallthru
        _
    $region6: #{tpu_custom_call.1} parent=1 // loop_footer
      %s38 = sadd.s32 1, %s34
    $region7: #{tpu_custom_call.1} parent=1 // loop_footer_branch
      %33 = sbr.rel target = $region3
    $region8: #{tpu_custom_call.1} parent=1 // loop_exit
      _
    %3107 = vsyncpa [#allocation3], 1
    %s3108 = scalar_lea.sflag [#allocation3], 1
    %3109 = vsyncpa %s3108, 1
    %3110 = vsyncpa [#allocation6], 1
    %3111 = vsyncpa [#allocation9], 1
    %3112 = vsyncpa [#allocation12], 1
    %3113 = vsyncpa [#allocation4], 1
    %s3114 = scalar_lea.sflag [#allocation4], 1
    %3115 = vsyncpa %s3114, 1

</llo_original>
